<compile_context>
chip_gen: v7x
topology: tpu7x:2x2x1
jax: 0.10.0
libtpu: 0.0.40
codegen_flags: <defaults>
</compile_context>

<pallas_src>
import functools

import jax
import jax.numpy as jnp
from jax.experimental import pallas as pl
from jax.experimental.pallas import tpu as pltpu


def _round_up(x, m):
    return (x + m - 1) // m * m


def _pick_divisor(n, candidates):
    for c in candidates:
        if n % c == 0:
            return c
    return None


_MM_M_TILES = (512, 256, 128, 64, 32, 16, 8)
_ROW_TILES = (1024, 512, 256, 128, 64, 32, 16, 8)


# ---------------------------------------------------------------------------
# Pallas kernel 1: bf16 MXU matmul, fused per-column scale/bias + activation
# ---------------------------------------------------------------------------
def _matmul_kernel_single(a_ref, b_ref, s_ref, c_ref, o_ref, *, activation):
    y = jnp.dot(a_ref[...], b_ref[...], preferred_element_type=jnp.float32)
    y = y * s_ref[...] + c_ref[...]
    if activation == "relu":
        y = jnp.maximum(y, 0.0)
    elif activation == "tanh":
        y = jnp.tanh(y)
    o_ref[...] = y.astype(o_ref.dtype)


def _matmul_kernel_multi(a_ref, b_ref, s_ref, c_ref, o_ref, acc_ref, *, activation):
    @pl.when(pl.program_id(2) == 0)
    def _():
        acc_ref[...] = jnp.zeros_like(acc_ref)

    acc_ref[...] += jnp.dot(a_ref[...], b_ref[...],
                            preferred_element_type=jnp.float32)

    @pl.when(pl.program_id(2) == pl.num_programs(2) - 1)
    def _():
        y = acc_ref[...] * s_ref[...] + c_ref[...]
        if activation == "relu":
            y = jnp.maximum(y, 0.0)
        elif activation == "tanh":
            y = jnp.tanh(y)
        o_ref[...] = y.astype(o_ref.dtype)


def pallas_matmul(a, b, scale=None, bias=None, activation="none"):
    """[M,K] @ [K,N] -> [M,N] f32.  Operands are fed to the MXU as bf16 with an
    f32 accumulator; per-output-column scale/bias + activation are fused into the
    epilogue store."""
    M, K = a.shape
    K2, N = b.shape
    assert K == K2

    a = a.astype(jnp.bfloat16)
    b = b.astype(jnp.bfloat16)

    # Rows: pick the largest tile that divides M (pad only in the rare M % 8 != 0 case).
    tm = _pick_divisor(M, _MM_M_TILES)
    if tm is None:
        Mp = _round_up(M, 8)
        a = jnp.pad(a, ((0, Mp - M), (0, 0)))
        tm = _pick_divisor(Mp, _MM_M_TILES)
    else:
        Mp = M

    # Contraction: callers pre-pad K to a 128-multiple (zero im2col tap); general fallback.
    Kp = _round_up(K, 128)
    if Kp != K:
        a = jnp.pad(a, ((0, 0), (0, Kp - K)))
        b = jnp.pad(b, ((0, Kp - K), (0, 0)))

    # Columns: pad to a lane multiple of 128, 256-wide tiles when possible.
    Np = _round_up(N, 128)
    if Np != N:
        b = jnp.pad(b, ((0, 0), (0, Np - N)))
    tn = _pick_divisor(Np, (256, 128))

    s = jnp.ones((N,), jnp.float32) if scale is None else scale.astype(jnp.float32)
    c = jnp.zeros((N,), jnp.float32) if bias is None else bias.astype(jnp.float32)
    s = jnp.pad(s, (0, Np - N)).reshape(1, Np)
    c = jnp.pad(c, (0, Np - N)).reshape(1, Np)

    if Kp <= 4096:
        # Whole K in one step: bf16 (512,4096)+(4096,256) double-buffered ~13 MiB VMEM,
        # safely inside the 32 MiB scoped limit on v5e/v6e/v7x.
        out = pl.pallas_call(
            functools.partial(_matmul_kernel_single, activation=activation),
            out_shape=jax.ShapeDtypeStruct((Mp, Np), jnp.float32),
            grid_spec=pltpu.PrefetchScalarGridSpec(
                num_scalar_prefetch=0,
                grid=(Mp // tm, Np // tn),
                in_specs=[pl.BlockSpec((tm, Kp), lambda i, j: (i, 0)),
                          pl.BlockSpec((Kp, tn), lambda i, j: (0, j)),
                          pl.BlockSpec((1, tn), lambda i, j: (0, j)),
                          pl.BlockSpec((1, tn), lambda i, j: (0, j))],
                out_specs=pl.BlockSpec((tm, tn), lambda i, j: (i, j))),
            compiler_params=pltpu.CompilerParams(
                dimension_semantics=("parallel", "parallel")),
        )(a, b, s, c)
    else:
        tk = _pick_divisor(Kp, (2048, 1024, 512, 256, 128))
        out = pl.pallas_call(
            functools.partial(_matmul_kernel_multi, activation=activation),
            out_shape=jax.ShapeDtypeStruct((Mp, Np), jnp.float32),
            grid_spec=pltpu.PrefetchScalarGridSpec(
                num_scalar_prefetch=0,
                grid=(Mp // tm, Np // tn, Kp // tk),
                in_specs=[pl.BlockSpec((tm, tk), lambda i, j, k: (i, k)),
                          pl.BlockSpec((tk, tn), lambda i, j, k: (k, j)),
                          pl.BlockSpec((1, tn), lambda i, j, k: (0, j)),
                          pl.BlockSpec((1, tn), lambda i, j, k: (0, j))],
                out_specs=pl.BlockSpec((tm, tn), lambda i, j, k: (i, j)),
                scratch_shapes=[pltpu.VMEM((tm, tn), jnp.float32)]),
            compiler_params=pltpu.CompilerParams(
                dimension_semantics=("parallel", "parallel", "arbitrary")),
        )(a, b, s, c)
    return out[:M, :N]


# ---------------------------------------------------------------------------
# Pallas kernel 2: fused CBAM channel-gate * spatial-gate * BN affine + ReLU
# ---------------------------------------------------------------------------
def _ca_sa_bn_relu_kernel(h_ref, s_ref, a_ref, g_ref, b_ref, o_ref):
    y = h_ref[...] * s_ref[...] * a_ref[...]          # CA gate [1,1,C], SA gate [1,tm,1]
    o_ref[...] = jnp.maximum(y * g_ref[...] + b_ref[...], 0.0)


def fused_ca_sa_bn_relu(h, s_ca, a_sa, bn_scale, bn_bias):
    """h: [N,H,W,C]; s_ca: [N,C]; a_sa: [N,H,W,1]; bn_*: [C]."""
    N, H, W, C = h.shape
    HW = H * W
    h3 = h.reshape(N, HW, C).astype(jnp.float32)
    a3 = a_sa.reshape(N, HW, 1).astype(jnp.float32)
    s3 = s_ca.reshape(N, 1, C).astype(jnp.float32)
    g = bn_scale.reshape(1, 1, C).astype(jnp.float32)
    b = bn_bias.reshape(1, 1, C).astype(jnp.float32)

    tm = _pick_divisor(HW, _ROW_TILES)
    if tm is None:
        HWp = _round_up(HW, 8)
        h3 = jnp.pad(h3, ((0, 0), (0, HWp - HW), (0, 0)))
        a3 = jnp.pad(a3, ((0, 0), (0, HWp - HW), (0, 0)))
        tm = _pick_divisor(HWp, _ROW_TILES)
    else:
        HWp = HW

    out = pl.pallas_call(
        _ca_sa_bn_relu_kernel,
        out_shape=jax.ShapeDtypeStruct((N, HWp, C), jnp.float32),
        grid_spec=pltpu.PrefetchScalarGridSpec(
            num_scalar_prefetch=0,
            grid=(N, HWp // tm),
            in_specs=[pl.BlockSpec((1, tm, C), lambda n, i: (n, i, 0)),
                      pl.BlockSpec((1, 1, C), lambda n, i: (n, 0, 0)),
                      pl.BlockSpec((1, tm, 1), lambda n, i: (n, i, 0)),
                      pl.BlockSpec((1, 1, C), lambda n, i: (0, 0, 0)),
                      pl.BlockSpec((1, 1, C), lambda n, i: (0, 0, 0))],
            out_specs=pl.BlockSpec((1, tm, C), lambda n, i: (n, i, 0))),
        compiler_params=pltpu.CompilerParams(
            dimension_semantics=("parallel", "parallel")),
    )(h3, s3, a3, g, b)
    return out[:, :HW, :].reshape(N, H, W, C)


# ---------------------------------------------------------------------------
# Pallas kernel 3: fused BN affine (+ ReLU)  /  BN affine + residual add
# ---------------------------------------------------------------------------
def _bn_act_kernel(h_ref, g_ref, b_ref, o_ref, *, relu):
    y = h_ref[...] * g_ref[...] + b_ref[...]
    if relu:
        y = jnp.maximum(y, 0.0)
    o_ref[...] = y


def _bn_add_kernel(h_ref, g_ref, b_ref, skip_ref, o_ref):
    o_ref[...] = h_ref[...] * g_ref[...] + b_ref[...] + skip_ref[...]


def _rows_pad(arr2d, M):
    tm = _pick_divisor(M, _ROW_TILES)
    if tm is None:
        Mp = _round_up(M, 8)
        arr2d = jnp.pad(arr2d, ((0, Mp - M), (0, 0)))
        tm = _pick_divisor(Mp, _ROW_TILES)
        return arr2d, Mp, tm
    return arr2d, M, tm


def fused_bn_act(h, bn_scale, bn_bias, relu=True):
    N, H, W, C = h.shape
    M = N * H * W
    h2 = h.reshape(M, C).astype(jnp.float32)
    g = bn_scale.reshape(1, C).astype(jnp.float32)
    b = bn_bias.reshape(1, C).astype(jnp.float32)
    h2, Mp, tm = _rows_pad(h2, M)
    out = pl.pallas_call(
        functools.partial(_bn_act_kernel, relu=relu),
        out_shape=jax.ShapeDtypeStruct((Mp, C), jnp.float32),
        grid_spec=pltpu.PrefetchScalarGridSpec(
            num_scalar_prefetch=0,
            grid=(Mp // tm,),
            in_specs=[pl.BlockSpec((tm, C), lambda i: (i, 0)),
                      pl.BlockSpec((1, C), lambda i: (0, 0)),
                      pl.BlockSpec((1, C), lambda i: (0, 0))],
            out_specs=pl.BlockSpec((tm, C), lambda i: (i, 0))),
        compiler_params=pltpu.CompilerParams(dimension_semantics=("parallel",)),
    )(h2, g, b)
    return out[:M].reshape(N, H, W, C)


def fused_bn_add(h, bn_scale, bn_bias, skip):
    N, H, W, C = h.shape
    M = N * H * W
    h2 = h.reshape(M, C).astype(jnp.float32)
    s2 = skip.reshape(M, C).astype(jnp.float32)
    g = bn_scale.reshape(1, C).astype(jnp.float32)
    b = bn_bias.reshape(1, C).astype(jnp.float32)
    h2, Mp, tm = _rows_pad(h2, M)
    if Mp != M:
        s2 = jnp.pad(s2, ((0, Mp - M), (0, 0)))
    out = pl.pallas_call(
        _bn_add_kernel,
        out_shape=jax.ShapeDtypeStruct((Mp, C), jnp.float32),
        grid_spec=pltpu.PrefetchScalarGridSpec(
            num_scalar_prefetch=0,
            grid=(Mp // tm,),
            in_specs=[pl.BlockSpec((tm, C), lambda i: (i, 0)),
                      pl.BlockSpec((1, C), lambda i: (0, 0)),
                      pl.BlockSpec((1, C), lambda i: (0, 0)),
                      pl.BlockSpec((tm, C), lambda i: (i, 0))],
            out_specs=pl.BlockSpec((tm, C), lambda i: (i, 0))),
        compiler_params=pltpu.CompilerParams(dimension_semantics=("parallel",)),
    )(h2, g, b, s2)
    return out[:M].reshape(N, H, W, C)


# ---------------------------------------------------------------------------
# Conv / ConvTranspose building blocks (im2col glue + Pallas matmul)
# ---------------------------------------------------------------------------
def conv2d_nhwc(x, w, stride=1, scale=None, bias=None, activation="none"):
    """x: [N,H,W,Cin] (already spatially padded), w: [kh,kw,Cin,Cout]."""
    N, H, W, Cin = x.shape
    kh, kw, _, Cout = w.shape
    Ho = (H - kh) // stride + 1
    Wo = (W - kw) // stride + 1
    xb = x.astype(jnp.bfloat16)
    cols = []
    for i in range(kh):
        for j in range(kw):
            cols.append(xb[:, i:i + stride * Ho:stride, j:j + stride * Wo:stride, :])
    K = kh * kw * Cin
    Kp = _round_up(K, 128)
    if Kp != K:   # fold K padding into the concat (no extra pad pass over the big matrix)
        cols.append(jnp.zeros((N, Ho, Wo, Kp - K), jnp.bfloat16))
    patches = jnp.concatenate(cols, axis=-1).reshape(N * Ho * Wo, Kp)
    wmat = w.reshape(K, Cout)
    if Kp != K:
        wmat = jnp.pad(wmat, ((0, Kp - K), (0, 0)))
    out = pallas_matmul(patches, wmat, scale=scale, bias=bias, activation=activation)
    return out.reshape(N, Ho, Wo, Cout)


def conv_transpose2d_nhwc(x, w_t):
    """PyTorch ConvTranspose2d(kernel=3, stride=2, padding=1, output_padding=1),
    implemented as a 4-phase sub-pixel decomposition (no zero-dilated input).
    w_t keeps the PyTorch layout [Cin, Cout, kh, kw]."""
    N, H, W, Cin = x.shape
    _, Cout, kh, kw = w_t.shape
    assert kh == 3 and kw == 3
    xb = x.astype(jnp.bfloat16)
    xp = jnp.pad(xb, ((0, 0), (0, 1), (0, 1), (0, 0)))   # one zero row/col for the +1 taps
    # output parity -> contributing (kernel index, input offset) taps
    taps = {0: [(1, 0)], 1: [(0, 1), (2, 0)]}
    M = N * H * W
    phase_rows = []
    for r in (0, 1):
        row = []
        for c in (0, 1):
            cols, wrows = [], []
            for (ki, dh) in taps[r]:
                for (kj, dw) in taps[c]:
                    cols.append(xp[:, dh:dh + H, dw:dw + W, :])
                    wrows.append(w_t[:, :, ki, kj])                 # [Cin, Cout]
            K = len(wrows) * Cin
            Kp = _round_up(K, 128)
            if Kp != K:
                cols.append(jnp.zeros((N, H, W, Kp - K), jnp.bfloat16))
            a = jnp.concatenate(cols, axis=-1).reshape(M, Kp)
            b = jnp.concatenate(wrows, axis=0)
            if Kp != K:
                b = jnp.pad(b, ((0, Kp - K), (0, 0)))
            row.append(pallas_matmul(a, b).reshape(N, H, W, Cout))
        phase_rows.append(jnp.stack(row, axis=3))                    # [N,H,W,2,Cout]
    out = jnp.stack(phase_rows, axis=2)                              # [N,H,2,W,2,Cout]
    return out.reshape(N, 2 * H, 2 * W, Cout)


# ---------------------------------------------------------------------------
# CBAM attention + BatchNorm glue (plain JAX; reductions fuse in XLA)
# ---------------------------------------------------------------------------
def channel_attention_scale(h, w1, w2):
    """Standard CBAM channel attention gate, [N, C]."""
    avg = jnp.mean(h, axis=(1, 2))
    mx = jnp.max(h, axis=(1, 2))

    def mlp(v):
        return jnp.maximum(v @ w1, 0.0) @ w2

    return jax.nn.sigmoid(mlp(avg) + mlp(mx))


def spatial_attention_map(h, s_ca, w_sa):
    """Standard CBAM spatial attention gate of (h * s_ca), [N,H,W,1].
    The 7x7 Cin=2/Cout=1 conv is done with shifted adds on the VPU (too tiny for MXU)."""
    N, H, W, C = h.shape
    s = s_ca[:, None, None, :]
    mean_c = jnp.mean(h * s, axis=-1)
    max_c = jnp.max(h * s, axis=-1)
    cat = jnp.stack([mean_c, max_c], axis=-1)
    catp = jnp.pad(cat, ((0, 0), (3, 3), (3, 3), (0, 0)))
    acc = jnp.zeros((N, H, W), jnp.float32)
    for i in range(7):
        for j in range(7):
            sl = catp[:, i:i + H, j:j + W, :]
            acc = acc + sl[..., 0] * w_sa[i, j, 0, 0] + sl[..., 1] * w_sa[i, j, 1, 0]
    return jax.nn.sigmoid(acc)[..., None]


def _bn_scale_bias(mean, var, gamma, beta, eps=1e-5):
    scale = gamma / jnp.sqrt(var + eps)
    return scale, beta - mean * scale


def bn_stats(h):
    """Training-mode batch statistics over (N,H,W) (biased variance, like PyTorch)."""
    mean = jnp.mean(h, axis=(0, 1, 2))
    var = jnp.maximum(jnp.mean(h * h, axis=(0, 1, 2)) - mean * mean, 0.0)
    return mean, var


def bn_stats_weighted(h, s_ca, a_sa):
    """Batch statistics of h * s_ca * a_sa without materializing the product."""
    N, H, W, C = h.shape
    a = a_sa.reshape(N, H * W)
    hf = h.reshape(N, H * W, C)
    cnt = N * H * W
    m1 = jnp.einsum('nc,nc->c', s_ca, jnp.einsum('npc,np->nc', hf, a)) / cnt
    m2 = jnp.einsum('nc,nc->c', s_ca * s_ca,
                    jnp.einsum('npc,np->nc', hf * hf, a * a)) / cnt
    var = jnp.maximum(m2 - m1 * m1, 0.0)
    return m1, var


def attn_norm_relu_stage(h, ca_params, sa_w, bn_params):
    """Conv output -> CA gate -> SA gate -> BN (batch stats) -> ReLU, one fused pass."""
    w1, w2 = ca_params
    gamma, beta = bn_params
    s_ca = channel_attention_scale(h, w1, w2)
    a_sa = spatial_attention_map(h, s_ca, sa_w)
    mean, var = bn_stats_weighted(h, s_ca, a_sa)
    scale, bias = _bn_scale_bias(mean, var, gamma, beta)
    return fused_ca_sa_bn_relu(h, s_ca, a_sa, scale, bias)


# ---------------------------------------------------------------------------
# Generator forward (mirrors the PyTorch nn.Sequential ordering exactly)
# ---------------------------------------------------------------------------
def generator_forward(x_nchw, params):
    x = jnp.transpose(x_nchw, (0, 2, 3, 1)).astype(jnp.float32)   # NCHW -> NHWC

    # stem: ReflectionPad(3) -> Conv7 -> CA1 -> SA1 -> BN -> ReLU
    h = jnp.pad(x, ((0, 0), (3, 3), (3, 3), (0, 0)), mode="reflect")
    h = conv2d_nhwc(h, params["conv1_w"])
    h = attn_norm_relu_stage(h, params["ca1"], params["sa1"], params["bn1"])

    # downsampling: Conv3 s2 p1 -> CA -> SA -> BN -> ReLU   (x2)
    for i in (1, 2):
        p = params["down%d" % i]
        hp = jnp.pad(h, ((0, 0), (1, 1), (1, 1), (0, 0)))
        h = conv2d_nhwc(hp, p["conv_w"], stride=2)
        h = attn_norm_relu_stage(h, p["ca"], p["sa"], p["bn"])

    # resnet blocks: (reflect pad, conv3, BN, ReLU, reflect pad, conv3, BN) + skip
    for blk in params["blocks"]:
        r = jnp.pad(h, ((0, 0), (1, 1), (1, 1), (0, 0)), mode="reflect")
        r = conv2d_nhwc(r, blk["conv1_w"])
        mean, var = bn_stats(r)
        scale, bias = _bn_scale_bias(mean, var, *blk["bn1"])
        r = fused_bn_act(r, scale, bias, relu=True)
        r = jnp.pad(r, ((0, 0), (1, 1), (1, 1), (0, 0)), mode="reflect")
        r = conv2d_nhwc(r, blk["conv2_w"])
        mean, var = bn_stats(r)
        scale, bias = _bn_scale_bias(mean, var, *blk["bn2"])
        h = fused_bn_add(r, scale, bias, h)          # BN affine + residual add fused

    # upsampling: ConvT3 s2 p1 op1 -> CA -> SA -> BN -> ReLU  (x2)
    for i in (1, 2):
        p = params["up%d" % i]
        h = conv_transpose2d_nhwc(h, p["convt_w"])
        h = attn_norm_relu_stage(h, p["ca"], p["sa"], p["bn"])

    # final: ReflectionPad(3) -> Conv7 (bias) -> Tanh, bias+tanh fused into the matmul
    h = jnp.pad(h, ((0, 0), (3, 3), (3, 3), (0, 0)), mode="reflect")
    h = conv2d_nhwc(h, params["final_w"], bias=params["final_b"], activation="tanh")

    return jnp.transpose(h, (0, 3, 1, 2))            # NHWC -> NCHW


# ---------------------------------------------------------------------------
# Deterministic parameter init (shapes implied by the module's __init__)
# ---------------------------------------------------------------------------
def init_params(key, input_nc, output_nc, ngf, n_blocks, ratio):
    keys = iter(jax.random.split(key, 256))

    def w(shape, scale=0.05):
        return scale * jax.random.normal(next(keys), shape, jnp.float32)

    def bn_p(c):
        gamma = 1.0 + 0.01 * jax.random.normal(next(keys), (c,), jnp.float32)
        beta = 0.01 * jax.random.normal(next(keys), (c,), jnp.float32)
        return (gamma, beta)

    def ca_p(c):
        ch = max(c // ratio, 1)
        return (w((c, ch)), w((ch, c)))

    def sa_p():
        return w((7, 7, 2, 1))

    params = {
        "conv1_w": w((7, 7, input_nc, ngf)),
        "ca1": ca_p(ngf), "sa1": sa_p(), "bn1": bn_p(ngf),
        "down1": {"conv_w": w((3, 3, ngf, ngf * 2)), "ca": ca_p(ngf * 2),
                  "sa": sa_p(), "bn": bn_p(ngf * 2)},
        "down2": {"conv_w": w((3, 3, ngf * 2, ngf * 4)), "ca": ca_p(ngf * 4),
                  "sa": sa_p(), "bn": bn_p(ngf * 4)},
        "blocks": [
            {"conv1_w": w((3, 3, ngf * 4, ngf * 4)), "bn1": bn_p(ngf * 4),
             "conv2_w": w((3, 3, ngf * 4, ngf * 4)), "bn2": bn_p(ngf * 4)}
            for _ in range(n_blocks)
        ],
        # ConvTranspose weights kept in PyTorch layout [Cin, Cout, kh, kw]
        "up1": {"convt_w": w((ngf * 4, ngf * 2, 3, 3)), "ca": ca_p(ngf * 2),
                "sa": sa_p(), "bn": bn_p(ngf * 2)},
        "up2": {"convt_w": w((ngf * 2, ngf, 3, 3)), "ca": ca_p(ngf),
                "sa": sa_p(), "bn": bn_p(ngf)},
        "final_w": w((7, 7, ngf, output_nc)),
        "final_b": w((output_nc,)),
    }
    return params


if __name__ == "__main__":
    key = jax.random.PRNGKey(0)
    k_in, k_par = jax.random.split(key)

    # SMALL shapes consistent with the module (real model: ngf=64, n_blocks=6).
    N, input_nc, H, W = 2, 3, 16, 16
    output_nc, ngf, n_blocks, ratio = 3, 8, 2, 4

    x = jax.random.normal(k_in, (N, input_nc, H, W), jnp.float32)
    params = init_params(k_par, input_nc, output_nc, ngf, n_blocks, ratio)

    fwd = jax.jit(generator_forward)
    y = jax.block_until_ready(fwd(x, params))

    assert y.shape == (N, output_nc, H, W), y.shape
    assert bool(jnp.all(jnp.isfinite(y)))
    assert bool(jnp.all(jnp.abs(y) <= 1.0))  # tanh output range
    print("KERNEL_OK")
</pallas_src>

<mosaic_0001>
module attributes {stable_mosaic.version = 11 : i64} {
  func.func @_matmul_kernel_single(%arg0: i32, %arg1: i32, %arg2: memref<512x256xbf16, #tpu.memory_space<vmem>>, %arg3: memref<256x128xbf16, #tpu.memory_space<vmem>>, %arg4: memref<1x128xf32, #tpu.memory_space<vmem>>, %arg5: memref<1x128xf32, #tpu.memory_space<vmem>>, %arg6: memref<512x128xf32, #tpu.memory_space<vmem>>) attributes {dimension_semantics = [#tpu.dimension_semantics<parallel>, #tpu.dimension_semantics<parallel>], iteration_bounds = array<i64: 1, 1>, scalar_prefetch = 0 : i64, scratch_operands = 0 : i64, tpu.core_type = #tpu.core_type<tc>, window_params = [{transform_indices = @transform_0, window_bounds = array<i64: 512, 256>}, {transform_indices = @transform_1, window_bounds = array<i64: 256, 128>}, {transform_indices = @transform_2, window_bounds = array<i64: 1, 128>}, {transform_indices = @transform_3, window_bounds = array<i64: 1, 128>}, {transform_indices = @transform_4, window_bounds = array<i64: 512, 128>}]} {
    %c0 = arith.constant 0 : index
    %c0_0 = arith.constant 0 : index
    %0 = vector.load %arg2[%c0, %c0_0] : memref<512x256xbf16, #tpu.memory_space<vmem>>, vector<512x256xbf16>
    %c0_1 = arith.constant 0 : index
    %c0_2 = arith.constant 0 : index
    %1 = vector.load %arg3[%c0_1, %c0_2] : memref<256x128xbf16, #tpu.memory_space<vmem>>, vector<256x128xbf16>
    %cst = arith.constant dense<0.000000e+00> : vector<512x128xf32>
    %2 = tpu.matmul %0, %1, %cst {dimension_numbers = #tpu.dot_dimension_numbers<[1], [0], [0], [1], [0, 0, 1, 1], [], []>} : vector<512x256xbf16>, vector<256x128xbf16>, vector<512x128xf32> -> vector<512x128xf32>
    %c0_3 = arith.constant 0 : index
    %c0_4 = arith.constant 0 : index
    %3 = vector.load %arg4[%c0_3, %c0_4] : memref<1x128xf32, #tpu.memory_space<vmem>>, vector<1x128xf32>
    %4 = vector.broadcast %3 : vector<1x128xf32> to vector<512x128xf32>
    %5 = arith.mulf %2, %4 : vector<512x128xf32>
    %c0_5 = arith.constant 0 : index
    %c0_6 = arith.constant 0 : index
    %6 = vector.load %arg5[%c0_5, %c0_6] : memref<1x128xf32, #tpu.memory_space<vmem>>, vector<1x128xf32>
    %7 = vector.broadcast %6 : vector<1x128xf32> to vector<512x128xf32>
    %8 = arith.addf %5, %7 : vector<512x128xf32>
    %c0_7 = arith.constant 0 : index
    %c0_8 = arith.constant 0 : index
    %9 = vector.load %arg6[%c0_7, %c0_8] : memref<512x128xf32, #tpu.memory_space<vmem>>, vector<512x128xf32>
    tpu.vector_store %arg6[%c0_7, %c0_8], %8 {strides = array<i32>} : memref<512x128xf32, #tpu.memory_space<vmem>>, vector<512x128xf32>,
    return
  }
  func.func @transform_0(%arg0: i32, %arg1: i32) -> (i32, i32) {
    %c0_i32 = arith.constant 0 : i32
    %c0_i32_0 = arith.constant 0 : i32
    return %arg0, %c0_i32 : i32, i32
  }
  func.func @transform_1(%arg0: i32, %arg1: i32) -> (i32, i32) {
    %c0_i32 = arith.constant 0 : i32
    %c0_i32_0 = arith.constant 0 : i32
    return %c0_i32, %arg1 : i32, i32
  }
  func.func @transform_2(%arg0: i32, %arg1: i32) -> (i32, i32) {
    %c0_i32 = arith.constant 0 : i32
    %c0_i32_0 = arith.constant 0 : i32
    return %c0_i32, %arg1 : i32, i32
  }
  func.func @transform_3(%arg0: i32, %arg1: i32) -> (i32, i32) {
    %c0_i32 = arith.constant 0 : i32
    %c0_i32_0 = arith.constant 0 : i32
    return %c0_i32, %arg1 : i32, i32
  }
  func.func @transform_4(%arg0: i32, %arg1: i32) -> (i32, i32) {
    %c0_i32 = arith.constant 0 : i32
    return %arg0, %arg1 : i32, i32
  }
}

module attributes {stable_mosaic.version = 11 : i64} {
  func.func @_ca_sa_bn_relu_kernel(%arg0: i32, %arg1: i32, %arg2: memref<1x256x8xf32, #tpu.memory_space<vmem>>, %arg3: memref<1x1x8xf32, #tpu.memory_space<vmem>>, %arg4: memref<1x256x1xf32, #tpu.memory_space<vmem>>, %arg5: memref<1x1x8xf32, #tpu.memory_space<vmem>>, %arg6: memref<1x1x8xf32, #tpu.memory_space<vmem>>, %arg7: memref<1x256x8xf32, #tpu.memory_space<vmem>>) attributes {dimension_semantics = [#tpu.dimension_semantics<parallel>, #tpu.dimension_semantics<parallel>], iteration_bounds = array<i64: 2, 1>, scalar_prefetch = 0 : i64, scratch_operands = 0 : i64, tpu.core_type = #tpu.core_type<tc>, window_params = [{transform_indices = @transform_0, window_bounds = array<i64: 1, 256, 8>}, {transform_indices = @transform_1, window_bounds = array<i64: 1, 1, 8>}, {transform_indices = @transform_2, window_bounds = array<i64: 1, 256, 1>}, {pipeline_mode = #tpu.pipeline_mode<synchronous>, transform_indices = @transform_3, window_bounds = array<i64: 1, 1, 8>}, {pipeline_mode = #tpu.pipeline_mode<synchronous>, transform_indices = @transform_4, window_bounds = array<i64: 1, 1, 8>}, {transform_indices = @transform_5, window_bounds = array<i64: 1, 256, 8>}]} {
    %c0 = arith.constant 0 : index
    %c0_0 = arith.constant 0 : index
    %c0_1 = arith.constant 0 : index
    %0 = vector.load %arg2[%c0, %c0_0, %c0_1] : memref<1x256x8xf32, #tpu.memory_space<vmem>>, vector<1x256x8xf32>
    %c0_2 = arith.constant 0 : index
    %c0_3 = arith.constant 0 : index
    %c0_4 = arith.constant 0 : index
    %1 = vector.load %arg3[%c0_2, %c0_3, %c0_4] : memref<1x1x8xf32, #tpu.memory_space<vmem>>, vector<1x1x8xf32>
    %2 = vector.broadcast %1 : vector<1x1x8xf32> to vector<1x256x8xf32>
    %3 = arith.mulf %0, %2 : vector<1x256x8xf32>
    %c0_5 = arith.constant 0 : index
    %c0_6 = arith.constant 0 : index
    %c0_7 = arith.constant 0 : index
    %4 = vector.load %arg4[%c0_5, %c0_6, %c0_7] : memref<1x256x1xf32, #tpu.memory_space<vmem>>, vector<1x256x1xf32>
    %5 = vector.broadcast %4 : vector<1x256x1xf32> to vector<1x256x8xf32>
    %6 = arith.mulf %3, %5 : vector<1x256x8xf32>
    %c0_8 = arith.constant 0 : index
    %c0_9 = arith.constant 0 : index
    %c0_10 = arith.constant 0 : index
    %7 = vector.load %arg5[%c0_8, %c0_9, %c0_10] : memref<1x1x8xf32, #tpu.memory_space<vmem>>, vector<1x1x8xf32>
    %8 = vector.broadcast %7 : vector<1x1x8xf32> to vector<1x256x8xf32>
    %9 = arith.mulf %6, %8 : vector<1x256x8xf32>
    %c0_11 = arith.constant 0 : index
    %c0_12 = arith.constant 0 : index
    %c0_13 = arith.constant 0 : index
    %10 = vector.load %arg6[%c0_11, %c0_12, %c0_13] : memref<1x1x8xf32, #tpu.memory_space<vmem>>, vector<1x1x8xf32>
    %11 = vector.broadcast %10 : vector<1x1x8xf32> to vector<1x256x8xf32>
    %12 = arith.addf %9, %11 : vector<1x256x8xf32>
    %cst = arith.constant 0.000000e+00 : f32
    %13 = vector.broadcast %cst : f32 to vector<1x256x8xf32>
    %14 = arith.maximumf %12, %13 : vector<1x256x8xf32>
    %c0_14 = arith.constant 0 : index
    %c0_15 = arith.constant 0 : index
    %c0_16 = arith.constant 0 : index
    %15 = vector.load %arg7[%c0_14, %c0_15, %c0_16] : memref<1x256x8xf32, #tpu.memory_space<vmem>>, vector<1x256x8xf32>
    tpu.vector_store %arg7[%c0_14, %c0_15, %c0_16], %14 {strides = array<i32>} : memref<1x256x8xf32, #tpu.memory_space<vmem>>, vector<1x256x8xf32>,
    return
  }
  func.func @transform_0(%arg0: i32, %arg1: i32) -> (i32, i32, i32) {
    %c0_i32 = arith.constant 0 : i32
    %c0_i32_0 = arith.constant 0 : i32
    return %arg0, %arg1, %c0_i32 : i32, i32, i32
  }
  func.func @transform_1(%arg0: i32, %arg1: i32) -> (i32, i32, i32) {
    %c0_i32 = arith.constant 0 : i32
    %c0_i32_0 = arith.constant 0 : i32
    %c0_i32_1 = arith.constant 0 : i32
    return %arg0, %c0_i32, %c0_i32_0 : i32, i32, i32
  }
  func.func @transform_2(%arg0: i32, %arg1: i32) -> (i32, i32, i32) {
    %c0_i32 = arith.constant 0 : i32
    %c0_i32_0 = arith.constant 0 : i32
    return %arg0, %arg1, %c0_i32 : i32, i32, i32
  }
  func.func @transform_3(%arg0: i32, %arg1: i32) -> (i32, i32, i32) {
    %c0_i32 = arith.constant 0 : i32
    %c0_i32_0 = arith.constant 0 : i32
    %c0_i32_1 = arith.constant 0 : i32
    %c0_i32_2 = arith.constant 0 : i32
    return %c0_i32, %c0_i32_0, %c0_i32_1 : i32, i32, i32
  }
  func.func @transform_4(%arg0: i32, %arg1: i32) -> (i32, i32, i32) {
    %c0_i32 = arith.constant 0 : i32
    %c0_i32_0 = arith.constant 0 : i32
    %c0_i32_1 = arith.constant 0 : i32
    %c0_i32_2 = arith.constant 0 : i32
    return %c0_i32, %c0_i32_0, %c0_i32_1 : i32, i32, i32
  }
  func.func @transform_5(%arg0: i32, %arg1: i32) -> (i32, i32, i32) {
    %c0_i32 = arith.constant 0 : i32
    %c0_i32_0 = arith.constant 0 : i32
    return %arg0, %arg1, %c0_i32 : i32, i32, i32
  }
}

module attributes {stable_mosaic.version = 11 : i64} {
  func.func @_matmul_kernel_single(%arg0: i32, %arg1: i32, %arg2: memref<128x128xbf16, #tpu.memory_space<vmem>>, %arg3: memref<128x128xbf16, #tpu.memory_space<vmem>>, %arg4: memref<1x128xf32, #tpu.memory_space<vmem>>, %arg5: memref<1x128xf32, #tpu.memory_space<vmem>>, %arg6: memref<128x128xf32, #tpu.memory_space<vmem>>) attributes {dimension_semantics = [#tpu.dimension_semantics<parallel>, #tpu.dimension_semantics<parallel>], iteration_bounds = array<i64: 1, 1>, scalar_prefetch = 0 : i64, scratch_operands = 0 : i64, tpu.core_type = #tpu.core_type<tc>, window_params = [{transform_indices = @transform_0, window_bounds = array<i64: 128, 128>}, {transform_indices = @transform_1, window_bounds = array<i64: 128, 128>}, {transform_indices = @transform_2, window_bounds = array<i64: 1, 128>}, {transform_indices = @transform_3, window_bounds = array<i64: 1, 128>}, {transform_indices = @transform_4, window_bounds = array<i64: 128, 128>}]} {
    %c0 = arith.constant 0 : index
    %c0_0 = arith.constant 0 : index
    %0 = vector.load %arg2[%c0, %c0_0] : memref<128x128xbf16, #tpu.memory_space<vmem>>, vector<128x128xbf16>
    %c0_1 = arith.constant 0 : index
    %c0_2 = arith.constant 0 : index
    %1 = vector.load %arg3[%c0_1, %c0_2] : memref<128x128xbf16, #tpu.memory_space<vmem>>, vector<128x128xbf16>
    %cst = arith.constant dense<0.000000e+00> : vector<128x128xf32>
    %2 = tpu.matmul %0, %1, %cst {dimension_numbers = #tpu.dot_dimension_numbers<[1], [0], [0], [1], [0, 0, 1, 1], [], []>} : vector<128x128xbf16>, vector<128x128xbf16>, vector<128x128xf32> -> vector<128x128xf32>
    %c0_3 = arith.constant 0 : index
    %c0_4 = arith.constant 0 : index
    %3 = vector.load %arg4[%c0_3, %c0_4] : memref<1x128xf32, #tpu.memory_space<vmem>>, vector<1x128xf32>
    %4 = vector.broadcast %3 : vector<1x128xf32> to vector<128x128xf32>
    %5 = arith.mulf %2, %4 : vector<128x128xf32>
    %c0_5 = arith.constant 0 : index
    %c0_6 = arith.constant 0 : index
    %6 = vector.load %arg5[%c0_5, %c0_6] : memref<1x128xf32, #tpu.memory_space<vmem>>, vector<1x128xf32>
    %7 = vector.broadcast %6 : vector<1x128xf32> to vector<128x128xf32>
    %8 = arith.addf %5, %7 : vector<128x128xf32>
    %c0_7 = arith.constant 0 : index
    %c0_8 = arith.constant 0 : index
    %9 = vector.load %arg6[%c0_7, %c0_8] : memref<128x128xf32, #tpu.memory_space<vmem>>, vector<128x128xf32>
    tpu.vector_store %arg6[%c0_7, %c0_8], %8 {strides = array<i32>} : memref<128x128xf32, #tpu.memory_space<vmem>>, vector<128x128xf32>,
    return
  }
  func.func @transform_0(%arg0: i32, %arg1: i32) -> (i32, i32) {
    %c0_i32 = arith.constant 0 : i32
    %c0_i32_0 = arith.constant 0 : i32
    return %arg0, %c0_i32 : i32, i32
  }
  func.func @transform_1(%arg0: i32, %arg1: i32) -> (i32, i32) {
    %c0_i32 = arith.constant 0 : i32
    %c0_i32_0 = arith.constant 0 : i32
    return %c0_i32, %arg1 : i32, i32
  }
  func.func @transform_2(%arg0: i32, %arg1: i32) -> (i32, i32) {
    %c0_i32 = arith.constant 0 : i32
    %c0_i32_0 = arith.constant 0 : i32
    return %c0_i32, %arg1 : i32, i32
  }
  func.func @transform_3(%arg0: i32, %arg1: i32) -> (i32, i32) {
    %c0_i32 = arith.constant 0 : i32
    %c0_i32_0 = arith.constant 0 : i32
    return %c0_i32, %arg1 : i32, i32
  }
  func.func @transform_4(%arg0: i32, %arg1: i32) -> (i32, i32) {
    %c0_i32 = arith.constant 0 : i32
    return %arg0, %arg1 : i32, i32
  }
}

module attributes {stable_mosaic.version = 11 : i64} {
  func.func @_ca_sa_bn_relu_kernel(%arg0: i32, %arg1: i32, %arg2: memref<1x64x16xf32, #tpu.memory_space<vmem>>, %arg3: memref<1x1x16xf32, #tpu.memory_space<vmem>>, %arg4: memref<1x64x1xf32, #tpu.memory_space<vmem>>, %arg5: memref<1x1x16xf32, #tpu.memory_space<vmem>>, %arg6: memref<1x1x16xf32, #tpu.memory_space<vmem>>, %arg7: memref<1x64x16xf32, #tpu.memory_space<vmem>>) attributes {dimension_semantics = [#tpu.dimension_semantics<parallel>, #tpu.dimension_semantics<parallel>], iteration_bounds = array<i64: 2, 1>, scalar_prefetch = 0 : i64, scratch_operands = 0 : i64, tpu.core_type = #tpu.core_type<tc>, window_params = [{transform_indices = @transform_0, window_bounds = array<i64: 1, 64, 16>}, {transform_indices = @transform_1, window_bounds = array<i64: 1, 1, 16>}, {transform_indices = @transform_2, window_bounds = array<i64: 1, 64, 1>}, {pipeline_mode = #tpu.pipeline_mode<synchronous>, transform_indices = @transform_3, window_bounds = array<i64: 1, 1, 16>}, {pipeline_mode = #tpu.pipeline_mode<synchronous>, transform_indices = @transform_4, window_bounds = array<i64: 1, 1, 16>}, {transform_indices = @transform_5, window_bounds = array<i64: 1, 64, 16>}]} {
    %c0 = arith.constant 0 : index
    %c0_0 = arith.constant 0 : index
    %c0_1 = arith.constant 0 : index
    %0 = vector.load %arg2[%c0, %c0_0, %c0_1] : memref<1x64x16xf32, #tpu.memory_space<vmem>>, vector<1x64x16xf32>
    %c0_2 = arith.constant 0 : index
    %c0_3 = arith.constant 0 : index
    %c0_4 = arith.constant 0 : index
    %1 = vector.load %arg3[%c0_2, %c0_3, %c0_4] : memref<1x1x16xf32, #tpu.memory_space<vmem>>, vector<1x1x16xf32>
    %2 = vector.broadcast %1 : vector<1x1x16xf32> to vector<1x64x16xf32>
    %3 = arith.mulf %0, %2 : vector<1x64x16xf32>
    %c0_5 = arith.constant 0 : index
    %c0_6 = arith.constant 0 : index
    %c0_7 = arith.constant 0 : index
    %4 = vector.load %arg4[%c0_5, %c0_6, %c0_7] : memref<1x64x1xf32, #tpu.memory_space<vmem>>, vector<1x64x1xf32>
    %5 = vector.broadcast %4 : vector<1x64x1xf32> to vector<1x64x16xf32>
    %6 = arith.mulf %3, %5 : vector<1x64x16xf32>
    %c0_8 = arith.constant 0 : index
    %c0_9 = arith.constant 0 : index
    %c0_10 = arith.constant 0 : index
    %7 = vector.load %arg5[%c0_8, %c0_9, %c0_10] : memref<1x1x16xf32, #tpu.memory_space<vmem>>, vector<1x1x16xf32>
    %8 = vector.broadcast %7 : vector<1x1x16xf32> to vector<1x64x16xf32>
    %9 = arith.mulf %6, %8 : vector<1x64x16xf32>
    %c0_11 = arith.constant 0 : index
    %c0_12 = arith.constant 0 : index
    %c0_13 = arith.constant 0 : index
    %10 = vector.load %arg6[%c0_11, %c0_12, %c0_13] : memref<1x1x16xf32, #tpu.memory_space<vmem>>, vector<1x1x16xf32>
    %11 = vector.broadcast %10 : vector<1x1x16xf32> to vector<1x64x16xf32>
    %12 = arith.addf %9, %11 : vector<1x64x16xf32>
    %cst = arith.constant 0.000000e+00 : f32
    %13 = vector.broadcast %cst : f32 to vector<1x64x16xf32>
    %14 = arith.maximumf %12, %13 : vector<1x64x16xf32>
    %c0_14 = arith.constant 0 : index
    %c0_15 = arith.constant 0 : index
    %c0_16 = arith.constant 0 : index
    %15 = vector.load %arg7[%c0_14, %c0_15, %c0_16] : memref<1x64x16xf32, #tpu.memory_space<vmem>>, vector<1x64x16xf32>
    tpu.vector_store %arg7[%c0_14, %c0_15, %c0_16], %14 {strides = array<i32>} : memref<1x64x16xf32, #tpu.memory_space<vmem>>, vector<1x64x16xf32>,
    return
  }
  func.func @transform_0(%arg0: i32, %arg1: i32) -> (i32, i32, i32) {
    %c0_i32 = arith.constant 0 : i32
    %c0_i32_0 = arith.constant 0 : i32
    return %arg0, %arg1, %c0_i32 : i32, i32, i32
  }
  func.func @transform_1(%arg0: i32, %arg1: i32) -> (i32, i32, i32) {
    %c0_i32 = arith.constant 0 : i32
    %c0_i32_0 = arith.constant 0 : i32
    %c0_i32_1 = arith.constant 0 : i32
    return %arg0, %c0_i32, %c0_i32_0 : i32, i32, i32
  }
  func.func @transform_2(%arg0: i32, %arg1: i32) -> (i32, i32, i32) {
    %c0_i32 = arith.constant 0 : i32
    %c0_i32_0 = arith.constant 0 : i32
    return %arg0, %arg1, %c0_i32 : i32, i32, i32
  }
  func.func @transform_3(%arg0: i32, %arg1: i32) -> (i32, i32, i32) {
    %c0_i32 = arith.constant 0 : i32
    %c0_i32_0 = arith.constant 0 : i32
    %c0_i32_1 = arith.constant 0 : i32
    %c0_i32_2 = arith.constant 0 : i32
    return %c0_i32, %c0_i32_0, %c0_i32_1 : i32, i32, i32
  }
  func.func @transform_4(%arg0: i32, %arg1: i32) -> (i32, i32, i32) {
    %c0_i32 = arith.constant 0 : i32
    %c0_i32_0 = arith.constant 0 : i32
    %c0_i32_1 = arith.constant 0 : i32
    %c0_i32_2 = arith.constant 0 : i32
    return %c0_i32, %c0_i32_0, %c0_i32_1 : i32, i32, i32
  }
  func.func @transform_5(%arg0: i32, %arg1: i32) -> (i32, i32, i32) {
    %c0_i32 = arith.constant 0 : i32
    %c0_i32_0 = arith.constant 0 : i32
    return %arg0, %arg1, %c0_i32 : i32, i32, i32
  }
}

module attributes {stable_mosaic.version = 11 : i64} {
  func.func @_matmul_kernel_single(%arg0: i32, %arg1: i32, %arg2: memref<32x256xbf16, #tpu.memory_space<vmem>>, %arg3: memref<256x128xbf16, #tpu.memory_space<vmem>>, %arg4: memref<1x128xf32, #tpu.memory_space<vmem>>, %arg5: memref<1x128xf32, #tpu.memory_space<vmem>>, %arg6: memref<32x128xf32, #tpu.memory_space<vmem>>) attributes {dimension_semantics = [#tpu.dimension_semantics<parallel>, #tpu.dimension_semantics<parallel>], iteration_bounds = array<i64: 1, 1>, scalar_prefetch = 0 : i64, scratch_operands = 0 : i64, tpu.core_type = #tpu.core_type<tc>, window_params = [{transform_indices = @transform_0, window_bounds = array<i64: 32, 256>}, {transform_indices = @transform_1, window_bounds = array<i64: 256, 128>}, {transform_indices = @transform_2, window_bounds = array<i64: 1, 128>}, {transform_indices = @transform_3, window_bounds = array<i64: 1, 128>}, {transform_indices = @transform_4, window_bounds = array<i64: 32, 128>}]} {
    %c0 = arith.constant 0 : index
    %c0_0 = arith.constant 0 : index
    %0 = vector.load %arg2[%c0, %c0_0] : memref<32x256xbf16, #tpu.memory_space<vmem>>, vector<32x256xbf16>
    %c0_1 = arith.constant 0 : index
    %c0_2 = arith.constant 0 : index
    %1 = vector.load %arg3[%c0_1, %c0_2] : memref<256x128xbf16, #tpu.memory_space<vmem>>, vector<256x128xbf16>
    %cst = arith.constant dense<0.000000e+00> : vector<32x128xf32>
    %2 = tpu.matmul %0, %1, %cst {dimension_numbers = #tpu.dot_dimension_numbers<[1], [0], [0], [1], [0, 0, 1, 1], [], []>} : vector<32x256xbf16>, vector<256x128xbf16>, vector<32x128xf32> -> vector<32x128xf32>
    %c0_3 = arith.constant 0 : index
    %c0_4 = arith.constant 0 : index
    %3 = vector.load %arg4[%c0_3, %c0_4] : memref<1x128xf32, #tpu.memory_space<vmem>>, vector<1x128xf32>
    %4 = vector.broadcast %3 : vector<1x128xf32> to vector<32x128xf32>
    %5 = arith.mulf %2, %4 : vector<32x128xf32>
    %c0_5 = arith.constant 0 : index
    %c0_6 = arith.constant 0 : index
    %6 = vector.load %arg5[%c0_5, %c0_6] : memref<1x128xf32, #tpu.memory_space<vmem>>, vector<1x128xf32>
    %7 = vector.broadcast %6 : vector<1x128xf32> to vector<32x128xf32>
    %8 = arith.addf %5, %7 : vector<32x128xf32>
    %c0_7 = arith.constant 0 : index
    %c0_8 = arith.constant 0 : index
    %9 = vector.load %arg6[%c0_7, %c0_8] : memref<32x128xf32, #tpu.memory_space<vmem>>, vector<32x128xf32>
    tpu.vector_store %arg6[%c0_7, %c0_8], %8 {strides = array<i32>} : memref<32x128xf32, #tpu.memory_space<vmem>>, vector<32x128xf32>,
    return
  }
  func.func @transform_0(%arg0: i32, %arg1: i32) -> (i32, i32) {
    %c0_i32 = arith.constant 0 : i32
    %c0_i32_0 = arith.constant 0 : i32
    return %arg0, %c0_i32 : i32, i32
  }
  func.func @transform_1(%arg0: i32, %arg1: i32) -> (i32, i32) {
    %c0_i32 = arith.constant 0 : i32
    %c0_i32_0 = arith.constant 0 : i32
    return %c0_i32, %arg1 : i32, i32
  }
  func.func @transform_2(%arg0: i32, %arg1: i32) -> (i32, i32) {
    %c0_i32 = arith.constant 0 : i32
    %c0_i32_0 = arith.constant 0 : i32
    return %c0_i32, %arg1 : i32, i32
  }
  func.func @transform_3(%arg0: i32, %arg1: i32) -> (i32, i32) {
    %c0_i32 = arith.constant 0 : i32
    %c0_i32_0 = arith.constant 0 : i32
    return %c0_i32, %arg1 : i32, i32
  }
  func.func @transform_4(%arg0: i32, %arg1: i32) -> (i32, i32) {
    %c0_i32 = arith.constant 0 : i32
    return %arg0, %arg1 : i32, i32
  }
}

module attributes {stable_mosaic.version = 11 : i64} {
  func.func @_ca_sa_bn_relu_kernel(%arg0: i32, %arg1: i32, %arg2: memref<1x16x32xf32, #tpu.memory_space<vmem>>, %arg3: memref<1x1x32xf32, #tpu.memory_space<vmem>>, %arg4: memref<1x16x1xf32, #tpu.memory_space<vmem>>, %arg5: memref<1x1x32xf32, #tpu.memory_space<vmem>>, %arg6: memref<1x1x32xf32, #tpu.memory_space<vmem>>, %arg7: memref<1x16x32xf32, #tpu.memory_space<vmem>>) attributes {dimension_semantics = [#tpu.dimension_semantics<parallel>, #tpu.dimension_semantics<parallel>], iteration_bounds = array<i64: 2, 1>, scalar_prefetch = 0 : i64, scratch_operands = 0 : i64, tpu.core_type = #tpu.core_type<tc>, window_params = [{transform_indices = @transform_0, window_bounds = array<i64: 1, 16, 32>}, {transform_indices = @transform_1, window_bounds = array<i64: 1, 1, 32>}, {transform_indices = @transform_2, window_bounds = array<i64: 1, 16, 1>}, {pipeline_mode = #tpu.pipeline_mode<synchronous>, transform_indices = @transform_3, window_bounds = array<i64: 1, 1, 32>}, {pipeline_mode = #tpu.pipeline_mode<synchronous>, transform_indices = @transform_4, window_bounds = array<i64: 1, 1, 32>}, {transform_indices = @transform_5, window_bounds = array<i64: 1, 16, 32>}]} {
    %c0 = arith.constant 0 : index
    %c0_0 = arith.constant 0 : index
    %c0_1 = arith.constant 0 : index
    %0 = vector.load %arg2[%c0, %c0_0, %c0_1] : memref<1x16x32xf32, #tpu.memory_space<vmem>>, vector<1x16x32xf32>
    %c0_2 = arith.constant 0 : index
    %c0_3 = arith.constant 0 : index
    %c0_4 = arith.constant 0 : index
    %1 = vector.load %arg3[%c0_2, %c0_3, %c0_4] : memref<1x1x32xf32, #tpu.memory_space<vmem>>, vector<1x1x32xf32>
    %2 = vector.broadcast %1 : vector<1x1x32xf32> to vector<1x16x32xf32>
    %3 = arith.mulf %0, %2 : vector<1x16x32xf32>
    %c0_5 = arith.constant 0 : index
    %c0_6 = arith.constant 0 : index
    %c0_7 = arith.constant 0 : index
    %4 = vector.load %arg4[%c0_5, %c0_6, %c0_7] : memref<1x16x1xf32, #tpu.memory_space<vmem>>, vector<1x16x1xf32>
    %5 = vector.broadcast %4 : vector<1x16x1xf32> to vector<1x16x32xf32>
    %6 = arith.mulf %3, %5 : vector<1x16x32xf32>
    %c0_8 = arith.constant 0 : index
    %c0_9 = arith.constant 0 : index
    %c0_10 = arith.constant 0 : index
    %7 = vector.load %arg5[%c0_8, %c0_9, %c0_10] : memref<1x1x32xf32, #tpu.memory_space<vmem>>, vector<1x1x32xf32>
    %8 = vector.broadcast %7 : vector<1x1x32xf32> to vector<1x16x32xf32>
    %9 = arith.mulf %6, %8 : vector<1x16x32xf32>
    %c0_11 = arith.constant 0 : index
    %c0_12 = arith.constant 0 : index
    %c0_13 = arith.constant 0 : index
    %10 = vector.load %arg6[%c0_11, %c0_12, %c0_13] : memref<1x1x32xf32, #tpu.memory_space<vmem>>, vector<1x1x32xf32>
    %11 = vector.broadcast %10 : vector<1x1x32xf32> to vector<1x16x32xf32>
    %12 = arith.addf %9, %11 : vector<1x16x32xf32>
    %cst = arith.constant 0.000000e+00 : f32
    %13 = vector.broadcast %cst : f32 to vector<1x16x32xf32>
    %14 = arith.maximumf %12, %13 : vector<1x16x32xf32>
    %c0_14 = arith.constant 0 : index
    %c0_15 = arith.constant 0 : index
    %c0_16 = arith.constant 0 : index
    %15 = vector.load %arg7[%c0_14, %c0_15, %c0_16] : memref<1x16x32xf32, #tpu.memory_space<vmem>>, vector<1x16x32xf32>
    tpu.vector_store %arg7[%c0_14, %c0_15, %c0_16], %14 {strides = array<i32>} : memref<1x16x32xf32, #tpu.memory_space<vmem>>, vector<1x16x32xf32>,
    return
  }
  func.func @transform_0(%arg0: i32, %arg1: i32) -> (i32, i32, i32) {
    %c0_i32 = arith.constant 0 : i32
    %c0_i32_0 = arith.constant 0 : i32
    return %arg0, %arg1, %c0_i32 : i32, i32, i32
  }
  func.func @transform_1(%arg0: i32, %arg1: i32) -> (i32, i32, i32) {
    %c0_i32 = arith.constant 0 : i32
    %c0_i32_0 = arith.constant 0 : i32
    %c0_i32_1 = arith.constant 0 : i32
    return %arg0, %c0_i32, %c0_i32_0 : i32, i32, i32
  }
  func.func @transform_2(%arg0: i32, %arg1: i32) -> (i32, i32, i32) {
    %c0_i32 = arith.constant 0 : i32
    %c0_i32_0 = arith.constant 0 : i32
    return %arg0, %arg1, %c0_i32 : i32, i32, i32
  }
  func.func @transform_3(%arg0: i32, %arg1: i32) -> (i32, i32, i32) {
    %c0_i32 = arith.constant 0 : i32
    %c0_i32_0 = arith.constant 0 : i32
    %c0_i32_1 = arith.constant 0 : i32
    %c0_i32_2 = arith.constant 0 : i32
    return %c0_i32, %c0_i32_0, %c0_i32_1 : i32, i32, i32
  }
  func.func @transform_4(%arg0: i32, %arg1: i32) -> (i32, i32, i32) {
    %c0_i32 = arith.constant 0 : i32
    %c0_i32_0 = arith.constant 0 : i32
    %c0_i32_1 = arith.constant 0 : i32
    %c0_i32_2 = arith.constant 0 : i32
    return %c0_i32, %c0_i32_0, %c0_i32_1 : i32, i32, i32
  }
  func.func @transform_5(%arg0: i32, %arg1: i32) -> (i32, i32, i32) {
    %c0_i32 = arith.constant 0 : i32
    %c0_i32_0 = arith.constant 0 : i32
    return %arg0, %arg1, %c0_i32 : i32, i32, i32
  }
}

module attributes {stable_mosaic.version = 11 : i64} {
  func.func @_matmul_kernel_single(%arg0: i32, %arg1: i32, %arg2: memref<32x384xbf16, #tpu.memory_space<vmem>>, %arg3: memref<384x128xbf16, #tpu.memory_space<vmem>>, %arg4: memref<1x128xf32, #tpu.memory_space<vmem>>, %arg5: memref<1x128xf32, #tpu.memory_space<vmem>>, %arg6: memref<32x128xf32, #tpu.memory_space<vmem>>) attributes {dimension_semantics = [#tpu.dimension_semantics<parallel>, #tpu.dimension_semantics<parallel>], iteration_bounds = array<i64: 1, 1>, scalar_prefetch = 0 : i64, scratch_operands = 0 : i64, tpu.core_type = #tpu.core_type<tc>, window_params = [{transform_indices = @transform_0, window_bounds = array<i64: 32, 384>}, {transform_indices = @transform_1, window_bounds = array<i64: 384, 128>}, {transform_indices = @transform_2, window_bounds = array<i64: 1, 128>}, {transform_indices = @transform_3, window_bounds = array<i64: 1, 128>}, {transform_indices = @transform_4, window_bounds = array<i64: 32, 128>}]} {
    %c0 = arith.constant 0 : index
    %c0_0 = arith.constant 0 : index
    %0 = vector.load %arg2[%c0, %c0_0] : memref<32x384xbf16, #tpu.memory_space<vmem>>, vector<32x384xbf16>
    %c0_1 = arith.constant 0 : index
    %c0_2 = arith.constant 0 : index
    %1 = vector.load %arg3[%c0_1, %c0_2] : memref<384x128xbf16, #tpu.memory_space<vmem>>, vector<384x128xbf16>
    %cst = arith.constant dense<0.000000e+00> : vector<32x128xf32>
    %2 = tpu.matmul %0, %1, %cst {dimension_numbers = #tpu.dot_dimension_numbers<[1], [0], [0], [1], [0, 0, 1, 1], [], []>} : vector<32x384xbf16>, vector<384x128xbf16>, vector<32x128xf32> -> vector<32x128xf32>
    %c0_3 = arith.constant 0 : index
    %c0_4 = arith.constant 0 : index
    %3 = vector.load %arg4[%c0_3, %c0_4] : memref<1x128xf32, #tpu.memory_space<vmem>>, vector<1x128xf32>
    %4 = vector.broadcast %3 : vector<1x128xf32> to vector<32x128xf32>
    %5 = arith.mulf %2, %4 : vector<32x128xf32>
    %c0_5 = arith.constant 0 : index
    %c0_6 = arith.constant 0 : index
    %6 = vector.load %arg5[%c0_5, %c0_6] : memref<1x128xf32, #tpu.memory_space<vmem>>, vector<1x128xf32>
    %7 = vector.broadcast %6 : vector<1x128xf32> to vector<32x128xf32>
    %8 = arith.addf %5, %7 : vector<32x128xf32>
    %c0_7 = arith.constant 0 : index
    %c0_8 = arith.constant 0 : index
    %9 = vector.load %arg6[%c0_7, %c0_8] : memref<32x128xf32, #tpu.memory_space<vmem>>, vector<32x128xf32>
    tpu.vector_store %arg6[%c0_7, %c0_8], %8 {strides = array<i32>} : memref<32x128xf32, #tpu.memory_space<vmem>>, vector<32x128xf32>,
    return
  }
  func.func @transform_0(%arg0: i32, %arg1: i32) -> (i32, i32) {
    %c0_i32 = arith.constant 0 : i32
    %c0_i32_0 = arith.constant 0 : i32
    return %arg0, %c0_i32 : i32, i32
  }
  func.func @transform_1(%arg0: i32, %arg1: i32) -> (i32, i32) {
    %c0_i32 = arith.constant 0 : i32
    %c0_i32_0 = arith.constant 0 : i32
    return %c0_i32, %arg1 : i32, i32
  }
  func.func @transform_2(%arg0: i32, %arg1: i32) -> (i32, i32) {
    %c0_i32 = arith.constant 0 : i32
    %c0_i32_0 = arith.constant 0 : i32
    return %c0_i32, %arg1 : i32, i32
  }
  func.func @transform_3(%arg0: i32, %arg1: i32) -> (i32, i32) {
    %c0_i32 = arith.constant 0 : i32
    %c0_i32_0 = arith.constant 0 : i32
    return %c0_i32, %arg1 : i32, i32
  }
  func.func @transform_4(%arg0: i32, %arg1: i32) -> (i32, i32) {
    %c0_i32 = arith.constant 0 : i32
    return %arg0, %arg1 : i32, i32
  }
}

module attributes {stable_mosaic.version = 11 : i64} {
  func.func @_bn_add_kernel(%arg0: i32, %arg1: memref<32x32xf32, #tpu.memory_space<vmem>>, %arg2: memref<1x32xf32, #tpu.memory_space<vmem>>, %arg3: memref<1x32xf32, #tpu.memory_space<vmem>>, %arg4: memref<32x32xf32, #tpu.memory_space<vmem>>, %arg5: memref<32x32xf32, #tpu.memory_space<vmem>>) attributes {dimension_semantics = [#tpu.dimension_semantics<parallel>], iteration_bounds = array<i64: 1>, scalar_prefetch = 0 : i64, scratch_operands = 0 : i64, tpu.core_type = #tpu.core_type<tc>, window_params = [{transform_indices = @transform_0, window_bounds = array<i64: 32, 32>}, {pipeline_mode = #tpu.pipeline_mode<synchronous>, transform_indices = @transform_1, window_bounds = array<i64: 1, 32>}, {pipeline_mode = #tpu.pipeline_mode<synchronous>, transform_indices = @transform_2, window_bounds = array<i64: 1, 32>}, {transform_indices = @transform_3, window_bounds = array<i64: 32, 32>}, {transform_indices = @transform_4, window_bounds = array<i64: 32, 32>}]} {
    %c0 = arith.constant 0 : index
    %c0_0 = arith.constant 0 : index
    %0 = vector.load %arg1[%c0, %c0_0] : memref<32x32xf32, #tpu.memory_space<vmem>>, vector<32x32xf32>
    %c0_1 = arith.constant 0 : index
    %c0_2 = arith.constant 0 : index
    %1 = vector.load %arg2[%c0_1, %c0_2] : memref<1x32xf32, #tpu.memory_space<vmem>>, vector<1x32xf32>
    %2 = vector.broadcast %1 : vector<1x32xf32> to vector<32x32xf32>
    %3 = arith.mulf %0, %2 : vector<32x32xf32>
    %c0_3 = arith.constant 0 : index
    %c0_4 = arith.constant 0 : index
    %4 = vector.load %arg3[%c0_3, %c0_4] : memref<1x32xf32, #tpu.memory_space<vmem>>, vector<1x32xf32>
    %5 = vector.broadcast %4 : vector<1x32xf32> to vector<32x32xf32>
    %6 = arith.addf %3, %5 : vector<32x32xf32>
    %c0_5 = arith.constant 0 : index
    %c0_6 = arith.constant 0 : index
    %7 = vector.load %arg4[%c0_5, %c0_6] : memref<32x32xf32, #tpu.memory_space<vmem>>, vector<32x32xf32>
    %8 = arith.addf %6, %7 : vector<32x32xf32>
    %c0_7 = arith.constant 0 : index
    %c0_8 = arith.constant 0 : index
    %9 = vector.load %arg5[%c0_7, %c0_8] : memref<32x32xf32, #tpu.memory_space<vmem>>, vector<32x32xf32>
    tpu.vector_store %arg5[%c0_7, %c0_8], %8 {strides = array<i32>} : memref<32x32xf32, #tpu.memory_space<vmem>>, vector<32x32xf32>,
    return
  }
  func.func @transform_0(%arg0: i32) -> (i32, i32) {
    %c0_i32 = arith.constant 0 : i32
    %c0_i32_0 = arith.constant 0 : i32
    return %arg0, %c0_i32 : i32, i32
  }
  func.func @transform_1(%arg0: i32) -> (i32, i32) {
    %c0_i32 = arith.constant 0 : i32
    %c0_i32_0 = arith.constant 0 : i32
    %c0_i32_1 = arith.constant 0 : i32
    return %c0_i32, %c0_i32_0 : i32, i32
  }
  func.func @transform_2(%arg0: i32) -> (i32, i32) {
    %c0_i32 = arith.constant 0 : i32
    %c0_i32_0 = arith.constant 0 : i32
    %c0_i32_1 = arith.constant 0 : i32
    return %c0_i32, %c0_i32_0 : i32, i32
  }
  func.func @transform_3(%arg0: i32) -> (i32, i32) {
    %c0_i32 = arith.constant 0 : i32
    %c0_i32_0 = arith.constant 0 : i32
    return %arg0, %c0_i32 : i32, i32
  }
  func.func @transform_4(%arg0: i32) -> (i32, i32) {
    %c0_i32 = arith.constant 0 : i32
    %c0_i32_0 = arith.constant 0 : i32
    return %arg0, %c0_i32 : i32, i32
  }
}

module attributes {stable_mosaic.version = 11 : i64} {
  func.func @_bn_act_kernel(%arg0: i32, %arg1: memref<32x32xf32, #tpu.memory_space<vmem>>, %arg2: memref<1x32xf32, #tpu.memory_space<vmem>>, %arg3: memref<1x32xf32, #tpu.memory_space<vmem>>, %arg4: memref<32x32xf32, #tpu.memory_space<vmem>>) attributes {dimension_semantics = [#tpu.dimension_semantics<parallel>], iteration_bounds = array<i64: 1>, scalar_prefetch = 0 : i64, scratch_operands = 0 : i64, tpu.core_type = #tpu.core_type<tc>, window_params = [{transform_indices = @transform_0, window_bounds = array<i64: 32, 32>}, {pipeline_mode = #tpu.pipeline_mode<synchronous>, transform_indices = @transform_1, window_bounds = array<i64: 1, 32>}, {pipeline_mode = #tpu.pipeline_mode<synchronous>, transform_indices = @transform_2, window_bounds = array<i64: 1, 32>}, {transform_indices = @transform_3, window_bounds = array<i64: 32, 32>}]} {
    %c0 = arith.constant 0 : index
    %c0_0 = arith.constant 0 : index
    %0 = vector.load %arg1[%c0, %c0_0] : memref<32x32xf32, #tpu.memory_space<vmem>>, vector<32x32xf32>
    %c0_1 = arith.constant 0 : index
    %c0_2 = arith.constant 0 : index
    %1 = vector.load %arg2[%c0_1, %c0_2] : memref<1x32xf32, #tpu.memory_space<vmem>>, vector<1x32xf32>
    %2 = vector.broadcast %1 : vector<1x32xf32> to vector<32x32xf32>
    %3 = arith.mulf %0, %2 : vector<32x32xf32>
    %c0_3 = arith.constant 0 : index
    %c0_4 = arith.constant 0 : index
    %4 = vector.load %arg3[%c0_3, %c0_4] : memref<1x32xf32, #tpu.memory_space<vmem>>, vector<1x32xf32>
    %5 = vector.broadcast %4 : vector<1x32xf32> to vector<32x32xf32>
    %6 = arith.addf %3, %5 : vector<32x32xf32>
    %cst = arith.constant 0.000000e+00 : f32
    %7 = vector.broadcast %cst : f32 to vector<32x32xf32>
    %8 = arith.maximumf %6, %7 : vector<32x32xf32>
    %c0_5 = arith.constant 0 : index
    %c0_6 = arith.constant 0 : index
    %9 = vector.load %arg4[%c0_5, %c0_6] : memref<32x32xf32, #tpu.memory_space<vmem>>, vector<32x32xf32>
    tpu.vector_store %arg4[%c0_5, %c0_6], %8 {strides = array<i32>} : memref<32x32xf32, #tpu.memory_space<vmem>>, vector<32x32xf32>,
    return
  }
  func.func @transform_0(%arg0: i32) -> (i32, i32) {
    %c0_i32 = arith.constant 0 : i32
    %c0_i32_0 = arith.constant 0 : i32
    return %arg0, %c0_i32 : i32, i32
  }
  func.func @transform_1(%arg0: i32) -> (i32, i32) {
    %c0_i32 = arith.constant 0 : i32
    %c0_i32_0 = arith.constant 0 : i32
    %c0_i32_1 = arith.constant 0 : i32
    return %c0_i32, %c0_i32_0 : i32, i32
  }
  func.func @transform_2(%arg0: i32) -> (i32, i32) {
    %c0_i32 = arith.constant 0 : i32
    %c0_i32_0 = arith.constant 0 : i32
    %c0_i32_1 = arith.constant 0 : i32
    return %c0_i32, %c0_i32_0 : i32, i32
  }
  func.func @transform_3(%arg0: i32) -> (i32, i32) {
    %c0_i32 = arith.constant 0 : i32
    %c0_i32_0 = arith.constant 0 : i32
    return %arg0, %c0_i32 : i32, i32
  }
}

module attributes {stable_mosaic.version = 11 : i64} {
  func.func @_matmul_kernel_single(%arg0: i32, %arg1: i32, %arg2: memref<32x128xbf16, #tpu.memory_space<vmem>>, %arg3: memref<128x128xbf16, #tpu.memory_space<vmem>>, %arg4: memref<1x128xf32, #tpu.memory_space<vmem>>, %arg5: memref<1x128xf32, #tpu.memory_space<vmem>>, %arg6: memref<32x128xf32, #tpu.memory_space<vmem>>) attributes {dimension_semantics = [#tpu.dimension_semantics<parallel>, #tpu.dimension_semantics<parallel>], iteration_bounds = array<i64: 1, 1>, scalar_prefetch = 0 : i64, scratch_operands = 0 : i64, tpu.core_type = #tpu.core_type<tc>, window_params = [{transform_indices = @transform_0, window_bounds = array<i64: 32, 128>}, {transform_indices = @transform_1, window_bounds = array<i64: 128, 128>}, {transform_indices = @transform_2, window_bounds = array<i64: 1, 128>}, {transform_indices = @transform_3, window_bounds = array<i64: 1, 128>}, {transform_indices = @transform_4, window_bounds = array<i64: 32, 128>}]} {
    %c0 = arith.constant 0 : index
    %c0_0 = arith.constant 0 : index
    %0 = vector.load %arg2[%c0, %c0_0] : memref<32x128xbf16, #tpu.memory_space<vmem>>, vector<32x128xbf16>
    %c0_1 = arith.constant 0 : index
    %c0_2 = arith.constant 0 : index
    %1 = vector.load %arg3[%c0_1, %c0_2] : memref<128x128xbf16, #tpu.memory_space<vmem>>, vector<128x128xbf16>
    %cst = arith.constant dense<0.000000e+00> : vector<32x128xf32>
    %2 = tpu.matmul %0, %1, %cst {dimension_numbers = #tpu.dot_dimension_numbers<[1], [0], [0], [1], [0, 0, 1, 1], [], []>} : vector<32x128xbf16>, vector<128x128xbf16>, vector<32x128xf32> -> vector<32x128xf32>
    %c0_3 = arith.constant 0 : index
    %c0_4 = arith.constant 0 : index
    %3 = vector.load %arg4[%c0_3, %c0_4] : memref<1x128xf32, #tpu.memory_space<vmem>>, vector<1x128xf32>
    %4 = vector.broadcast %3 : vector<1x128xf32> to vector<32x128xf32>
    %5 = arith.mulf %2, %4 : vector<32x128xf32>
    %c0_5 = arith.constant 0 : index
    %c0_6 = arith.constant 0 : index
    %6 = vector.load %arg5[%c0_5, %c0_6] : memref<1x128xf32, #tpu.memory_space<vmem>>, vector<1x128xf32>
    %7 = vector.broadcast %6 : vector<1x128xf32> to vector<32x128xf32>
    %8 = arith.addf %5, %7 : vector<32x128xf32>
    %c0_7 = arith.constant 0 : index
    %c0_8 = arith.constant 0 : index
    %9 = vector.load %arg6[%c0_7, %c0_8] : memref<32x128xf32, #tpu.memory_space<vmem>>, vector<32x128xf32>
    tpu.vector_store %arg6[%c0_7, %c0_8], %8 {strides = array<i32>} : memref<32x128xf32, #tpu.memory_space<vmem>>, vector<32x128xf32>,
    return
  }
  func.func @transform_0(%arg0: i32, %arg1: i32) -> (i32, i32) {
    %c0_i32 = arith.constant 0 : i32
    %c0_i32_0 = arith.constant 0 : i32
    return %arg0, %c0_i32 : i32, i32
  }
  func.func @transform_1(%arg0: i32, %arg1: i32) -> (i32, i32) {
    %c0_i32 = arith.constant 0 : i32
    %c0_i32_0 = arith.constant 0 : i32
    return %c0_i32, %arg1 : i32, i32
  }
  func.func @transform_2(%arg0: i32, %arg1: i32) -> (i32, i32) {
    %c0_i32 = arith.constant 0 : i32
    %c0_i32_0 = arith.constant 0 : i32
    return %c0_i32, %arg1 : i32, i32
  }
  func.func @transform_3(%arg0: i32, %arg1: i32) -> (i32, i32) {
    %c0_i32 = arith.constant 0 : i32
    %c0_i32_0 = arith.constant 0 : i32
    return %c0_i32, %arg1 : i32, i32
  }
  func.func @transform_4(%arg0: i32, %arg1: i32) -> (i32, i32) {
    %c0_i32 = arith.constant 0 : i32
    return %arg0, %arg1 : i32, i32
  }
}

module attributes {stable_mosaic.version = 11 : i64} {
  func.func @_matmul_kernel_single(%arg0: i32, %arg1: i32, %arg2: memref<512x512xbf16, #tpu.memory_space<vmem>>, %arg3: memref<512x128xbf16, #tpu.memory_space<vmem>>, %arg4: memref<1x128xf32, #tpu.memory_space<vmem>>, %arg5: memref<1x128xf32, #tpu.memory_space<vmem>>, %arg6: memref<512x128xf32, #tpu.memory_space<vmem>>) attributes {dimension_semantics = [#tpu.dimension_semantics<parallel>, #tpu.dimension_semantics<parallel>], iteration_bounds = array<i64: 1, 1>, scalar_prefetch = 0 : i64, scratch_operands = 0 : i64, tpu.core_type = #tpu.core_type<tc>, window_params = [{transform_indices = @transform_0, window_bounds = array<i64: 512, 512>}, {transform_indices = @transform_1, window_bounds = array<i64: 512, 128>}, {transform_indices = @transform_2, window_bounds = array<i64: 1, 128>}, {transform_indices = @transform_3, window_bounds = array<i64: 1, 128>}, {transform_indices = @transform_4, window_bounds = array<i64: 512, 128>}]} {
    %c0 = arith.constant 0 : index
    %c0_0 = arith.constant 0 : index
    %0 = vector.load %arg2[%c0, %c0_0] : memref<512x512xbf16, #tpu.memory_space<vmem>>, vector<512x512xbf16>
    %c0_1 = arith.constant 0 : index
    %c0_2 = arith.constant 0 : index
    %1 = vector.load %arg3[%c0_1, %c0_2] : memref<512x128xbf16, #tpu.memory_space<vmem>>, vector<512x128xbf16>
    %cst = arith.constant dense<0.000000e+00> : vector<512x128xf32>
    %2 = tpu.matmul %0, %1, %cst {dimension_numbers = #tpu.dot_dimension_numbers<[1], [0], [0], [1], [0, 0, 1, 1], [], []>} : vector<512x512xbf16>, vector<512x128xbf16>, vector<512x128xf32> -> vector<512x128xf32>
    %c0_3 = arith.constant 0 : index
    %c0_4 = arith.constant 0 : index
    %3 = vector.load %arg4[%c0_3, %c0_4] : memref<1x128xf32, #tpu.memory_space<vmem>>, vector<1x128xf32>
    %4 = vector.broadcast %3 : vector<1x128xf32> to vector<512x128xf32>
    %5 = arith.mulf %2, %4 : vector<512x128xf32>
    %c0_5 = arith.constant 0 : index
    %c0_6 = arith.constant 0 : index
    %6 = vector.load %arg5[%c0_5, %c0_6] : memref<1x128xf32, #tpu.memory_space<vmem>>, vector<1x128xf32>
    %7 = vector.broadcast %6 : vector<1x128xf32> to vector<512x128xf32>
    %8 = arith.addf %5, %7 : vector<512x128xf32>
    %9 = math.tanh %8 : vector<512x128xf32>
    %c0_7 = arith.constant 0 : index
    %c0_8 = arith.constant 0 : index
    %10 = vector.load %arg6[%c0_7, %c0_8] : memref<512x128xf32, #tpu.memory_space<vmem>>, vector<512x128xf32>
    tpu.vector_store %arg6[%c0_7, %c0_8], %9 {strides = array<i32>} : memref<512x128xf32, #tpu.memory_space<vmem>>, vector<512x128xf32>,
    return
  }
  func.func @transform_0(%arg0: i32, %arg1: i32) -> (i32, i32) {
    %c0_i32 = arith.constant 0 : i32
    %c0_i32_0 = arith.constant 0 : i32
    return %arg0, %c0_i32 : i32, i32
  }
  func.func @transform_1(%arg0: i32, %arg1: i32) -> (i32, i32) {
    %c0_i32 = arith.constant 0 : i32
    %c0_i32_0 = arith.constant 0 : i32
    return %c0_i32, %arg1 : i32, i32
  }
  func.func @transform_2(%arg0: i32, %arg1: i32) -> (i32, i32) {
    %c0_i32 = arith.constant 0 : i32
    %c0_i32_0 = arith.constant 0 : i32
    return %c0_i32, %arg1 : i32, i32
  }
  func.func @transform_3(%arg0: i32, %arg1: i32) -> (i32, i32) {
    %c0_i32 = arith.constant 0 : i32
    %c0_i32_0 = arith.constant 0 : i32
    return %c0_i32, %arg1 : i32, i32
  }
  func.func @transform_4(%arg0: i32, %arg1: i32) -> (i32, i32) {
    %c0_i32 = arith.constant 0 : i32
    return %arg0, %arg1 : i32, i32
  }
}

</mosaic_0001>

<llo_original>
// kernel: generator_forward.25
$region0: #{generator_forward.25}
  #allocation0 [shape = 'u32[]', space=smem, size = 0x4, offset = 0x4, fixed_abs, tag = 'smem constant byte address 0x4 - core index']
  #allocation1 [shape = 'u32[144,128]{1,0:T(1,128)}', space=vmem, size = 0x12000, scoped, tag = 'internal scratch']
  %s0 = inlined_call_operand.vmem [shape: bf16[512,256], index: 0, kind: input, shape index: {}]
  %s1 = inlined_call_operand.vmem [shape: bf16[256,128], index: 1, kind: input, shape index: {}]
  %s2 = inlined_call_operand.vmem [shape: f32[1,128], index: 2, kind: input, shape index: {}]
  %s3 = inlined_call_operand.vmem [shape: f32[1,128], index: 3, kind: input, shape index: {}]
  %s4 = inlined_call_operand.vmem [shape: f32[512,128], index: 4, kind: output, shape index: {}]
  %s5 = sld [smem:[#allocation0]]
  $region26: #{generator_forward.25} parent=0
    _
  %s7 = ssub.s32 1, %s5
  %s8 = scalar_select 0, %s7, %s5
  // Predicated region
  $region2: #{generator_forward.25} parent=0 // pred_check
    _
  $region3: #{generator_forward.25} parent=0 // pred_check_branch
    %10 = sbr.rel (0) target = $region5
  $region4: #{generator_forward.25} parent=0 // pred_region
    _
  $region5: #{generator_forward.25} parent=0 // pred_fallthru
    _
  // Predicated region
  $region6: #{generator_forward.25} parent=0 // pred_check
    _
  $region7: #{generator_forward.25} parent=0 // pred_check_branch
    %12 = sbr.rel (0) target = $region9
  $region8: #{generator_forward.25} parent=0 // pred_region
    _
  $region9: #{generator_forward.25} parent=0 // pred_fallthru
    _
  // Predicated region
  $region10: #{generator_forward.25} parent=0 // pred_check
    _
  $region11: #{generator_forward.25} parent=0 // pred_check_branch
    %14 = sbr.rel (0) target = $region13
  $region12: #{generator_forward.25} parent=0 // pred_region
    _
  $region13: #{generator_forward.25} parent=0 // pred_fallthru
    _
  // Predicated region
  $region14: #{generator_forward.25} parent=0 // pred_check
    _
  $region15: #{generator_forward.25} parent=0 // pred_check_branch
    %16 = sbr.rel (0) target = $region17
  $region16: #{generator_forward.25} parent=0 // pred_region
    _
  $region17: #{generator_forward.25} parent=0 // pred_fallthru
    _
  %v18 = vld [vmem:[%s0] sm:$0xff]
  %v19 = vld [vmem:[%s0 + $0x8] sm:$0xff]
  %v20 = vld [vmem:[%s0 + $0x10] sm:$0xff]
  %v21 = vld [vmem:[%s0 + $0x18] sm:$0xff]
  %v22 = vld [vmem:[%s0 + $0x20] sm:$0xff]
  %v23 = vld [vmem:[%s0 + $0x28] sm:$0xff]
  %v24 = vld [vmem:[%s0 + $0x30] sm:$0xff]
  %v25 = vld [vmem:[%s0 + $0x38] sm:$0xff]
  %v26 = vld [vmem:[%s0 + $0x40] sm:$0xff]
  %v27 = vld [vmem:[%s0 + $0x48] sm:$0xff]
  %v28 = vld [vmem:[%s0 + $0x50] sm:$0xff]
  %v29 = vld [vmem:[%s0 + $0x58] sm:$0xff]
  %v30 = vld [vmem:[%s0 + $0x60] sm:$0xff]
  %v31 = vld [vmem:[%s0 + $0x68] sm:$0xff]
  %v32 = vld [vmem:[%s0 + $0x70] sm:$0xff]
  %v33 = vld [vmem:[%s0 + $0x78] sm:$0xff]
  %v34 = vld [vmem:[%s0 + $0x80] sm:$0xff]
  %v35 = vld [vmem:[%s0 + $0x88] sm:$0xff]
  %v36 = vld [vmem:[%s0 + $0x90] sm:$0xff]
  %v37 = vld [vmem:[%s0 + $0x98] sm:$0xff]
  %v38 = vld [vmem:[%s0 + $0xa0] sm:$0xff]
  %v39 = vld [vmem:[%s0 + $0xa8] sm:$0xff]
  %v40 = vld [vmem:[%s0 + $0xb0] sm:$0xff]
  %v41 = vld [vmem:[%s0 + $0xb8] sm:$0xff]
  %v42 = vld [vmem:[%s0 + $0xc0] sm:$0xff]
  %v43 = vld [vmem:[%s0 + $0xc8] sm:$0xff]
  %v44 = vld [vmem:[%s0 + $0xd0] sm:$0xff]
  %v45 = vld [vmem:[%s0 + $0xd8] sm:$0xff]
  %v46 = vld [vmem:[%s0 + $0xe0] sm:$0xff]
  %v47 = vld [vmem:[%s0 + $0xe8] sm:$0xff]
  %v48 = vld [vmem:[%s0 + $0xf0] sm:$0xff]
  %v49 = vld [vmem:[%s0 + $0xf8] sm:$0xff]
  %v50 = vld [vmem:[%s0 + $0x100] sm:$0xff]
  %v51 = vld [vmem:[%s0 + $0x108] sm:$0xff]
  %v52 = vld [vmem:[%s0 + $0x110] sm:$0xff]
  %v53 = vld [vmem:[%s0 + $0x118] sm:$0xff]
  %v54 = vld [vmem:[%s0 + $0x120] sm:$0xff]
  %v55 = vld [vmem:[%s0 + $0x128] sm:$0xff]
  %v56 = vld [vmem:[%s0 + $0x130] sm:$0xff]
  %v57 = vld [vmem:[%s0 + $0x138] sm:$0xff]
  %v58 = vld [vmem:[%s0 + $0x140] sm:$0xff]
  %v59 = vld [vmem:[%s0 + $0x148] sm:$0xff]
  %v60 = vld [vmem:[%s0 + $0x150] sm:$0xff]
  %v61 = vld [vmem:[%s0 + $0x158] sm:$0xff]
  %v62 = vld [vmem:[%s0 + $0x160] sm:$0xff]
  %v63 = vld [vmem:[%s0 + $0x168] sm:$0xff]
  %v64 = vld [vmem:[%s0 + $0x170] sm:$0xff]
  %v65 = vld [vmem:[%s0 + $0x178] sm:$0xff]
  %v66 = vld [vmem:[%s0 + $0x180] sm:$0xff]
  %v67 = vld [vmem:[%s0 + $0x188] sm:$0xff]
  %v68 = vld [vmem:[%s0 + $0x190] sm:$0xff]
  %v69 = vld [vmem:[%s0 + $0x198] sm:$0xff]
  %v70 = vld [vmem:[%s0 + $0x1a0] sm:$0xff]
  %v71 = vld [vmem:[%s0 + $0x1a8] sm:$0xff]
  %v72 = vld [vmem:[%s0 + $0x1b0] sm:$0xff]
  %v73 = vld [vmem:[%s0 + $0x1b8] sm:$0xff]
  %v74 = vld [vmem:[%s0 + $0x1c0] sm:$0xff]
  %v75 = vld [vmem:[%s0 + $0x1c8] sm:$0xff]
  %v76 = vld [vmem:[%s0 + $0x1d0] sm:$0xff]
  %v77 = vld [vmem:[%s0 + $0x1d8] sm:$0xff]
  %v78 = vld [vmem:[%s0 + $0x1e0] sm:$0xff]
  %v79 = vld [vmem:[%s0 + $0x1e8] sm:$0xff]
  %v80 = vld [vmem:[%s0 + $0x1f0] sm:$0xff]
  %v81 = vld [vmem:[%s0 + $0x1f8] sm:$0xff]
  %v82 = vld [vmem:[%s1] sm:$0xf]
  %v83 = vld [vmem:[%s1 + $0x4] sm:$0xf]
  %v84 = vld [vmem:[%s1 + $0x8] sm:$0xf]
  %v85 = vld [vmem:[%s1 + $0xc] sm:$0xf]
  %v86 = vld [vmem:[%s1 + $0x10] sm:$0xf]
  %v87 = vld [vmem:[%s1 + $0x14] sm:$0xf]
  %v88 = vld [vmem:[%s1 + $0x18] sm:$0xf]
  %v89 = vld [vmem:[%s1 + $0x1c] sm:$0xf]
  %v90 = vld [vmem:[%s1 + $0x20] sm:$0xf]
  %v91 = vld [vmem:[%s1 + $0x24] sm:$0xf]
  %v92 = vld [vmem:[%s1 + $0x28] sm:$0xf]
  %v93 = vld [vmem:[%s1 + $0x2c] sm:$0xf]
  %v94 = vld [vmem:[%s1 + $0x30] sm:$0xf]
  %v95 = vld [vmem:[%s1 + $0x34] sm:$0xf]
  %v96 = vld [vmem:[%s1 + $0x38] sm:$0xf]
  %v97 = vld [vmem:[%s1 + $0x3c] sm:$0xf]
  %v98 = vld [vmem:[%s1 + $0x40] sm:$0xf]
  %v99 = vld [vmem:[%s1 + $0x44] sm:$0xf]
  %v100 = vld [vmem:[%s1 + $0x48] sm:$0xf]
  %v101 = vld [vmem:[%s1 + $0x4c] sm:$0xf]
  %v102 = vld [vmem:[%s1 + $0x50] sm:$0xf]
  %v103 = vld [vmem:[%s1 + $0x54] sm:$0xf]
  %v104 = vld [vmem:[%s1 + $0x58] sm:$0xf]
  %v105 = vld [vmem:[%s1 + $0x5c] sm:$0xf]
  %v106 = vld [vmem:[%s1 + $0x60] sm:$0xf]
  %v107 = vld [vmem:[%s1 + $0x64] sm:$0xf]
  %v108 = vld [vmem:[%s1 + $0x68] sm:$0xf]
  %v109 = vld [vmem:[%s1 + $0x6c] sm:$0xf]
  %v110 = vld [vmem:[%s1 + $0x70] sm:$0xf]
  %v111 = vld [vmem:[%s1 + $0x74] sm:$0xf]
  %v112 = vld [vmem:[%s1 + $0x78] sm:$0xf]
  %v113 = vld [vmem:[%s1 + $0x7c] sm:$0xf]
  %v178 = vunpack.c.l.b16 %v18
  %v179 = vunpack.c.h.b16 %v18
  %v180 = vunpack.c.l.b16 %v19
  %v181 = vunpack.c.h.b16 %v19
  %v182 = vunpack.c.l.b16 %v20
  %v183 = vunpack.c.h.b16 %v20
  %v184 = vunpack.c.l.b16 %v21
  %v185 = vunpack.c.h.b16 %v21
  %v186 = vunpack.c.l.b16 %v22
  %v187 = vunpack.c.h.b16 %v22
  %v188 = vunpack.c.l.b16 %v23
  %v189 = vunpack.c.h.b16 %v23
  %v190 = vunpack.c.l.b16 %v24
  %v191 = vunpack.c.h.b16 %v24
  %v192 = vunpack.c.l.b16 %v25
  %v193 = vunpack.c.h.b16 %v25
  %v194 = vunpack.c.l.b16 %v26
  %v195 = vunpack.c.h.b16 %v26
  %v196 = vunpack.c.l.b16 %v27
  %v197 = vunpack.c.h.b16 %v27
  %v198 = vunpack.c.l.b16 %v28
  %v199 = vunpack.c.h.b16 %v28
  %v200 = vunpack.c.l.b16 %v29
  %v201 = vunpack.c.h.b16 %v29
  %v202 = vunpack.c.l.b16 %v30
  %v203 = vunpack.c.h.b16 %v30
  %v204 = vunpack.c.l.b16 %v31
  %v205 = vunpack.c.h.b16 %v31
  %v206 = vunpack.c.l.b16 %v32
  %v207 = vunpack.c.h.b16 %v32
  %v208 = vunpack.c.l.b16 %v33
  %v209 = vunpack.c.h.b16 %v33
  %v210 = vunpack.c.l.b16 %v34
  %v211 = vunpack.c.h.b16 %v34
  %v212 = vunpack.c.l.b16 %v35
  %v213 = vunpack.c.h.b16 %v35
  %v214 = vunpack.c.l.b16 %v36
  %v215 = vunpack.c.h.b16 %v36
  %v216 = vunpack.c.l.b16 %v37
  %v217 = vunpack.c.h.b16 %v37
  %v218 = vunpack.c.l.b16 %v38
  %v219 = vunpack.c.h.b16 %v38
  %v220 = vunpack.c.l.b16 %v39
  %v221 = vunpack.c.h.b16 %v39
  %v222 = vunpack.c.l.b16 %v40
  %v223 = vunpack.c.h.b16 %v40
  %v224 = vunpack.c.l.b16 %v41
  %v225 = vunpack.c.h.b16 %v41
  %v226 = vunpack.c.l.b16 %v42
  %v227 = vunpack.c.h.b16 %v42
  %v228 = vunpack.c.l.b16 %v43
  %v229 = vunpack.c.h.b16 %v43
  %v230 = vunpack.c.l.b16 %v44
  %v231 = vunpack.c.h.b16 %v44
  %v232 = vunpack.c.l.b16 %v45
  %v233 = vunpack.c.h.b16 %v45
  %v234 = vunpack.c.l.b16 %v46
  %v235 = vunpack.c.h.b16 %v46
  %v236 = vunpack.c.l.b16 %v47
  %v237 = vunpack.c.h.b16 %v47
  %v238 = vunpack.c.l.b16 %v48
  %v239 = vunpack.c.h.b16 %v48
  %v240 = vunpack.c.l.b16 %v49
  %v241 = vunpack.c.h.b16 %v49
  %v242 = vunpack.c.l.b16 %v50
  %v243 = vunpack.c.h.b16 %v50
  %v244 = vunpack.c.l.b16 %v51
  %v245 = vunpack.c.h.b16 %v51
  %v246 = vunpack.c.l.b16 %v52
  %v247 = vunpack.c.h.b16 %v52
  %v248 = vunpack.c.l.b16 %v53
  %v249 = vunpack.c.h.b16 %v53
  %v250 = vunpack.c.l.b16 %v54
  %v251 = vunpack.c.h.b16 %v54
  %v252 = vunpack.c.l.b16 %v55
  %v253 = vunpack.c.h.b16 %v55
  %v254 = vunpack.c.l.b16 %v56
  %v255 = vunpack.c.h.b16 %v56
  %v256 = vunpack.c.l.b16 %v57
  %v257 = vunpack.c.h.b16 %v57
  %v258 = vunpack.c.l.b16 %v58
  %v259 = vunpack.c.h.b16 %v58
  %v260 = vunpack.c.l.b16 %v59
  %v261 = vunpack.c.h.b16 %v59
  %v262 = vunpack.c.l.b16 %v60
  %v263 = vunpack.c.h.b16 %v60
  %v264 = vunpack.c.l.b16 %v61
  %v265 = vunpack.c.h.b16 %v61
  %v266 = vunpack.c.l.b16 %v62
  %v267 = vunpack.c.h.b16 %v62
  %v268 = vunpack.c.l.b16 %v63
  %v269 = vunpack.c.h.b16 %v63
  %v270 = vunpack.c.l.b16 %v64
  %v271 = vunpack.c.h.b16 %v64
  %v272 = vunpack.c.l.b16 %v65
  %v273 = vunpack.c.h.b16 %v65
  %v274 = vunpack.c.l.b16 %v66
  %v275 = vunpack.c.h.b16 %v66
  %v276 = vunpack.c.l.b16 %v67
  %v277 = vunpack.c.h.b16 %v67
  %v278 = vunpack.c.l.b16 %v68
  %v279 = vunpack.c.h.b16 %v68
  %v280 = vunpack.c.l.b16 %v69
  %v281 = vunpack.c.h.b16 %v69
  %v282 = vunpack.c.l.b16 %v70
  %v283 = vunpack.c.h.b16 %v70
  %v284 = vunpack.c.l.b16 %v71
  %v285 = vunpack.c.h.b16 %v71
  %v286 = vunpack.c.l.b16 %v72
  %v287 = vunpack.c.h.b16 %v72
  %v288 = vunpack.c.l.b16 %v73
  %v289 = vunpack.c.h.b16 %v73
  %v290 = vunpack.c.l.b16 %v74
  %v291 = vunpack.c.h.b16 %v74
  %v292 = vunpack.c.l.b16 %v75
  %v293 = vunpack.c.h.b16 %v75
  %v294 = vunpack.c.l.b16 %v76
  %v295 = vunpack.c.h.b16 %v76
  %v296 = vunpack.c.l.b16 %v77
  %v297 = vunpack.c.h.b16 %v77
  %v298 = vunpack.c.l.b16 %v78
  %v299 = vunpack.c.h.b16 %v78
  %v300 = vunpack.c.l.b16 %v79
  %v301 = vunpack.c.h.b16 %v79
  %v302 = vunpack.c.l.b16 %v80
  %v303 = vunpack.c.h.b16 %v80
  %v304 = vunpack.c.l.b16 %v81
  %v305 = vunpack.c.h.b16 %v81
  %v306 = vpack.c.b16 %v180, %v178
  %v307 = vpack.c.b16 %v181, %v179
  %v308 = vpack.c.b16 %v184, %v182
  %v309 = vpack.c.b16 %v185, %v183
  %v310 = vpack.c.b16 %v188, %v186
  %v311 = vpack.c.b16 %v189, %v187
  %v312 = vpack.c.b16 %v192, %v190
  %v313 = vpack.c.b16 %v193, %v191
  %v314 = vpack.c.b16 %v196, %v194
  %v315 = vpack.c.b16 %v197, %v195
  %v316 = vpack.c.b16 %v200, %v198
  %v317 = vpack.c.b16 %v201, %v199
  %v318 = vpack.c.b16 %v204, %v202
  %v319 = vpack.c.b16 %v205, %v203
  %v320 = vpack.c.b16 %v208, %v206
  %v321 = vpack.c.b16 %v209, %v207
  %v322 = vpack.c.b16 %v212, %v210
  %v323 = vpack.c.b16 %v213, %v211
  %v324 = vpack.c.b16 %v216, %v214
  %v325 = vpack.c.b16 %v217, %v215
  %v326 = vpack.c.b16 %v220, %v218
  %v327 = vpack.c.b16 %v221, %v219
  %v328 = vpack.c.b16 %v224, %v222
  %v329 = vpack.c.b16 %v225, %v223
  %v330 = vpack.c.b16 %v228, %v226
  %v331 = vpack.c.b16 %v229, %v227
  %v332 = vpack.c.b16 %v232, %v230
  %v333 = vpack.c.b16 %v233, %v231
  %v334 = vpack.c.b16 %v236, %v234
  %v335 = vpack.c.b16 %v237, %v235
  %v336 = vpack.c.b16 %v240, %v238
  %v337 = vpack.c.b16 %v241, %v239
  %v338 = vpack.c.b16 %v244, %v242
  %v339 = vpack.c.b16 %v245, %v243
  %v340 = vpack.c.b16 %v248, %v246
  %v341 = vpack.c.b16 %v249, %v247
  %v342 = vpack.c.b16 %v252, %v250
  %v343 = vpack.c.b16 %v253, %v251
  %v344 = vpack.c.b16 %v256, %v254
  %v345 = vpack.c.b16 %v257, %v255
  %v346 = vpack.c.b16 %v260, %v258
  %v347 = vpack.c.b16 %v261, %v259
  %v348 = vpack.c.b16 %v264, %v262
  %v349 = vpack.c.b16 %v265, %v263
  %v350 = vpack.c.b16 %v268, %v266
  %v351 = vpack.c.b16 %v269, %v267
  %v352 = vpack.c.b16 %v272, %v270
  %v353 = vpack.c.b16 %v273, %v271
  %v354 = vpack.c.b16 %v276, %v274
  %v355 = vpack.c.b16 %v277, %v275
  %v356 = vpack.c.b16 %v280, %v278
  %v357 = vpack.c.b16 %v281, %v279
  %v358 = vpack.c.b16 %v284, %v282
  %v359 = vpack.c.b16 %v285, %v283
  %v360 = vpack.c.b16 %v288, %v286
  %v361 = vpack.c.b16 %v289, %v287
  %v362 = vpack.c.b16 %v292, %v290
  %v363 = vpack.c.b16 %v293, %v291
  %v364 = vpack.c.b16 %v296, %v294
  %v365 = vpack.c.b16 %v297, %v295
  %v366 = vpack.c.b16 %v300, %v298
  %v367 = vpack.c.b16 %v301, %v299
  %v368 = vpack.c.b16 %v304, %v302
  %v369 = vpack.c.b16 %v305, %v303
  %v466 = vunpack.c.l.b16 %v82
  %v467 = vunpack.c.l.b16 %v83
  %v468 = vunpack.c.l.b16 %v84
  %v469 = vunpack.c.l.b16 %v85
  %v470 = vunpack.c.l.b16 %v86
  %v471 = vunpack.c.l.b16 %v87
  %v472 = vunpack.c.l.b16 %v88
  %v473 = vunpack.c.l.b16 %v89
  %v474 = vunpack.c.l.b16 %v90
  %v475 = vunpack.c.l.b16 %v91
  %v476 = vunpack.c.l.b16 %v92
  %v477 = vunpack.c.l.b16 %v93
  %v478 = vunpack.c.l.b16 %v94
  %v479 = vunpack.c.l.b16 %v95
  %v480 = vunpack.c.l.b16 %v96
  %v481 = vunpack.c.l.b16 %v97
  %v482 = vunpack.c.l.b16 %v98
  %v483 = vunpack.c.l.b16 %v99
  %v484 = vunpack.c.l.b16 %v100
  %v485 = vunpack.c.l.b16 %v101
  %v486 = vunpack.c.l.b16 %v102
  %v487 = vunpack.c.l.b16 %v103
  %v488 = vunpack.c.l.b16 %v104
  %v489 = vunpack.c.l.b16 %v105
  %v490 = vunpack.c.l.b16 %v106
  %v491 = vunpack.c.l.b16 %v107
  %v492 = vunpack.c.l.b16 %v108
  %v493 = vunpack.c.l.b16 %v109
  %v494 = vunpack.c.l.b16 %v110
  %v495 = vunpack.c.l.b16 %v111
  %v496 = vunpack.c.l.b16 %v112
  %v497 = vunpack.c.l.b16 %v113
  %v498 = vpack.c.b16 %v467, %v466
  %v499 = vpack.c.b16 %v469, %v468
  %v500 = vpack.c.b16 %v471, %v470
  %v501 = vpack.c.b16 %v473, %v472
  %v502 = vpack.c.b16 %v475, %v474
  %v503 = vpack.c.b16 %v477, %v476
  %v504 = vpack.c.b16 %v479, %v478
  %v505 = vpack.c.b16 %v481, %v480
  %v506 = vpack.c.b16 %v483, %v482
  %v507 = vpack.c.b16 %v485, %v484
  %v508 = vpack.c.b16 %v487, %v486
  %v509 = vpack.c.b16 %v489, %v488
  %v510 = vpack.c.b16 %v491, %v490
  %v511 = vpack.c.b16 %v493, %v492
  %v512 = vpack.c.b16 %v495, %v494
  %v513 = vpack.c.b16 %v497, %v496
  %530 = vmatprep.subr.bf16.mxu0 0
  %531 = vmatpush1.bf16.msra.mxu0 %v498
  %532 = vmatprep.subr.bf16.mxu0 0
  %533 = vmatpush1.bf16.msra.mxu0 %v499
  %534 = vmatprep.subr.bf16.mxu0 0
  %535 = vmatpush1.bf16.msra.mxu0 %v500
  %536 = vmatprep.subr.bf16.mxu0 0
  %537 = vmatpush1.bf16.msra.mxu0 %v501
  %538 = vmatprep.subr.bf16.mxu0 0
  %539 = vmatpush1.bf16.msra.mxu0 %v502
  %540 = vmatprep.subr.bf16.mxu0 0
  %541 = vmatpush1.bf16.msra.mxu0 %v503
  %542 = vmatprep.subr.bf16.mxu0 0
  %543 = vmatpush1.bf16.msra.mxu0 %v504
  %544 = vmatprep.subr.bf16.mxu0 0
  %545 = vmatpush1.bf16.msra.mxu0 %v505
  %546 = vmatprep.subr.bf16.mxu0 0
  %547 = vmatpush1.bf16.msra.mxu0 %v506
  %548 = vmatprep.subr.bf16.mxu0 0
  %549 = vmatpush1.bf16.msra.mxu0 %v507
  %550 = vmatprep.subr.bf16.mxu0 0
  %551 = vmatpush1.bf16.msra.mxu0 %v508
  %552 = vmatprep.subr.bf16.mxu0 0
  %553 = vmatpush1.bf16.msra.mxu0 %v509
  %554 = vmatprep.subr.bf16.mxu0 0
  %555 = vmatpush1.bf16.msra.mxu0 %v510
  %556 = vmatprep.subr.bf16.mxu0 0
  %557 = vmatpush1.bf16.msra.mxu0 %v511
  %558 = vmatprep.subr.bf16.mxu0 0
  %559 = vmatpush1.bf16.msra.mxu0 %v512
  %560 = vmatprep.subr.bf16.mxu0 0
  %561 = vmatpush1.bf16.msra.mxu0 %v513
  %562 = vmatprep.mubr.bf16.mxu0 %v307
  %563 = vmatmul.mubr.bf16.gmra.mrb[0].mxu0 %v306
  %v564 = vpop.f32.mrb[0].mxu0
  %v565 = vadd.f32 0.0, %v564
  %v566 = vpop.f32.mrb[0].mxu0
  %v567 = vpop.f32.mrb[0].mxu0
  %v568 = vadd.f32 0.0, %v567
  %v569 = vpop.f32.mrb[0].mxu0
  %570 = vmatprep.mubr.bf16.mxu0 %v309
  %571 = vmatmul.mubr.bf16.gmra.mrb[0].mxu0 %v308
  %v572 = vpop.f32.mrb[0].mxu0
  %v573 = vadd.f32 0.0, %v572
  %v574 = vpop.f32.mrb[0].mxu0
  %v575 = vpop.f32.mrb[0].mxu0
  %v576 = vadd.f32 0.0, %v575
  %v577 = vpop.f32.mrb[0].mxu0
  %578 = vmatprep.mubr.bf16.mxu0 %v311
  %579 = vmatmul.mubr.bf16.gmra.mrb[0].mxu0 %v310
  %v580 = vpop.f32.mrb[0].mxu0
  %v581 = vadd.f32 0.0, %v580
  %v582 = vpop.f32.mrb[0].mxu0
  %v583 = vpop.f32.mrb[0].mxu0
  %v584 = vadd.f32 0.0, %v583
  %v585 = vpop.f32.mrb[0].mxu0
  %586 = vmatprep.mubr.bf16.mxu0 %v313
  %587 = vmatmul.mubr.bf16.gmra.mrb[0].mxu0 %v312
  %v588 = vpop.f32.mrb[0].mxu0
  %v589 = vadd.f32 0.0, %v588
  %v590 = vpop.f32.mrb[0].mxu0
  %v591 = vpop.f32.mrb[0].mxu0
  %v592 = vadd.f32 0.0, %v591
  %v593 = vpop.f32.mrb[0].mxu0
  %594 = vmatprep.mubr.bf16.mxu0 %v315
  %595 = vmatmul.mubr.bf16.gmra.mrb[0].mxu0 %v314
  %v596 = vpop.f32.mrb[0].mxu0
  %v597 = vadd.f32 0.0, %v596
  %v598 = vpop.f32.mrb[0].mxu0
  %v599 = vpop.f32.mrb[0].mxu0
  %v600 = vadd.f32 0.0, %v599
  %v601 = vpop.f32.mrb[0].mxu0
  %602 = vmatprep.mubr.bf16.mxu0 %v317
  %603 = vmatmul.mubr.bf16.gmra.mrb[0].mxu0 %v316
  %v604 = vpop.f32.mrb[0].mxu0
  %v605 = vadd.f32 0.0, %v604
  %v606 = vpop.f32.mrb[0].mxu0
  %v607 = vpop.f32.mrb[0].mxu0
  %v608 = vadd.f32 0.0, %v607
  %v609 = vpop.f32.mrb[0].mxu0
  %610 = vmatprep.mubr.bf16.mxu0 %v319
  %611 = vmatmul.mubr.bf16.gmra.mrb[0].mxu0 %v318
  %v612 = vpop.f32.mrb[0].mxu0
  %v613 = vadd.f32 0.0, %v612
  %v614 = vpop.f32.mrb[0].mxu0
  %v615 = vpop.f32.mrb[0].mxu0
  %v616 = vadd.f32 0.0, %v615
  %v617 = vpop.f32.mrb[0].mxu0
  %618 = vmatprep.mubr.bf16.mxu0 %v321
  %619 = vmatmul.mubr.bf16.gmra.mrb[0].mxu0 %v320
  %v620 = vpop.f32.mrb[0].mxu0
  %v621 = vadd.f32 0.0, %v620
  %v622 = vpop.f32.mrb[0].mxu0
  %v623 = vpop.f32.mrb[0].mxu0
  %v624 = vadd.f32 0.0, %v623
  %v625 = vpop.f32.mrb[0].mxu0
  %626 = vmatprep.mubr.bf16.mxu0 %v323
  %627 = vmatmul.mubr.bf16.gmra.mrb[0].mxu0 %v322
  %v628 = vpop.f32.mrb[0].mxu0
  %v629 = vadd.f32 0.0, %v628
  %v630 = vpop.f32.mrb[0].mxu0
  %v631 = vpop.f32.mrb[0].mxu0
  %v632 = vadd.f32 0.0, %v631
  %v633 = vpop.f32.mrb[0].mxu0
  %634 = vmatprep.mubr.bf16.mxu0 %v325
  %635 = vmatmul.mubr.bf16.gmra.mrb[0].mxu0 %v324
  %v636 = vpop.f32.mrb[0].mxu0
  %v637 = vadd.f32 0.0, %v636
  %v638 = vpop.f32.mrb[0].mxu0
  %v639 = vpop.f32.mrb[0].mxu0
  %v640 = vadd.f32 0.0, %v639
  %v641 = vpop.f32.mrb[0].mxu0
  %642 = vmatprep.mubr.bf16.mxu0 %v327
  %643 = vmatmul.mubr.bf16.gmra.mrb[0].mxu0 %v326
  %v644 = vpop.f32.mrb[0].mxu0
  %v645 = vadd.f32 0.0, %v644
  %v646 = vpop.f32.mrb[0].mxu0
  %v647 = vpop.f32.mrb[0].mxu0
  %v648 = vadd.f32 0.0, %v647
  %v649 = vpop.f32.mrb[0].mxu0
  %650 = vmatprep.mubr.bf16.mxu0 %v329
  %651 = vmatmul.mubr.bf16.gmra.mrb[0].mxu0 %v328
  %v652 = vpop.f32.mrb[0].mxu0
  %v653 = vadd.f32 0.0, %v652
  %v654 = vpop.f32.mrb[0].mxu0
  %v655 = vpop.f32.mrb[0].mxu0
  %v656 = vadd.f32 0.0, %v655
  %v657 = vpop.f32.mrb[0].mxu0
  %658 = vmatprep.mubr.bf16.mxu0 %v331
  %659 = vmatmul.mubr.bf16.gmra.mrb[0].mxu0 %v330
  %v660 = vpop.f32.mrb[0].mxu0
  %v661 = vadd.f32 0.0, %v660
  %v662 = vpop.f32.mrb[0].mxu0
  %v663 = vpop.f32.mrb[0].mxu0
  %v664 = vadd.f32 0.0, %v663
  %v665 = vpop.f32.mrb[0].mxu0
  %666 = vmatprep.mubr.bf16.mxu0 %v333
  %667 = vmatmul.mubr.bf16.gmra.mrb[0].mxu0 %v332
  %v668 = vpop.f32.mrb[0].mxu0
  %v669 = vadd.f32 0.0, %v668
  %v670 = vpop.f32.mrb[0].mxu0
  %v671 = vpop.f32.mrb[0].mxu0
  %v672 = vadd.f32 0.0, %v671
  %v673 = vpop.f32.mrb[0].mxu0
  %674 = vmatprep.mubr.bf16.mxu0 %v335
  %675 = vmatmul.mubr.bf16.gmra.mrb[0].mxu0 %v334
  %v676 = vpop.f32.mrb[0].mxu0
  %v677 = vadd.f32 0.0, %v676
  %v678 = vpop.f32.mrb[0].mxu0
  %v679 = vpop.f32.mrb[0].mxu0
  %v680 = vadd.f32 0.0, %v679
  %v681 = vpop.f32.mrb[0].mxu0
  %682 = vmatprep.mubr.bf16.mxu0 %v337
  %683 = vmatmul.mubr.bf16.gmra.mrb[0].mxu0 %v336
  %v684 = vpop.f32.mrb[0].mxu0
  %v685 = vadd.f32 0.0, %v684
  %v686 = vpop.f32.mrb[0].mxu0
  %v687 = vpop.f32.mrb[0].mxu0
  %v688 = vadd.f32 0.0, %v687
  %v689 = vpop.f32.mrb[0].mxu0
  %690 = vmatprep.mubr.bf16.mxu0 %v339
  %691 = vmatmul.mubr.bf16.gmra.mrb[0].mxu0 %v338
  %v692 = vpop.f32.mrb[0].mxu0
  %v693 = vadd.f32 0.0, %v692
  %v694 = vpop.f32.mrb[0].mxu0
  %v695 = vpop.f32.mrb[0].mxu0
  %v696 = vadd.f32 0.0, %v695
  %v697 = vpop.f32.mrb[0].mxu0
  %698 = vmatprep.mubr.bf16.mxu0 %v341
  %699 = vmatmul.mubr.bf16.gmra.mrb[0].mxu0 %v340
  %v700 = vpop.f32.mrb[0].mxu0
  %v701 = vadd.f32 0.0, %v700
  %v702 = vpop.f32.mrb[0].mxu0
  %v703 = vpop.f32.mrb[0].mxu0
  %v704 = vadd.f32 0.0, %v703
  %v705 = vpop.f32.mrb[0].mxu0
  %706 = vmatprep.mubr.bf16.mxu0 %v343
  %707 = vmatmul.mubr.bf16.gmra.mrb[0].mxu0 %v342
  %v708 = vpop.f32.mrb[0].mxu0
  %v709 = vadd.f32 0.0, %v708
  %v710 = vpop.f32.mrb[0].mxu0
  %v711 = vpop.f32.mrb[0].mxu0
  %v712 = vadd.f32 0.0, %v711
  %v713 = vpop.f32.mrb[0].mxu0
  %714 = vmatprep.mubr.bf16.mxu0 %v345
  %715 = vmatmul.mubr.bf16.gmra.mrb[0].mxu0 %v344
  %v716 = vpop.f32.mrb[0].mxu0
  %v717 = vadd.f32 0.0, %v716
  %v718 = vpop.f32.mrb[0].mxu0
  %v719 = vpop.f32.mrb[0].mxu0
  %v720 = vadd.f32 0.0, %v719
  %v721 = vpop.f32.mrb[0].mxu0
  %722 = vmatprep.mubr.bf16.mxu0 %v347
  %723 = vmatmul.mubr.bf16.gmra.mrb[0].mxu0 %v346
  %v724 = vpop.f32.mrb[0].mxu0
  %v725 = vadd.f32 0.0, %v724
  %v726 = vpop.f32.mrb[0].mxu0
  %v727 = vpop.f32.mrb[0].mxu0
  %v728 = vadd.f32 0.0, %v727
  %v729 = vpop.f32.mrb[0].mxu0
  %730 = vmatprep.mubr.bf16.mxu0 %v349
  %731 = vmatmul.mubr.bf16.gmra.mrb[0].mxu0 %v348
  %v732 = vpop.f32.mrb[0].mxu0
  %v733 = vadd.f32 0.0, %v732
  %v734 = vpop.f32.mrb[0].mxu0
  %v735 = vpop.f32.mrb[0].mxu0
  %v736 = vadd.f32 0.0, %v735
  %v737 = vpop.f32.mrb[0].mxu0
  %738 = vmatprep.mubr.bf16.mxu0 %v351
  %739 = vmatmul.mubr.bf16.gmra.mrb[0].mxu0 %v350
  %v740 = vpop.f32.mrb[0].mxu0
  %v741 = vadd.f32 0.0, %v740
  %v742 = vpop.f32.mrb[0].mxu0
  %v743 = vpop.f32.mrb[0].mxu0
  %v744 = vadd.f32 0.0, %v743
  %v745 = vpop.f32.mrb[0].mxu0
  %746 = vmatprep.mubr.bf16.mxu0 %v353
  %747 = vmatmul.mubr.bf16.gmra.mrb[0].mxu0 %v352
  %v748 = vpop.f32.mrb[0].mxu0
  %v749 = vadd.f32 0.0, %v748
  %v750 = vpop.f32.mrb[0].mxu0
  %v751 = vpop.f32.mrb[0].mxu0
  %v752 = vadd.f32 0.0, %v751
  %v753 = vpop.f32.mrb[0].mxu0
  %754 = vmatprep.mubr.bf16.mxu0 %v355
  %755 = vmatmul.mubr.bf16.gmra.mrb[0].mxu0 %v354
  %v756 = vpop.f32.mrb[0].mxu0
  %v757 = vadd.f32 0.0, %v756
  %v758 = vpop.f32.mrb[0].mxu0
  %v759 = vpop.f32.mrb[0].mxu0
  %v760 = vadd.f32 0.0, %v759
  %v761 = vpop.f32.mrb[0].mxu0
  %762 = vmatprep.mubr.bf16.mxu0 %v357
  %763 = vmatmul.mubr.bf16.gmra.mrb[0].mxu0 %v356
  %v764 = vpop.f32.mrb[0].mxu0
  %v765 = vadd.f32 0.0, %v764
  %v766 = vpop.f32.mrb[0].mxu0
  %v767 = vpop.f32.mrb[0].mxu0
  %v768 = vadd.f32 0.0, %v767
  %v769 = vpop.f32.mrb[0].mxu0
  %770 = vmatprep.mubr.bf16.mxu0 %v359
  %771 = vmatmul.mubr.bf16.gmra.mrb[0].mxu0 %v358
  %v772 = vpop.f32.mrb[0].mxu0
  %v773 = vadd.f32 0.0, %v772
  %v774 = vpop.f32.mrb[0].mxu0
  %v775 = vpop.f32.mrb[0].mxu0
  %v776 = vadd.f32 0.0, %v775
  %v777 = vpop.f32.mrb[0].mxu0
  %778 = vmatprep.mubr.bf16.mxu0 %v361
  %779 = vmatmul.mubr.bf16.gmra.mrb[0].mxu0 %v360
  %v780 = vpop.f32.mrb[0].mxu0
  %v781 = vadd.f32 0.0, %v780
  %v782 = vpop.f32.mrb[0].mxu0
  %v783 = vpop.f32.mrb[0].mxu0
  %v784 = vadd.f32 0.0, %v783
  %v785 = vpop.f32.mrb[0].mxu0
  %786 = vmatprep.mubr.bf16.mxu0 %v363
  %787 = vmatmul.mubr.bf16.gmra.mrb[0].mxu0 %v362
  %v788 = vpop.f32.mrb[0].mxu0
  %v789 = vadd.f32 0.0, %v788
  %v790 = vpop.f32.mrb[0].mxu0
  %v791 = vpop.f32.mrb[0].mxu0
  %v792 = vadd.f32 0.0, %v791
  %v793 = vpop.f32.mrb[0].mxu0
  %794 = vmatprep.mubr.bf16.mxu0 %v365
  %795 = vmatmul.mubr.bf16.gmra.mrb[0].mxu0 %v364
  %v796 = vpop.f32.mrb[0].mxu0
  %v797 = vadd.f32 0.0, %v796
  %v798 = vpop.f32.mrb[0].mxu0
  %v799 = vpop.f32.mrb[0].mxu0
  %v800 = vadd.f32 0.0, %v799
  %v801 = vpop.f32.mrb[0].mxu0
  %802 = vmatprep.mubr.bf16.mxu0 %v367
  %803 = vmatmul.mubr.bf16.gmra.mrb[0].mxu0 %v366
  %v804 = vpop.f32.mrb[0].mxu0
  %v805 = vadd.f32 0.0, %v804
  %v806 = vpop.f32.mrb[0].mxu0
  %v807 = vpop.f32.mrb[0].mxu0
  %v808 = vadd.f32 0.0, %v807
  %v809 = vpop.f32.mrb[0].mxu0
  %810 = vmatprep.mubr.bf16.mxu0 %v369
  %811 = vmatmul.mubr.bf16.gmra.mrb[0].mxu0 %v368
  %v812 = vpop.f32.mrb[0].mxu0
  %v813 = vadd.f32 0.0, %v812
  %v814 = vpop.f32.mrb[0].mxu0
  %v815 = vpop.f32.mrb[0].mxu0
  %v816 = vadd.f32 0.0, %v815
  %v817 = vpop.f32.mrb[0].mxu0
  %818 = vdwg.mxu0
  %v819 = vld [vmem:[%s2] sm:$0x1]
  %v821 = vlaneseq
  %v822 = vshrl.u32 %v821, 7
  %v823 = vsub.s32 0, %v822
  %v824 = vrot.slane %v819, %v823
  %v826 = vmul.f32 %v565, %v824
  %v827 = vmul.f32 %v568, %v824
  %v828 = vmul.f32 %v573, %v824
  %v829 = vmul.f32 %v576, %v824
  %v830 = vmul.f32 %v581, %v824
  %v831 = vmul.f32 %v584, %v824
  %v832 = vmul.f32 %v589, %v824
  %v833 = vmul.f32 %v592, %v824
  %v834 = vmul.f32 %v597, %v824
  %v835 = vmul.f32 %v600, %v824
  %v836 = vmul.f32 %v605, %v824
  %v837 = vmul.f32 %v608, %v824
  %v838 = vmul.f32 %v613, %v824
  %v839 = vmul.f32 %v616, %v824
  %v840 = vmul.f32 %v621, %v824
  %v841 = vmul.f32 %v624, %v824
  %v842 = vmul.f32 %v629, %v824
  %v843 = vmul.f32 %v632, %v824
  %v844 = vmul.f32 %v637, %v824
  %v845 = vmul.f32 %v640, %v824
  %v846 = vmul.f32 %v645, %v824
  %v847 = vmul.f32 %v648, %v824
  %v848 = vmul.f32 %v653, %v824
  %v849 = vmul.f32 %v656, %v824
  %v850 = vmul.f32 %v661, %v824
  %v851 = vmul.f32 %v664, %v824
  %v852 = vmul.f32 %v669, %v824
  %v853 = vmul.f32 %v672, %v824
  %v854 = vmul.f32 %v677, %v824
  %v855 = vmul.f32 %v680, %v824
  %v856 = vmul.f32 %v685, %v824
  %v857 = vmul.f32 %v688, %v824
  %v858 = vmul.f32 %v693, %v824
  %v859 = vmul.f32 %v696, %v824
  %v860 = vmul.f32 %v701, %v824
  %v861 = vmul.f32 %v704, %v824
  %v862 = vmul.f32 %v709, %v824
  %v863 = vmul.f32 %v712, %v824
  %v864 = vmul.f32 %v717, %v824
  %v865 = vmul.f32 %v720, %v824
  %v866 = vmul.f32 %v725, %v824
  %v867 = vmul.f32 %v728, %v824
  %v868 = vmul.f32 %v733, %v824
  %v869 = vmul.f32 %v736, %v824
  %v870 = vmul.f32 %v741, %v824
  %v871 = vmul.f32 %v744, %v824
  %v872 = vmul.f32 %v749, %v824
  %v873 = vmul.f32 %v752, %v824
  %v874 = vmul.f32 %v757, %v824
  %v875 = vmul.f32 %v760, %v824
  %v876 = vmul.f32 %v765, %v824
  %v877 = vmul.f32 %v768, %v824
  %v878 = vmul.f32 %v773, %v824
  %v879 = vmul.f32 %v776, %v824
  %v880 = vmul.f32 %v781, %v824
  %v881 = vmul.f32 %v784, %v824
  %v882 = vmul.f32 %v789, %v824
  %v883 = vmul.f32 %v792, %v824
  %v884 = vmul.f32 %v797, %v824
  %v885 = vmul.f32 %v800, %v824
  %v886 = vmul.f32 %v805, %v824
  %v887 = vmul.f32 %v808, %v824
  %v888 = vmul.f32 %v813, %v824
  %v889 = vmul.f32 %v816, %v824
  %v890 = vld [vmem:[%s3] sm:$0x1]
  %v892 = vlaneseq
  %v893 = vshrl.u32 %v892, 7
  %v894 = vsub.s32 0, %v893
  %v895 = vrot.slane %v890, %v894
  %v897 = vadd.f32 %v826, %v895
  %v898 = vadd.f32 %v827, %v895
  %v899 = vadd.f32 %v828, %v895
  %v900 = vadd.f32 %v829, %v895
  %v901 = vadd.f32 %v830, %v895
  %v902 = vadd.f32 %v831, %v895
  %v903 = vadd.f32 %v832, %v895
  %v904 = vadd.f32 %v833, %v895
  %v905 = vadd.f32 %v834, %v895
  %v906 = vadd.f32 %v835, %v895
  %v907 = vadd.f32 %v836, %v895
  %v908 = vadd.f32 %v837, %v895
  %v909 = vadd.f32 %v838, %v895
  %v910 = vadd.f32 %v839, %v895
  %v911 = vadd.f32 %v840, %v895
  %v912 = vadd.f32 %v841, %v895
  %v913 = vadd.f32 %v842, %v895
  %v914 = vadd.f32 %v843, %v895
  %v915 = vadd.f32 %v844, %v895
  %v916 = vadd.f32 %v845, %v895
  %v917 = vadd.f32 %v846, %v895
  %v918 = vadd.f32 %v847, %v895
  %v919 = vadd.f32 %v848, %v895
  %v920 = vadd.f32 %v849, %v895
  %v921 = vadd.f32 %v850, %v895
  %v922 = vadd.f32 %v851, %v895
  %v923 = vadd.f32 %v852, %v895
  %v924 = vadd.f32 %v853, %v895
  %v925 = vadd.f32 %v854, %v895
  %v926 = vadd.f32 %v855, %v895
  %v927 = vadd.f32 %v856, %v895
  %v928 = vadd.f32 %v857, %v895
  %v929 = vadd.f32 %v858, %v895
  %v930 = vadd.f32 %v859, %v895
  %v931 = vadd.f32 %v860, %v895
  %v932 = vadd.f32 %v861, %v895
  %v933 = vadd.f32 %v862, %v895
  %v934 = vadd.f32 %v863, %v895
  %v935 = vadd.f32 %v864, %v895
  %v936 = vadd.f32 %v865, %v895
  %v937 = vadd.f32 %v866, %v895
  %v938 = vadd.f32 %v867, %v895
  %v939 = vadd.f32 %v868, %v895
  %v940 = vadd.f32 %v869, %v895
  %v941 = vadd.f32 %v870, %v895
  %v942 = vadd.f32 %v871, %v895
  %v943 = vadd.f32 %v872, %v895
  %v944 = vadd.f32 %v873, %v895
  %v945 = vadd.f32 %v874, %v895
  %v946 = vadd.f32 %v875, %v895
  %v947 = vadd.f32 %v876, %v895
  %v948 = vadd.f32 %v877, %v895
  %v949 = vadd.f32 %v878, %v895
  %v950 = vadd.f32 %v879, %v895
  %v951 = vadd.f32 %v880, %v895
  %v952 = vadd.f32 %v881, %v895
  %v953 = vadd.f32 %v882, %v895
  %v954 = vadd.f32 %v883, %v895
  %v955 = vadd.f32 %v884, %v895
  %v956 = vadd.f32 %v885, %v895
  %v957 = vadd.f32 %v886, %v895
  %v958 = vadd.f32 %v887, %v895
  %v959 = vadd.f32 %v888, %v895
  %v960 = vadd.f32 %v889, %v895
  %961 = vst [vmem:[%s4] sm:$0xff] %v897
  %962 = vst [vmem:[%s4 + $0x8] sm:$0xff] %v898
  %963 = vst [vmem:[%s4 + $0x10] sm:$0xff] %v899
  %964 = vst [vmem:[%s4 + $0x18] sm:$0xff] %v900
  %965 = vst [vmem:[%s4 + $0x20] sm:$0xff] %v901
  %966 = vst [vmem:[%s4 + $0x28] sm:$0xff] %v902
  %967 = vst [vmem:[%s4 + $0x30] sm:$0xff] %v903
  %968 = vst [vmem:[%s4 + $0x38] sm:$0xff] %v904
  %969 = vst [vmem:[%s4 + $0x40] sm:$0xff] %v905
  %970 = vst [vmem:[%s4 + $0x48] sm:$0xff] %v906
  %971 = vst [vmem:[%s4 + $0x50] sm:$0xff] %v907
  %972 = vst [vmem:[%s4 + $0x58] sm:$0xff] %v908
  %973 = vst [vmem:[%s4 + $0x60] sm:$0xff] %v909
  %974 = vst [vmem:[%s4 + $0x68] sm:$0xff] %v910
  %975 = vst [vmem:[%s4 + $0x70] sm:$0xff] %v911
  %976 = vst [vmem:[%s4 + $0x78] sm:$0xff] %v912
  %977 = vst [vmem:[%s4 + $0x80] sm:$0xff] %v913
  %978 = vst [vmem:[%s4 + $0x88] sm:$0xff] %v914
  %979 = vst [vmem:[%s4 + $0x90] sm:$0xff] %v915
  %980 = vst [vmem:[%s4 + $0x98] sm:$0xff] %v916
  %981 = vst [vmem:[%s4 + $0xa0] sm:$0xff] %v917
  %982 = vst [vmem:[%s4 + $0xa8] sm:$0xff] %v918
  %983 = vst [vmem:[%s4 + $0xb0] sm:$0xff] %v919
  %984 = vst [vmem:[%s4 + $0xb8] sm:$0xff] %v920
  %985 = vst [vmem:[%s4 + $0xc0] sm:$0xff] %v921
  %986 = vst [vmem:[%s4 + $0xc8] sm:$0xff] %v922
  %987 = vst [vmem:[%s4 + $0xd0] sm:$0xff] %v923
  %988 = vst [vmem:[%s4 + $0xd8] sm:$0xff] %v924
  %989 = vst [vmem:[%s4 + $0xe0] sm:$0xff] %v925
  %990 = vst [vmem:[%s4 + $0xe8] sm:$0xff] %v926
  %991 = vst [vmem:[%s4 + $0xf0] sm:$0xff] %v927
  %992 = vst [vmem:[%s4 + $0xf8] sm:$0xff] %v928
  %993 = vst [vmem:[%s4 + $0x100] sm:$0xff] %v929
  %994 = vst [vmem:[%s4 + $0x108] sm:$0xff] %v930
  %995 = vst [vmem:[%s4 + $0x110] sm:$0xff] %v931
  %996 = vst [vmem:[%s4 + $0x118] sm:$0xff] %v932
  %997 = vst [vmem:[%s4 + $0x120] sm:$0xff] %v933
  %998 = vst [vmem:[%s4 + $0x128] sm:$0xff] %v934
  %999 = vst [vmem:[%s4 + $0x130] sm:$0xff] %v935
  %1000 = vst [vmem:[%s4 + $0x138] sm:$0xff] %v936
  %1001 = vst [vmem:[%s4 + $0x140] sm:$0xff] %v937
  %1002 = vst [vmem:[%s4 + $0x148] sm:$0xff] %v938
  %1003 = vst [vmem:[%s4 + $0x150] sm:$0xff] %v939
  %1004 = vst [vmem:[%s4 + $0x158] sm:$0xff] %v940
  %1005 = vst [vmem:[%s4 + $0x160] sm:$0xff] %v941
  %1006 = vst [vmem:[%s4 + $0x168] sm:$0xff] %v942
  %1007 = vst [vmem:[%s4 + $0x170] sm:$0xff] %v943
  %1008 = vst [vmem:[%s4 + $0x178] sm:$0xff] %v944
  %1009 = vst [vmem:[%s4 + $0x180] sm:$0xff] %v945
  %1010 = vst [vmem:[%s4 + $0x188] sm:$0xff] %v946
  %1011 = vst [vmem:[%s4 + $0x190] sm:$0xff] %v947
  %1012 = vst [vmem:[%s4 + $0x198] sm:$0xff] %v948
  %1013 = vst [vmem:[%s4 + $0x1a0] sm:$0xff] %v949
  %1014 = vst [vmem:[%s4 + $0x1a8] sm:$0xff] %v950
  %1015 = vst [vmem:[%s4 + $0x1b0] sm:$0xff] %v951
  %1016 = vst [vmem:[%s4 + $0x1b8] sm:$0xff] %v952
  %1017 = vst [vmem:[%s4 + $0x1c0] sm:$0xff] %v953
  %1018 = vst [vmem:[%s4 + $0x1c8] sm:$0xff] %v954
  %1019 = vst [vmem:[%s4 + $0x1d0] sm:$0xff] %v955
  %1020 = vst [vmem:[%s4 + $0x1d8] sm:$0xff] %v956
  %1021 = vst [vmem:[%s4 + $0x1e0] sm:$0xff] %v957
  %1022 = vst [vmem:[%s4 + $0x1e8] sm:$0xff] %v958
  %1023 = vst [vmem:[%s4 + $0x1f0] sm:$0xff] %v959
  %1024 = vst [vmem:[%s4 + $0x1f8] sm:$0xff] %v960
  // Predicated region
  $region18: #{generator_forward.25} parent=0 // pred_check
    _
  $region19: #{generator_forward.25} parent=0 // pred_check_branch
    %1026 = sbr.rel (0) target = $region21
  $region20: #{generator_forward.25} parent=0 // pred_region
    _
  $region21: #{generator_forward.25} parent=0 // pred_fallthru
    _
  // Predicated region
  $region22: #{generator_forward.25} parent=0 // pred_check
    _
  $region23: #{generator_forward.25} parent=0 // pred_check_branch
    %1028 = sbr.rel (0) target = $region25
  $region24: #{generator_forward.25} parent=0 // pred_region
    _
  $region25: #{generator_forward.25} parent=0 // pred_fallthru
    _

// kernel: generator_forward.26
$region0: #{generator_forward.26}
  #allocation0 [shape = 'u32[]', space=smem, size = 0x4, offset = 0x4, fixed_abs, tag = 'smem constant byte address 0x4 - core index']
  #allocation1 [shape = 'u32[144,128]{1,0:T(1,128)}', space=vmem, size = 0x12000, scoped, tag = 'internal scratch']
  %s0 = inlined_call_operand.vmem [shape: f32[2,256,8], index: 0, kind: input, shape index: {}]
  %s1 = inlined_call_operand.vmem [shape: f32[2,1,8], index: 1, kind: input, shape index: {}]
  %s2 = inlined_call_operand.vmem [shape: f32[2,256,1], index: 2, kind: input, shape index: {}]
  %s3 = inlined_call_operand.vmem [shape: f32[1,1,8], index: 3, kind: input, shape index: {}]
  %s4 = inlined_call_operand.vmem [shape: f32[1,1,8], index: 4, kind: input, shape index: {}]
  %s5 = inlined_call_operand.vmem [shape: f32[2,256,8], index: 5, kind: output, shape index: {}]
  %s6 = sld [smem:[#allocation0]]
  $region53: #{generator_forward.26} parent=0
    _
  %s8 = ssub.s32 1, %s6
  %s9 = scalar_select 0, %s8, %s6
  loop: start=0, step=1, limit=4
  $region2: #{generator_forward.26} parent=0 // loop_pre_header
    _
  $region3: #{generator_forward.26} parent=0 // loop_header
    %s11 = sphi 0, %s15
    %p12 = scmp.ge.s32.totalorder %s11, 4
    %s18 = sphi 0, %s30
    %s19 = sphi 0, %s26
    %s20 = sphi 0, %s18
    %s21 = sphi 0, %s19
    %s22 = sphi 0, %s20
    %s23 = sphi 0, %s21
    %s35 = sphi 0, %s37
    %s38 = sphi 0, %s35
    %s39 = sphi 0, %s38
    %s55 = sphi 0, %s39
    %s61 = sphi 0, %s63
    %s64 = sphi 0, %s61
    %s65 = sphi 0, %s64
    %s81 = sphi 0, %s65
    %s89 = sphi 0, %s91
    %s92 = sphi 0, %s89
    %s93 = sphi 0, %s92
    %s109 = sphi 0, %s93
    %s113 = sphi 0, %s113
    %s115 = sphi 0, %s113
    %s116 = sphi 0, %s115
    %s130 = sphi 0, %s116
    %s134 = sphi 0, %s134
    %s136 = sphi 0, %s134
    %s137 = sphi 0, %s136
    %s151 = sphi 0, %s137
    %s159 = sphi 0, %s161
    %s162 = sphi 0, %s159
    %s163 = sphi 0, %s162
    %s179 = sphi 0, %s163
  $region4: #{generator_forward.26} parent=0 // loop_header_branch
    %14 = sbr.rel (%p12) target = $region8
  $region5: #{generator_forward.26} parent=0 // loop_body
    %s16 = ssub.s32 %s11, 1
    %s17 = ssub.s32 %s11, 2
    %s24 = sadd.s32 1, %s19
    %p25 = scmp.ge.s32.totalorder %s24, 1
    %s26 = scalar_select %p25, 0, %s24
    %s27 = sadd.s32 1, %s18
    %s28 = scalar_select %p25, %s27, %s18
    %p29 = scmp.ge.s32.totalorder %s28, 2
    %s30 = scalar_select %p29, 0, %s28
    %s31 = ssub.s32 %s18, %s30
    %s32 = ssub.s32 %s19, %s26
    %s33 = sor.u32 %s31, %s32
    %p34 = scmp.eq.s32.totalorder %s33, 0
    %s36 = sadd.s32 %s35, 1
    %s37 = scalar_select %p34, %s35, %s36
    %p40 = pneg %p34
    %p41 = scmp.eq.s32.totalorder %s11, 1
    %p42 = por %p40, %p41
    %p43 = scmp.ne.s32.totalorder %s35, %s38
    %p44 = scmp.eq.s32.totalorder %s11, 0
    %p45 = por %p43, %p44
    %p46 = scmp.ne.s32.totalorder %s35, %s38
    %p47 = scmp.eq.s32.totalorder %s16, 1
    %p48 = por %p46, %p47
    %p49 = scmp.ne.s32.totalorder %s38, %s39
    %p50 = scmp.eq.s32.totalorder %s16, 0
    %p51 = por %p49, %p50
    %p52 = scmp.ne.s32.totalorder %s38, %s39
    %p53 = scmp.eq.s32.totalorder %s17, 1
    %p54 = por %p52, %p53
    %p56 = scmp.ne.s32.totalorder %s39, %s55
    %p57 = scmp.eq.s32.totalorder %s17, 0
    %p58 = por %p56, %p57
    %s59 = ssub.s32 %s18, %s30
    %p60 = scmp.eq.s32.totalorder %s59, 0
    %s62 = sadd.s32 %s61, 1
    %s63 = scalar_select %p60, %s61, %s62
    %p66 = pneg %p60
    %p67 = scmp.eq.s32.totalorder %s11, 1
    %p68 = por %p66, %p67
    %p69 = scmp.ne.s32.totalorder %s61, %s64
    %p70 = scmp.eq.s32.totalorder %s11, 0
    %p71 = por %p69, %p70
    %p72 = scmp.ne.s32.totalorder %s61, %s64
    %p73 = scmp.eq.s32.totalorder %s16, 1
    %p74 = por %p72, %p73
    %p75 = scmp.ne.s32.totalorder %s64, %s65
    %p76 = scmp.eq.s32.totalorder %s16, 0
    %p77 = por %p75, %p76
    %p78 = scmp.ne.s32.totalorder %s64, %s65
    %p79 = scmp.eq.s32.totalorder %s17, 1
    %p80 = por %p78, %p79
    %p82 = scmp.ne.s32.totalorder %s65, %s81
    %p83 = scmp.eq.s32.totalorder %s17, 0
    %p84 = por %p82, %p83
    %s85 = ssub.s32 %s18, %s30
    %s86 = ssub.s32 %s19, %s26
    %s87 = sor.u32 %s85, %s86
    %p88 = scmp.eq.s32.totalorder %s87, 0
    %s90 = sadd.s32 %s89, 1
    %s91 = scalar_select %p88, %s89, %s90
    %p94 = pneg %p88
    %p95 = scmp.eq.s32.totalorder %s11, 1
    %p96 = por %p94, %p95
    %p97 = scmp.ne.s32.totalorder %s89, %s92
    %p98 = scmp.eq.s32.totalorder %s11, 0
    %p99 = por %p97, %p98
    %p100 = scmp.ne.s32.totalorder %s89, %s92
    %p101 = scmp.eq.s32.totalorder %s16, 1
    %p102 = por %p100, %p101
    %p103 = scmp.ne.s32.totalorder %s92, %s93
    %p104 = scmp.eq.s32.totalorder %s16, 0
    %p105 = por %p103, %p104
    %p106 = scmp.ne.s32.totalorder %s92, %s93
    %p107 = scmp.eq.s32.totalorder %s17, 1
    %p108 = por %p106, %p107
    %p110 = scmp.ne.s32.totalorder %s93, %s109
    %p111 = scmp.eq.s32.totalorder %s17, 0
    %p112 = por %p110, %p111
    %s114 = sadd.s32 %s113, 1
    %p117 = scmp.eq.s32.totalorder %s11, 1
    %p118 = scmp.ne.s32.totalorder %s113, %s115
    %p119 = scmp.eq.s32.totalorder %s11, 0
    %p120 = por %p118, %p119
    %p121 = scmp.ne.s32.totalorder %s113, %s115
    %p122 = scmp.eq.s32.totalorder %s16, 1
    %p123 = por %p121, %p122
    %p124 = scmp.ne.s32.totalorder %s115, %s116
    %p125 = scmp.eq.s32.totalorder %s16, 0
    %p126 = por %p124, %p125
    %p127 = scmp.ne.s32.totalorder %s115, %s116
    %p128 = scmp.eq.s32.totalorder %s17, 1
    %p129 = por %p127, %p128
    %p131 = scmp.ne.s32.totalorder %s116, %s130
    %p132 = scmp.eq.s32.totalorder %s17, 0
    %p133 = por %p131, %p132
    %s135 = sadd.s32 %s134, 1
    %p138 = scmp.eq.s32.totalorder %s11, 1
    %p139 = scmp.ne.s32.totalorder %s134, %s136
    %p140 = scmp.eq.s32.totalorder %s11, 0
    %p141 = por %p139, %p140
    %p142 = scmp.ne.s32.totalorder %s134, %s136
    %p143 = scmp.eq.s32.totalorder %s16, 1
    %p144 = por %p142, %p143
    %p145 = scmp.ne.s32.totalorder %s136, %s137
    %p146 = scmp.eq.s32.totalorder %s16, 0
    %p147 = por %p145, %p146
    %p148 = scmp.ne.s32.totalorder %s136, %s137
    %p149 = scmp.eq.s32.totalorder %s17, 1
    %p150 = por %p148, %p149
    %p152 = scmp.ne.s32.totalorder %s137, %s151
    %p153 = scmp.eq.s32.totalorder %s17, 0
    %p154 = por %p152, %p153
    %s155 = ssub.s32 %s18, %s30
    %s156 = ssub.s32 %s19, %s26
    %s157 = sor.u32 %s155, %s156
    %p158 = scmp.eq.s32.totalorder %s157, 0
    %s160 = sadd.s32 %s159, 1
    %s161 = scalar_select %p158, %s159, %s160
    %p164 = pneg %p158
    %p165 = scmp.eq.s32.totalorder %s11, 1
    %p166 = por %p164, %p165
    %p167 = scmp.ne.s32.totalorder %s159, %s162
    %p168 = scmp.eq.s32.totalorder %s11, 0
    %p169 = por %p167, %p168
    %p170 = scmp.ne.s32.totalorder %s159, %s162
    %p171 = scmp.eq.s32.totalorder %s16, 1
    %p172 = por %p170, %p171
    %p173 = scmp.ne.s32.totalorder %s162, %s163
    %p174 = scmp.eq.s32.totalorder %s16, 0
    %p175 = por %p173, %p174
    %p176 = scmp.ne.s32.totalorder %s162, %s163
    %p177 = scmp.eq.s32.totalorder %s17, 1
    %p178 = por %p176, %p177
    %p180 = scmp.ne.s32.totalorder %s163, %s179
    %p181 = scmp.eq.s32.totalorder %s17, 0
    %p182 = por %p180, %p181
    %p183 = scmp.le.s32.totalorder 1, %s11
    %p184 = scmp.lt.s32.totalorder %s11, 3
    %p185 = pnand %p183, %p184
    %p186 = pneg %p185
    // Predicated region
    $region9: #{generator_forward.26} parent=5 // pred_check
      _
    $region10: #{generator_forward.26} parent=5 // pred_check_branch
      %188 = sbr.rel (%p185) target = $region12
    $region11: #{generator_forward.26} parent=5 // pred_region
      %s189 = ssub.s32 %s11, 1
      // Predicated region
      $region13: #{generator_forward.26} parent=11 // pred_check
        %p190 = pneg %p126
      $region14: #{generator_forward.26} parent=11 // pred_check_branch
        %192 = sbr.rel (%p190) target = $region16
      $region15: #{generator_forward.26} parent=11 // pred_region
        _
      $region16: #{generator_forward.26} parent=11 // pred_fallthru
        _
      // Predicated region
      $region17: #{generator_forward.26} parent=11 // pred_check
        %p193 = pneg %p147
      $region18: #{generator_forward.26} parent=11 // pred_check_branch
        %195 = sbr.rel (%p193) target = $region20
      $region19: #{generator_forward.26} parent=11 // pred_region
        _
      $region20: #{generator_forward.26} parent=11 // pred_fallthru
        _
    $region12: #{generator_forward.26} parent=5 // pred_fallthru
      _
    %p196 = scmp.lt.s32.totalorder %s11, 2
    // Predicated region
    $region21: #{generator_forward.26} parent=5 // pred_check
      %p197 = pneg %p196
    $region22: #{generator_forward.26} parent=5 // pred_check_branch
      %199 = sbr.rel (%p197) target = $region24
    $region23: #{generator_forward.26} parent=5 // pred_region
      // Predicated region
      $region25: #{generator_forward.26} parent=23 // pred_check
        %p200 = pneg %p45
      $region26: #{generator_forward.26} parent=23 // pred_check_branch
        %202 = sbr.rel (%p200) target = $region28
      $region27: #{generator_forward.26} parent=23 // pred_region
        %s203 = smul.u32 32, %s19
        %p204 = scmp.lt.s32.totalorder %s18, 1
        %s205 = scalar_select %p204, %s18, 1
        %p206 = scmp.lt.s32.totalorder %s203, 31
        %s207 = scalar_select %p206, %s203, 31
        %s208 = smul.addr %s205, 32
        %s209 = sadd.s32 %s207, %s208
        %s210 = smul.addr %s209, 8
        %s211 = scalar_lea.vmem %s0, %s210
        %s212 = smul.u32 32, %s19
      $region28: #{generator_forward.26} parent=23 // pred_fallthru
        _
      // Predicated region
      $region29: #{generator_forward.26} parent=23 // pred_check
        %p213 = pneg %p71
      $region30: #{generator_forward.26} parent=23 // pred_check_branch
        %215 = sbr.rel (%p213) target = $region32
      $region31: #{generator_forward.26} parent=23 // pred_region
        %p216 = scmp.lt.s32.totalorder %s18, 1
        %s217 = scalar_select %p216, %s18, 1
        %s218 = scalar_lea.vmem %s1, %s217
      $region32: #{generator_forward.26} parent=23 // pred_fallthru
        _
      // Predicated region
      $region33: #{generator_forward.26} parent=23 // pred_check
        %p219 = pneg %p99
      $region34: #{generator_forward.26} parent=23 // pred_check_branch
        %221 = sbr.rel (%p219) target = $region36
      $region35: #{generator_forward.26} parent=23 // pred_region
        %s222 = smul.u32 32, %s19
        %p223 = scmp.lt.s32.totalorder %s18, 1
        %s224 = scalar_select %p223, %s18, 1
        %p225 = scmp.lt.s32.totalorder %s222, 31
        %s226 = scalar_select %p225, %s222, 31
        %s227 = smul.addr %s224, 32
        %s228 = sadd.s32 %s226, %s227
        %s229 = smul.addr %s228, 8
        %s230 = scalar_lea.vmem %s2, %s229
        %s231 = smul.u32 32, %s19
      $region36: #{generator_forward.26} parent=23 // pred_fallthru
        _
    $region24: #{generator_forward.26} parent=5 // pred_fallthru
      _
    %p232 = scmp.le.s32.totalorder 1, %s11
    %p233 = scmp.lt.s32.totalorder %s11, 3
    %p234 = pnand %p232, %p233
    %p235 = pneg %p234
    // Predicated region
    $region37: #{generator_forward.26} parent=5 // pred_check
      _
    $region38: #{generator_forward.26} parent=5 // pred_check_branch
      %237 = sbr.rel (%p234) target = $region40
    $region39: #{generator_forward.26} parent=5 // pred_region
      %s238 = ssub.s32 %s11, 1
      %s239 = smul.u32 32, %s21
      %p240 = scmp.lt.s32.totalorder %s20, 1
      %s241 = scalar_select %p240, %s20, 1
      %p242 = scmp.lt.s32.totalorder %s239, 31
      %s243 = scalar_select %p242, %s239, 31
      %s244 = smul.addr %s241, 32
      %s245 = sadd.s32 %s243, %s244
      %s246 = smul.addr %s245, 8
      %s247 = scalar_lea.vmem %s0, %s246
      %p248 = pneg %p51
      %p249 = pneg %p48
      %p250 = scmp.lt.s32.totalorder %s20, 1
      %s251 = scalar_select %p250, %s20, 1
      %s252 = scalar_lea.vmem %s1, %s251
      %p253 = pneg %p77
      %p254 = pneg %p74
      %s255 = smul.u32 32, %s21
      %p256 = scmp.lt.s32.totalorder %s20, 1
      %s257 = scalar_select %p256, %s20, 1
      %p258 = scmp.lt.s32.totalorder %s255, 31
      %s259 = scalar_select %p258, %s255, 31
      %s260 = smul.addr %s257, 32
      %s261 = sadd.s32 %s259, %s260
      %s262 = smul.addr %s261, 8
      %s263 = scalar_lea.vmem %s2, %s262
      %p264 = pneg %p105
      %p265 = pneg %p102
      %p266 = pneg %p126
      %p267 = pneg %p123
      %p268 = pneg %p147
      %p269 = pneg %p144
      %p270 = pneg %p175
      %p271 = pneg %p172
      %s272 = smul.u32 32, %s21
      %p273 = scmp.lt.s32.totalorder %s20, 1
      %s274 = scalar_select %p273, %s20, 1
      %p275 = scmp.lt.s32.totalorder %s272, 31
      %s276 = scalar_select %p275, %s272, 31
      %s277 = smul.addr %s274, 32
      %s278 = sadd.s32 %s276, %s277
      %s279 = smul.addr %s278, 8
      %s280 = scalar_lea.vmem %s5, %s279
      %s281 = smul.u32 32, %s21
      %p282 = scmp.lt.s32.totalorder %s20, 1
      %s283 = scalar_select %p282, %s20, 1
      %p284 = scmp.lt.s32.totalorder %s281, 31
      %s285 = scalar_select %p284, %s281, 31
      %s286 = smul.addr %s283, 32
      %s287 = sadd.s32 %s285, %s286
      %s288 = smul.addr %s287, 8
      %s289 = scalar_lea.vmem %s0, %s288
      %s290 = smul.u32 32, %s21
      %p291 = scmp.lt.s32.totalorder %s20, 1
      %s292 = scalar_select %p291, %s20, 1
      %s293 = scalar_lea.vmem %s1, %s292
      %s294 = smul.u32 32, %s21
      %p295 = scmp.lt.s32.totalorder %s20, 1
      %s296 = scalar_select %p295, %s20, 1
      %p297 = scmp.lt.s32.totalorder %s294, 31
      %s298 = scalar_select %p297, %s294, 31
      %s299 = smul.addr %s296, 32
      %s300 = sadd.s32 %s298, %s299
      %s301 = smul.addr %s300, 8
      %s302 = scalar_lea.vmem %s2, %s301
      %s303 = smul.u32 32, %s21
      %s304 = smul.u32 32, %s21
      %p305 = scmp.lt.s32.totalorder %s20, 1
      %s306 = scalar_select %p305, %s20, 1
      %p307 = scmp.lt.s32.totalorder %s304, 31
      %s308 = scalar_select %p307, %s304, 31
      %s309 = smul.addr %s306, 32
      %s310 = sadd.s32 %s308, %s309
      %s311 = smul.addr %s310, 8
      %s312 = scalar_lea.vmem %s5, %s311
      %s313 = smul.u32 32, %s21
      %v314 = vld [vmem:[%s289] sm:$0xff]
      %v315 = vld [vmem:[%s289 + $0x8] sm:$0xff]
      %v316 = vld [vmem:[%s289 + $0x10] sm:$0xff]
      %v317 = vld [vmem:[%s289 + $0x18] sm:$0xff]
      %v318 = vld [vmem:[%s289 + $0x20] sm:$0xff]
      %v319 = vld [vmem:[%s289 + $0x28] sm:$0xff]
      %v320 = vld [vmem:[%s289 + $0x30] sm:$0xff]
      %v321 = vld [vmem:[%s289 + $0x38] sm:$0xff]
      %v322 = vld [vmem:[%s289 + $0x40] sm:$0xff]
      %v323 = vld [vmem:[%s289 + $0x48] sm:$0xff]
      %v324 = vld [vmem:[%s289 + $0x50] sm:$0xff]
      %v325 = vld [vmem:[%s289 + $0x58] sm:$0xff]
      %v326 = vld [vmem:[%s289 + $0x60] sm:$0xff]
      %v327 = vld [vmem:[%s289 + $0x68] sm:$0xff]
      %v328 = vld [vmem:[%s289 + $0x70] sm:$0xff]
      %v329 = vld [vmem:[%s289 + $0x78] sm:$0xff]
      %v330 = vld [vmem:[%s289 + $0x80] sm:$0xff]
      %v331 = vld [vmem:[%s289 + $0x88] sm:$0xff]
      %v332 = vld [vmem:[%s289 + $0x90] sm:$0xff]
      %v333 = vld [vmem:[%s289 + $0x98] sm:$0xff]
      %v334 = vld [vmem:[%s289 + $0xa0] sm:$0xff]
      %v335 = vld [vmem:[%s289 + $0xa8] sm:$0xff]
      %v336 = vld [vmem:[%s289 + $0xb0] sm:$0xff]
      %v337 = vld [vmem:[%s289 + $0xb8] sm:$0xff]
      %v338 = vld [vmem:[%s289 + $0xc0] sm:$0xff]
      %v339 = vld [vmem:[%s289 + $0xc8] sm:$0xff]
      %v340 = vld [vmem:[%s289 + $0xd0] sm:$0xff]
      %v341 = vld [vmem:[%s289 + $0xd8] sm:$0xff]
      %v342 = vld [vmem:[%s289 + $0xe0] sm:$0xff]
      %v343 = vld [vmem:[%s289 + $0xe8] sm:$0xff]
      %v344 = vld [vmem:[%s289 + $0xf0] sm:$0xff]
      %v345 = vld [vmem:[%s289 + $0xf8] sm:$0xff]
      %v346 = vld [vmem:[%s293] sm:$0x1]
      %v348 = vlaneseq
      %v349 = vshrl.u32 %v348, 7
      %v350 = vsub.s32 0, %v349
      %v351 = vrot.slane %v346, %v350
      %v353 = vmul.f32 %v314, %v351
      %v354 = vmul.f32 %v315, %v351
      %v355 = vmul.f32 %v316, %v351
      %v356 = vmul.f32 %v317, %v351
      %v357 = vmul.f32 %v318, %v351
      %v358 = vmul.f32 %v319, %v351
      %v359 = vmul.f32 %v320, %v351
      %v360 = vmul.f32 %v321, %v351
      %v361 = vmul.f32 %v322, %v351
      %v362 = vmul.f32 %v323, %v351
      %v363 = vmul.f32 %v324, %v351
      %v364 = vmul.f32 %v325, %v351
      %v365 = vmul.f32 %v326, %v351
      %v366 = vmul.f32 %v327, %v351
      %v367 = vmul.f32 %v328, %v351
      %v368 = vmul.f32 %v329, %v351
      %v369 = vmul.f32 %v330, %v351
      %v370 = vmul.f32 %v331, %v351
      %v371 = vmul.f32 %v332, %v351
      %v372 = vmul.f32 %v333, %v351
      %v373 = vmul.f32 %v334, %v351
      %v374 = vmul.f32 %v335, %v351
      %v375 = vmul.f32 %v336, %v351
      %v376 = vmul.f32 %v337, %v351
      %v377 = vmul.f32 %v338, %v351
      %v378 = vmul.f32 %v339, %v351
      %v379 = vmul.f32 %v340, %v351
      %v380 = vmul.f32 %v341, %v351
      %v381 = vmul.f32 %v342, %v351
      %v382 = vmul.f32 %v343, %v351
      %v383 = vmul.f32 %v344, %v351
      %v384 = vmul.f32 %v345, %v351
      %v385 = vld [vmem:[%s302] sm:$0xff]
      %v386 = vld [vmem:[%s302 + $0x8] sm:$0xff]
      %v387 = vld [vmem:[%s302 + $0x10] sm:$0xff]
      %v388 = vld [vmem:[%s302 + $0x18] sm:$0xff]
      %v389 = vld [vmem:[%s302 + $0x20] sm:$0xff]
      %v390 = vld [vmem:[%s302 + $0x28] sm:$0xff]
      %v391 = vld [vmem:[%s302 + $0x30] sm:$0xff]
      %v392 = vld [vmem:[%s302 + $0x38] sm:$0xff]
      %v393 = vld [vmem:[%s302 + $0x40] sm:$0xff]
      %v394 = vld [vmem:[%s302 + $0x48] sm:$0xff]
      %v395 = vld [vmem:[%s302 + $0x50] sm:$0xff]
      %v396 = vld [vmem:[%s302 + $0x58] sm:$0xff]
      %v397 = vld [vmem:[%s302 + $0x60] sm:$0xff]
      %v398 = vld [vmem:[%s302 + $0x68] sm:$0xff]
      %v399 = vld [vmem:[%s302 + $0x70] sm:$0xff]
      %v400 = vld [vmem:[%s302 + $0x78] sm:$0xff]
      %v401 = vld [vmem:[%s302 + $0x80] sm:$0xff]
      %v402 = vld [vmem:[%s302 + $0x88] sm:$0xff]
      %v403 = vld [vmem:[%s302 + $0x90] sm:$0xff]
      %v404 = vld [vmem:[%s302 + $0x98] sm:$0xff]
      %v405 = vld [vmem:[%s302 + $0xa0] sm:$0xff]
      %v406 = vld [vmem:[%s302 + $0xa8] sm:$0xff]
      %v407 = vld [vmem:[%s302 + $0xb0] sm:$0xff]
      %v408 = vld [vmem:[%s302 + $0xb8] sm:$0xff]
      %v409 = vld [vmem:[%s302 + $0xc0] sm:$0xff]
      %v410 = vld [vmem:[%s302 + $0xc8] sm:$0xff]
      %v411 = vld [vmem:[%s302 + $0xd0] sm:$0xff]
      %v412 = vld [vmem:[%s302 + $0xd8] sm:$0xff]
      %v413 = vld [vmem:[%s302 + $0xe0] sm:$0xff]
      %v414 = vld [vmem:[%s302 + $0xe8] sm:$0xff]
      %v415 = vld [vmem:[%s302 + $0xf0] sm:$0xff]
      %v416 = vld [vmem:[%s302 + $0xf8] sm:$0xff]
      %418 = vset.pattern.permute.xlu0 0
      %419 = vperm.xlu0 %418, %v385
      %v420 = vpop.permute.xlu0 %419
      %423 = vset.pattern.permute.xlu0 0
      %424 = vperm.xlu0 %423, %v386
      %v425 = vpop.permute.xlu0 %424
      %428 = vset.pattern.permute.xlu0 0
      %429 = vperm.xlu0 %428, %v387
      %v430 = vpop.permute.xlu0 %429
      %433 = vset.pattern.permute.xlu0 0
      %434 = vperm.xlu0 %433, %v388
      %v435 = vpop.permute.xlu0 %434
      %438 = vset.pattern.permute.xlu0 0
      %439 = vperm.xlu0 %438, %v389
      %v440 = vpop.permute.xlu0 %439
      %443 = vset.pattern.permute.xlu0 0
      %444 = vperm.xlu0 %443, %v390
      %v445 = vpop.permute.xlu0 %444
      %448 = vset.pattern.permute.xlu0 0
      %449 = vperm.xlu0 %448, %v391
      %v450 = vpop.permute.xlu0 %449
      %453 = vset.pattern.permute.xlu0 0
      %454 = vperm.xlu0 %453, %v392
      %v455 = vpop.permute.xlu0 %454
      %458 = vset.pattern.permute.xlu0 0
      %459 = vperm.xlu0 %458, %v393
      %v460 = vpop.permute.xlu0 %459
      %463 = vset.pattern.permute.xlu0 0
      %464 = vperm.xlu0 %463, %v394
      %v465 = vpop.permute.xlu0 %464
      %468 = vset.pattern.permute.xlu0 0
      %469 = vperm.xlu0 %468, %v395
      %v470 = vpop.permute.xlu0 %469
      %473 = vset.pattern.permute.xlu0 0
      %474 = vperm.xlu0 %473, %v396
      %v475 = vpop.permute.xlu0 %474
      %478 = vset.pattern.permute.xlu0 0
      %479 = vperm.xlu0 %478, %v397
      %v480 = vpop.permute.xlu0 %479
      %483 = vset.pattern.permute.xlu0 0
      %484 = vperm.xlu0 %483, %v398
      %v485 = vpop.permute.xlu0 %484
      %488 = vset.pattern.permute.xlu0 0
      %489 = vperm.xlu0 %488, %v399
      %v490 = vpop.permute.xlu0 %489
      %493 = vset.pattern.permute.xlu0 0
      %494 = vperm.xlu0 %493, %v400
      %v495 = vpop.permute.xlu0 %494
      %498 = vset.pattern.permute.xlu0 0
      %499 = vperm.xlu0 %498, %v401
      %v500 = vpop.permute.xlu0 %499
      %503 = vset.pattern.permute.xlu0 0
      %504 = vperm.xlu0 %503, %v402
      %v505 = vpop.permute.xlu0 %504
      %508 = vset.pattern.permute.xlu0 0
      %509 = vperm.xlu0 %508, %v403
      %v510 = vpop.permute.xlu0 %509
      %513 = vset.pattern.permute.xlu0 0
      %514 = vperm.xlu0 %513, %v404
      %v515 = vpop.permute.xlu0 %514
      %518 = vset.pattern.permute.xlu0 0
      %519 = vperm.xlu0 %518, %v405
      %v520 = vpop.permute.xlu0 %519
      %523 = vset.pattern.permute.xlu0 0
      %524 = vperm.xlu0 %523, %v406
      %v525 = vpop.permute.xlu0 %524
      %528 = vset.pattern.permute.xlu0 0
      %529 = vperm.xlu0 %528, %v407
      %v530 = vpop.permute.xlu0 %529
      %533 = vset.pattern.permute.xlu0 0
      %534 = vperm.xlu0 %533, %v408
      %v535 = vpop.permute.xlu0 %534
      %538 = vset.pattern.permute.xlu0 0
      %539 = vperm.xlu0 %538, %v409
      %v540 = vpop.permute.xlu0 %539
      %543 = vset.pattern.permute.xlu0 0
      %544 = vperm.xlu0 %543, %v410
      %v545 = vpop.permute.xlu0 %544
      %548 = vset.pattern.permute.xlu0 0
      %549 = vperm.xlu0 %548, %v411
      %v550 = vpop.permute.xlu0 %549
      %553 = vset.pattern.permute.xlu0 0
      %554 = vperm.xlu0 %553, %v412
      %v555 = vpop.permute.xlu0 %554
      %558 = vset.pattern.permute.xlu0 0
      %559 = vperm.xlu0 %558, %v413
      %v560 = vpop.permute.xlu0 %559
      %563 = vset.pattern.permute.xlu0 0
      %564 = vperm.xlu0 %563, %v414
      %v565 = vpop.permute.xlu0 %564
      %568 = vset.pattern.permute.xlu0 0
      %569 = vperm.xlu0 %568, %v415
      %v570 = vpop.permute.xlu0 %569
      %573 = vset.pattern.permute.xlu0 0
      %574 = vperm.xlu0 %573, %v416
      %v575 = vpop.permute.xlu0 %574
      %v577 = vmul.f32 %v353, %v420
      %v578 = vmul.f32 %v354, %v425
      %v579 = vmul.f32 %v355, %v430
      %v580 = vmul.f32 %v356, %v435
      %v581 = vmul.f32 %v357, %v440
      %v582 = vmul.f32 %v358, %v445
      %v583 = vmul.f32 %v359, %v450
      %v584 = vmul.f32 %v360, %v455
      %v585 = vmul.f32 %v361, %v460
      %v586 = vmul.f32 %v362, %v465
      %v587 = vmul.f32 %v363, %v470
      %v588 = vmul.f32 %v364, %v475
      %v589 = vmul.f32 %v365, %v480
      %v590 = vmul.f32 %v366, %v485
      %v591 = vmul.f32 %v367, %v490
      %v592 = vmul.f32 %v368, %v495
      %v593 = vmul.f32 %v369, %v500
      %v594 = vmul.f32 %v370, %v505
      %v595 = vmul.f32 %v371, %v510
      %v596 = vmul.f32 %v372, %v515
      %v597 = vmul.f32 %v373, %v520
      %v598 = vmul.f32 %v374, %v525
      %v599 = vmul.f32 %v375, %v530
      %v600 = vmul.f32 %v376, %v535
      %v601 = vmul.f32 %v377, %v540
      %v602 = vmul.f32 %v378, %v545
      %v603 = vmul.f32 %v379, %v550
      %v604 = vmul.f32 %v380, %v555
      %v605 = vmul.f32 %v381, %v560
      %v606 = vmul.f32 %v382, %v565
      %v607 = vmul.f32 %v383, %v570
      %v608 = vmul.f32 %v384, %v575
      %v609 = vld [vmem:[%s3] sm:$0x1]
      %v611 = vlaneseq
      %v612 = vshrl.u32 %v611, 7
      %v613 = vsub.s32 0, %v612
      %v614 = vrot.slane %v609, %v613
      %v616 = vmul.f32 %v577, %v614
      %v617 = vmul.f32 %v578, %v614
      %v618 = vmul.f32 %v579, %v614
      %v619 = vmul.f32 %v580, %v614
      %v620 = vmul.f32 %v581, %v614
      %v621 = vmul.f32 %v582, %v614
      %v622 = vmul.f32 %v583, %v614
      %v623 = vmul.f32 %v584, %v614
      %v624 = vmul.f32 %v585, %v614
      %v625 = vmul.f32 %v586, %v614
      %v626 = vmul.f32 %v587, %v614
      %v627 = vmul.f32 %v588, %v614
      %v628 = vmul.f32 %v589, %v614
      %v629 = vmul.f32 %v590, %v614
      %v630 = vmul.f32 %v591, %v614
      %v631 = vmul.f32 %v592, %v614
      %v632 = vmul.f32 %v593, %v614
      %v633 = vmul.f32 %v594, %v614
      %v634 = vmul.f32 %v595, %v614
      %v635 = vmul.f32 %v596, %v614
      %v636 = vmul.f32 %v597, %v614
      %v637 = vmul.f32 %v598, %v614
      %v638 = vmul.f32 %v599, %v614
      %v639 = vmul.f32 %v600, %v614
      %v640 = vmul.f32 %v601, %v614
      %v641 = vmul.f32 %v602, %v614
      %v642 = vmul.f32 %v603, %v614
      %v643 = vmul.f32 %v604, %v614
      %v644 = vmul.f32 %v605, %v614
      %v645 = vmul.f32 %v606, %v614
      %v646 = vmul.f32 %v607, %v614
      %v647 = vmul.f32 %v608, %v614
      %v648 = vld [vmem:[%s4] sm:$0x1]
      %v650 = vlaneseq
      %v651 = vshrl.u32 %v650, 7
      %v652 = vsub.s32 0, %v651
      %v653 = vrot.slane %v648, %v652
      %v655 = vadd.f32 %v616, %v653
      %v656 = vadd.f32 %v617, %v653
      %v657 = vadd.f32 %v618, %v653
      %v658 = vadd.f32 %v619, %v653
      %v659 = vadd.f32 %v620, %v653
      %v660 = vadd.f32 %v621, %v653
      %v661 = vadd.f32 %v622, %v653
      %v662 = vadd.f32 %v623, %v653
      %v663 = vadd.f32 %v624, %v653
      %v664 = vadd.f32 %v625, %v653
      %v665 = vadd.f32 %v626, %v653
      %v666 = vadd.f32 %v627, %v653
      %v667 = vadd.f32 %v628, %v653
      %v668 = vadd.f32 %v629, %v653
      %v669 = vadd.f32 %v630, %v653
      %v670 = vadd.f32 %v631, %v653
      %v671 = vadd.f32 %v632, %v653
      %v672 = vadd.f32 %v633, %v653
      %v673 = vadd.f32 %v634, %v653
      %v674 = vadd.f32 %v635, %v653
      %v675 = vadd.f32 %v636, %v653
      %v676 = vadd.f32 %v637, %v653
      %v677 = vadd.f32 %v638, %v653
      %v678 = vadd.f32 %v639, %v653
      %v679 = vadd.f32 %v640, %v653
      %v680 = vadd.f32 %v641, %v653
      %v681 = vadd.f32 %v642, %v653
      %v682 = vadd.f32 %v643, %v653
      %v683 = vadd.f32 %v644, %v653
      %v684 = vadd.f32 %v645, %v653
      %v685 = vadd.f32 %v646, %v653
      %v686 = vadd.f32 %v647, %v653
      %v687 = vmax.f32 %v655, 0.0
      %v688 = vmax.f32 %v656, 0.0
      %v689 = vmax.f32 %v657, 0.0
      %v690 = vmax.f32 %v658, 0.0
      %v691 = vmax.f32 %v659, 0.0
      %v692 = vmax.f32 %v660, 0.0
      %v693 = vmax.f32 %v661, 0.0
      %v694 = vmax.f32 %v662, 0.0
      %v695 = vmax.f32 %v663, 0.0
      %v696 = vmax.f32 %v664, 0.0
      %v697 = vmax.f32 %v665, 0.0
      %v698 = vmax.f32 %v666, 0.0
      %v699 = vmax.f32 %v667, 0.0
      %v700 = vmax.f32 %v668, 0.0
      %v701 = vmax.f32 %v669, 0.0
      %v702 = vmax.f32 %v670, 0.0
      %v703 = vmax.f32 %v671, 0.0
      %v704 = vmax.f32 %v672, 0.0
      %v705 = vmax.f32 %v673, 0.0
      %v706 = vmax.f32 %v674, 0.0
      %v707 = vmax.f32 %v675, 0.0
      %v708 = vmax.f32 %v676, 0.0
      %v709 = vmax.f32 %v677, 0.0
      %v710 = vmax.f32 %v678, 0.0
      %v711 = vmax.f32 %v679, 0.0
      %v712 = vmax.f32 %v680, 0.0
      %v713 = vmax.f32 %v681, 0.0
      %v714 = vmax.f32 %v682, 0.0
      %v715 = vmax.f32 %v683, 0.0
      %v716 = vmax.f32 %v684, 0.0
      %v717 = vmax.f32 %v685, 0.0
      %v718 = vmax.f32 %v686, 0.0
      %vm719 = vcmask 64512
      %720 = vst.msk [vmem:[%s312] sm:$0xff] %vm719, %v687
      %721 = vst.msk [vmem:[%s312 + $0x8] sm:$0xff] %vm719, %v688
      %722 = vst.msk [vmem:[%s312 + $0x10] sm:$0xff] %vm719, %v689
      %723 = vst.msk [vmem:[%s312 + $0x18] sm:$0xff] %vm719, %v690
      %724 = vst.msk [vmem:[%s312 + $0x20] sm:$0xff] %vm719, %v691
      %725 = vst.msk [vmem:[%s312 + $0x28] sm:$0xff] %vm719, %v692
      %726 = vst.msk [vmem:[%s312 + $0x30] sm:$0xff] %vm719, %v693
      %727 = vst.msk [vmem:[%s312 + $0x38] sm:$0xff] %vm719, %v694
      %728 = vst.msk [vmem:[%s312 + $0x40] sm:$0xff] %vm719, %v695
      %729 = vst.msk [vmem:[%s312 + $0x48] sm:$0xff] %vm719, %v696
      %730 = vst.msk [vmem:[%s312 + $0x50] sm:$0xff] %vm719, %v697
      %731 = vst.msk [vmem:[%s312 + $0x58] sm:$0xff] %vm719, %v698
      %732 = vst.msk [vmem:[%s312 + $0x60] sm:$0xff] %vm719, %v699
      %733 = vst.msk [vmem:[%s312 + $0x68] sm:$0xff] %vm719, %v700
      %734 = vst.msk [vmem:[%s312 + $0x70] sm:$0xff] %vm719, %v701
      %735 = vst.msk [vmem:[%s312 + $0x78] sm:$0xff] %vm719, %v702
      %736 = vst.msk [vmem:[%s312 + $0x80] sm:$0xff] %vm719, %v703
      %737 = vst.msk [vmem:[%s312 + $0x88] sm:$0xff] %vm719, %v704
      %738 = vst.msk [vmem:[%s312 + $0x90] sm:$0xff] %vm719, %v705
      %739 = vst.msk [vmem:[%s312 + $0x98] sm:$0xff] %vm719, %v706
      %740 = vst.msk [vmem:[%s312 + $0xa0] sm:$0xff] %vm719, %v707
      %741 = vst.msk [vmem:[%s312 + $0xa8] sm:$0xff] %vm719, %v708
      %742 = vst.msk [vmem:[%s312 + $0xb0] sm:$0xff] %vm719, %v709
      %743 = vst.msk [vmem:[%s312 + $0xb8] sm:$0xff] %vm719, %v710
      %744 = vst.msk [vmem:[%s312 + $0xc0] sm:$0xff] %vm719, %v711
      %745 = vst.msk [vmem:[%s312 + $0xc8] sm:$0xff] %vm719, %v712
      %746 = vst.msk [vmem:[%s312 + $0xd0] sm:$0xff] %vm719, %v713
      %747 = vst.msk [vmem:[%s312 + $0xd8] sm:$0xff] %vm719, %v714
      %748 = vst.msk [vmem:[%s312 + $0xe0] sm:$0xff] %vm719, %v715
      %749 = vst.msk [vmem:[%s312 + $0xe8] sm:$0xff] %vm719, %v716
      %750 = vst.msk [vmem:[%s312 + $0xf0] sm:$0xff] %vm719, %v717
      %751 = vst.msk [vmem:[%s312 + $0xf8] sm:$0xff] %vm719, %v718
      %s752 = smul.u32 32, %s21
      %p753 = scmp.lt.s32.totalorder %s20, 1
      %s754 = scalar_select %p753, %s20, 1
      %p755 = scmp.lt.s32.totalorder %s752, 31
      %s756 = scalar_select %p755, %s752, 31
      %s757 = smul.addr %s754, 32
      %s758 = sadd.s32 %s756, %s757
      %s759 = smul.addr %s758, 8
      %s760 = scalar_lea.vmem %s5, %s759
      // Predicated region
      $region41: #{generator_forward.26} parent=39 // pred_check
        %p761 = pneg %p172
      $region42: #{generator_forward.26} parent=39 // pred_check_branch
        %763 = sbr.rel (%p761) target = $region44
      $region43: #{generator_forward.26} parent=39 // pred_region
        %s764 = smul.u32 32, %s21
      $region44: #{generator_forward.26} parent=39 // pred_fallthru
        _
    $region40: #{generator_forward.26} parent=5 // pred_fallthru
      _
    %p765 = scmp.le.s32.totalorder 2, %s11
    // Predicated region
    $region45: #{generator_forward.26} parent=5 // pred_check
      %p766 = pneg %p765
    $region46: #{generator_forward.26} parent=5 // pred_check_branch
      %768 = sbr.rel (%p766) target = $region48
    $region47: #{generator_forward.26} parent=5 // pred_region
      %s769 = ssub.s32 %s11, 2
      // Predicated region
      $region49: #{generator_forward.26} parent=47 // pred_check
        %p770 = pneg %p178
      $region50: #{generator_forward.26} parent=47 // pred_check_branch
        %772 = sbr.rel (%p770) target = $region52
      $region51: #{generator_forward.26} parent=47 // pred_region
        %s773 = smul.u32 32, %s23
        %p774 = scmp.lt.s32.totalorder %s22, 1
        %s775 = scalar_select %p774, %s22, 1
        %p776 = scmp.lt.s32.totalorder %s773, 31
        %s777 = scalar_select %p776, %s773, 31
        %s778 = smul.addr %s775, 32
        %s779 = sadd.s32 %s777, %s778
        %s780 = smul.addr %s779, 8
        %s781 = scalar_lea.vmem %s5, %s780
      $region52: #{generator_forward.26} parent=47 // pred_fallthru
        _
    $region48: #{generator_forward.26} parent=5 // pred_fallthru
      _
  $region6: #{generator_forward.26} parent=0 // loop_footer
    %s15 = sadd.s32 1, %s11
  $region7: #{generator_forward.26} parent=0 // loop_footer_branch
    %10 = sbr.rel target = $region3
  $region8: #{generator_forward.26} parent=0 // loop_exit
    _

// kernel: generator_forward.27
$region0: #{generator_forward.27}
  #allocation0 [shape = 'u32[]', space=smem, size = 0x4, offset = 0x4, fixed_abs, tag = 'smem constant byte address 0x4 - core index']
  #allocation1 [shape = 'u32[144,128]{1,0:T(1,128)}', space=vmem, size = 0x12000, scoped, tag = 'internal scratch']
  %s0 = inlined_call_operand.vmem [shape: bf16[128,128], index: 0, kind: input, shape index: {}]
  %s1 = inlined_call_operand.vmem [shape: bf16[128,128], index: 1, kind: input, shape index: {}]
  %s2 = inlined_call_operand.vmem [shape: f32[1,128], index: 2, kind: input, shape index: {}]
  %s3 = inlined_call_operand.vmem [shape: f32[1,128], index: 3, kind: input, shape index: {}]
  %s4 = inlined_call_operand.vmem [shape: f32[128,128], index: 4, kind: output, shape index: {}]
  %s5 = sld [smem:[#allocation0]]
  $region26: #{generator_forward.27} parent=0
    _
  %s7 = ssub.s32 1, %s5
  %s8 = scalar_select 0, %s7, %s5
  // Predicated region
  $region2: #{generator_forward.27} parent=0 // pred_check
    _
  $region3: #{generator_forward.27} parent=0 // pred_check_branch
    %10 = sbr.rel (0) target = $region5
  $region4: #{generator_forward.27} parent=0 // pred_region
    _
  $region5: #{generator_forward.27} parent=0 // pred_fallthru
    _
  // Predicated region
  $region6: #{generator_forward.27} parent=0 // pred_check
    _
  $region7: #{generator_forward.27} parent=0 // pred_check_branch
    %12 = sbr.rel (0) target = $region9
  $region8: #{generator_forward.27} parent=0 // pred_region
    _
  $region9: #{generator_forward.27} parent=0 // pred_fallthru
    _
  // Predicated region
  $region10: #{generator_forward.27} parent=0 // pred_check
    _
  $region11: #{generator_forward.27} parent=0 // pred_check_branch
    %14 = sbr.rel (0) target = $region13
  $region12: #{generator_forward.27} parent=0 // pred_region
    _
  $region13: #{generator_forward.27} parent=0 // pred_fallthru
    _
  // Predicated region
  $region14: #{generator_forward.27} parent=0 // pred_check
    _
  $region15: #{generator_forward.27} parent=0 // pred_check_branch
    %16 = sbr.rel (0) target = $region17
  $region16: #{generator_forward.27} parent=0 // pred_region
    _
  $region17: #{generator_forward.27} parent=0 // pred_fallthru
    _
  %v18 = vld [vmem:[%s0] sm:$0xf]
  %v19 = vld [vmem:[%s0 + $0x4] sm:$0xf]
  %v20 = vld [vmem:[%s0 + $0x8] sm:$0xf]
  %v21 = vld [vmem:[%s0 + $0xc] sm:$0xf]
  %v22 = vld [vmem:[%s0 + $0x10] sm:$0xf]
  %v23 = vld [vmem:[%s0 + $0x14] sm:$0xf]
  %v24 = vld [vmem:[%s0 + $0x18] sm:$0xf]
  %v25 = vld [vmem:[%s0 + $0x1c] sm:$0xf]
  %v26 = vld [vmem:[%s0 + $0x20] sm:$0xf]
  %v27 = vld [vmem:[%s0 + $0x24] sm:$0xf]
  %v28 = vld [vmem:[%s0 + $0x28] sm:$0xf]
  %v29 = vld [vmem:[%s0 + $0x2c] sm:$0xf]
  %v30 = vld [vmem:[%s0 + $0x30] sm:$0xf]
  %v31 = vld [vmem:[%s0 + $0x34] sm:$0xf]
  %v32 = vld [vmem:[%s0 + $0x38] sm:$0xf]
  %v33 = vld [vmem:[%s0 + $0x3c] sm:$0xf]
  %v34 = vld [vmem:[%s1] sm:$0xf]
  %v35 = vld [vmem:[%s1 + $0x4] sm:$0xf]
  %v36 = vld [vmem:[%s1 + $0x8] sm:$0xf]
  %v37 = vld [vmem:[%s1 + $0xc] sm:$0xf]
  %v38 = vld [vmem:[%s1 + $0x10] sm:$0xf]
  %v39 = vld [vmem:[%s1 + $0x14] sm:$0xf]
  %v40 = vld [vmem:[%s1 + $0x18] sm:$0xf]
  %v41 = vld [vmem:[%s1 + $0x1c] sm:$0xf]
  %v42 = vld [vmem:[%s1 + $0x20] sm:$0xf]
  %v43 = vld [vmem:[%s1 + $0x24] sm:$0xf]
  %v44 = vld [vmem:[%s1 + $0x28] sm:$0xf]
  %v45 = vld [vmem:[%s1 + $0x2c] sm:$0xf]
  %v46 = vld [vmem:[%s1 + $0x30] sm:$0xf]
  %v47 = vld [vmem:[%s1 + $0x34] sm:$0xf]
  %v48 = vld [vmem:[%s1 + $0x38] sm:$0xf]
  %v49 = vld [vmem:[%s1 + $0x3c] sm:$0xf]
  %v66 = vunpack.c.l.b16 %v18
  %v67 = vunpack.c.l.b16 %v19
  %v68 = vunpack.c.l.b16 %v20
  %v69 = vunpack.c.l.b16 %v21
  %v70 = vunpack.c.l.b16 %v22
  %v71 = vunpack.c.l.b16 %v23
  %v72 = vunpack.c.l.b16 %v24
  %v73 = vunpack.c.l.b16 %v25
  %v74 = vunpack.c.l.b16 %v26
  %v75 = vunpack.c.l.b16 %v27
  %v76 = vunpack.c.l.b16 %v28
  %v77 = vunpack.c.l.b16 %v29
  %v78 = vunpack.c.l.b16 %v30
  %v79 = vunpack.c.l.b16 %v31
  %v80 = vunpack.c.l.b16 %v32
  %v81 = vunpack.c.l.b16 %v33
  %v82 = vpack.c.b16 %v67, %v66
  %v83 = vpack.c.b16 %v69, %v68
  %v84 = vpack.c.b16 %v71, %v70
  %v85 = vpack.c.b16 %v73, %v72
  %v86 = vpack.c.b16 %v75, %v74
  %v87 = vpack.c.b16 %v77, %v76
  %v88 = vpack.c.b16 %v79, %v78
  %v89 = vpack.c.b16 %v81, %v80
  %v114 = vunpack.c.l.b16 %v34
  %v115 = vunpack.c.l.b16 %v35
  %v116 = vunpack.c.l.b16 %v36
  %v117 = vunpack.c.l.b16 %v37
  %v118 = vunpack.c.l.b16 %v38
  %v119 = vunpack.c.l.b16 %v39
  %v120 = vunpack.c.l.b16 %v40
  %v121 = vunpack.c.l.b16 %v41
  %v122 = vunpack.c.l.b16 %v42
  %v123 = vunpack.c.l.b16 %v43
  %v124 = vunpack.c.l.b16 %v44
  %v125 = vunpack.c.l.b16 %v45
  %v126 = vunpack.c.l.b16 %v46
  %v127 = vunpack.c.l.b16 %v47
  %v128 = vunpack.c.l.b16 %v48
  %v129 = vunpack.c.l.b16 %v49
  %v130 = vpack.c.b16 %v115, %v114
  %v131 = vpack.c.b16 %v117, %v116
  %v132 = vpack.c.b16 %v119, %v118
  %v133 = vpack.c.b16 %v121, %v120
  %v134 = vpack.c.b16 %v123, %v122
  %v135 = vpack.c.b16 %v125, %v124
  %v136 = vpack.c.b16 %v127, %v126
  %v137 = vpack.c.b16 %v129, %v128
  %146 = vmatprep.subr.bf16.mxu0 0
  %147 = vmatpush1.bf16.msra.mxu0 %v130
  %148 = vmatprep.subr.bf16.mxu0 0
  %149 = vmatpush1.bf16.msra.mxu0 %v131
  %150 = vmatprep.subr.bf16.mxu0 0
  %151 = vmatpush1.bf16.msra.mxu0 %v132
  %152 = vmatprep.subr.bf16.mxu0 0
  %153 = vmatpush1.bf16.msra.mxu0 %v133
  %154 = vmatprep.subr.bf16.mxu0 0
  %155 = vmatpush1.bf16.msra.mxu0 %v134
  %156 = vmatprep.subr.bf16.mxu0 0
  %157 = vmatpush1.bf16.msra.mxu0 %v135
  %158 = vmatprep.subr.bf16.mxu0 0
  %159 = vmatpush1.bf16.msra.mxu0 %v136
  %160 = vmatprep.subr.bf16.mxu0 0
  %161 = vmatpush1.bf16.msra.mxu0 %v137
  %162 = vmatprep.subr.bf16.mxu0 0
  %163 = vmatpush1.bf16.msra.mxu0 0
  %164 = vmatprep.subr.bf16.mxu0 0
  %165 = vmatpush1.bf16.msra.mxu0 0
  %166 = vmatprep.subr.bf16.mxu0 0
  %167 = vmatpush1.bf16.msra.mxu0 0
  %168 = vmatprep.subr.bf16.mxu0 0
  %169 = vmatpush1.bf16.msra.mxu0 0
  %170 = vmatprep.subr.bf16.mxu0 0
  %171 = vmatpush1.bf16.msra.mxu0 0
  %172 = vmatprep.subr.bf16.mxu0 0
  %173 = vmatpush1.bf16.msra.mxu0 0
  %174 = vmatprep.subr.bf16.mxu0 0
  %175 = vmatpush1.bf16.msra.mxu0 0
  %176 = vmatprep.subr.bf16.mxu0 0
  %177 = vmatpush1.bf16.msra.mxu0 0
  %178 = vmatprep.mubr.bf16.mxu0 0
  %179 = vmatmul.mubr.bf16.gmra.mrb[0].mxu0 %v82
  %v180 = vpop.f32.mrb[0].mxu0
  %v181 = vadd.f32 0.0, %v180
  %v182 = vpop.f32.mrb[0].mxu0
  %v183 = vpop.f32.mrb[0].mxu0
  %v184 = vadd.f32 0.0, %v183
  %v185 = vpop.f32.mrb[0].mxu0
  %186 = vmatprep.mubr.bf16.mxu0 0
  %187 = vmatmul.mubr.bf16.gmra.mrb[0].mxu0 %v83
  %v188 = vpop.f32.mrb[0].mxu0
  %v189 = vadd.f32 0.0, %v188
  %v190 = vpop.f32.mrb[0].mxu0
  %v191 = vpop.f32.mrb[0].mxu0
  %v192 = vadd.f32 0.0, %v191
  %v193 = vpop.f32.mrb[0].mxu0
  %194 = vmatprep.mubr.bf16.mxu0 0
  %195 = vmatmul.mubr.bf16.gmra.mrb[0].mxu0 %v84
  %v196 = vpop.f32.mrb[0].mxu0
  %v197 = vadd.f32 0.0, %v196
  %v198 = vpop.f32.mrb[0].mxu0
  %v199 = vpop.f32.mrb[0].mxu0
  %v200 = vadd.f32 0.0, %v199
  %v201 = vpop.f32.mrb[0].mxu0
  %202 = vmatprep.mubr.bf16.mxu0 0
  %203 = vmatmul.mubr.bf16.gmra.mrb[0].mxu0 %v85
  %v204 = vpop.f32.mrb[0].mxu0
  %v205 = vadd.f32 0.0, %v204
  %v206 = vpop.f32.mrb[0].mxu0
  %v207 = vpop.f32.mrb[0].mxu0
  %v208 = vadd.f32 0.0, %v207
  %v209 = vpop.f32.mrb[0].mxu0
  %210 = vmatprep.mubr.bf16.mxu0 0
  %211 = vmatmul.mubr.bf16.gmra.mrb[0].mxu0 %v86
  %v212 = vpop.f32.mrb[0].mxu0
  %v213 = vadd.f32 0.0, %v212
  %v214 = vpop.f32.mrb[0].mxu0
  %v215 = vpop.f32.mrb[0].mxu0
  %v216 = vadd.f32 0.0, %v215
  %v217 = vpop.f32.mrb[0].mxu0
  %218 = vmatprep.mubr.bf16.mxu0 0
  %219 = vmatmul.mubr.bf16.gmra.mrb[0].mxu0 %v87
  %v220 = vpop.f32.mrb[0].mxu0
  %v221 = vadd.f32 0.0, %v220
  %v222 = vpop.f32.mrb[0].mxu0
  %v223 = vpop.f32.mrb[0].mxu0
  %v224 = vadd.f32 0.0, %v223
  %v225 = vpop.f32.mrb[0].mxu0
  %226 = vmatprep.mubr.bf16.mxu0 0
  %227 = vmatmul.mubr.bf16.gmra.mrb[0].mxu0 %v88
  %v228 = vpop.f32.mrb[0].mxu0
  %v229 = vadd.f32 0.0, %v228
  %v230 = vpop.f32.mrb[0].mxu0
  %v231 = vpop.f32.mrb[0].mxu0
  %v232 = vadd.f32 0.0, %v231
  %v233 = vpop.f32.mrb[0].mxu0
  %234 = vmatprep.mubr.bf16.mxu0 0
  %235 = vmatmul.mubr.bf16.gmra.mrb[0].mxu0 %v89
  %v236 = vpop.f32.mrb[0].mxu0
  %v237 = vadd.f32 0.0, %v236
  %v238 = vpop.f32.mrb[0].mxu0
  %v239 = vpop.f32.mrb[0].mxu0
  %v240 = vadd.f32 0.0, %v239
  %v241 = vpop.f32.mrb[0].mxu0
  %242 = vdwg.mxu0
  %v243 = vld [vmem:[%s2] sm:$0x1]
  %v245 = vlaneseq
  %v246 = vshrl.u32 %v245, 7
  %v247 = vsub.s32 0, %v246
  %v248 = vrot.slane %v243, %v247
  %v250 = vmul.f32 %v181, %v248
  %v251 = vmul.f32 %v184, %v248
  %v252 = vmul.f32 %v189, %v248
  %v253 = vmul.f32 %v192, %v248
  %v254 = vmul.f32 %v197, %v248
  %v255 = vmul.f32 %v200, %v248
  %v256 = vmul.f32 %v205, %v248
  %v257 = vmul.f32 %v208, %v248
  %v258 = vmul.f32 %v213, %v248
  %v259 = vmul.f32 %v216, %v248
  %v260 = vmul.f32 %v221, %v248
  %v261 = vmul.f32 %v224, %v248
  %v262 = vmul.f32 %v229, %v248
  %v263 = vmul.f32 %v232, %v248
  %v264 = vmul.f32 %v237, %v248
  %v265 = vmul.f32 %v240, %v248
  %v266 = vld [vmem:[%s3] sm:$0x1]
  %v268 = vlaneseq
  %v269 = vshrl.u32 %v268, 7
  %v270 = vsub.s32 0, %v269
  %v271 = vrot.slane %v266, %v270
  %v273 = vadd.f32 %v250, %v271
  %v274 = vadd.f32 %v251, %v271
  %v275 = vadd.f32 %v252, %v271
  %v276 = vadd.f32 %v253, %v271
  %v277 = vadd.f32 %v254, %v271
  %v278 = vadd.f32 %v255, %v271
  %v279 = vadd.f32 %v256, %v271
  %v280 = vadd.f32 %v257, %v271
  %v281 = vadd.f32 %v258, %v271
  %v282 = vadd.f32 %v259, %v271
  %v283 = vadd.f32 %v260, %v271
  %v284 = vadd.f32 %v261, %v271
  %v285 = vadd.f32 %v262, %v271
  %v286 = vadd.f32 %v263, %v271
  %v287 = vadd.f32 %v264, %v271
  %v288 = vadd.f32 %v265, %v271
  %289 = vst [vmem:[%s4] sm:$0xff] %v273
  %290 = vst [vmem:[%s4 + $0x8] sm:$0xff] %v274
  %291 = vst [vmem:[%s4 + $0x10] sm:$0xff] %v275
  %292 = vst [vmem:[%s4 + $0x18] sm:$0xff] %v276
  %293 = vst [vmem:[%s4 + $0x20] sm:$0xff] %v277
  %294 = vst [vmem:[%s4 + $0x28] sm:$0xff] %v278
  %295 = vst [vmem:[%s4 + $0x30] sm:$0xff] %v279
  %296 = vst [vmem:[%s4 + $0x38] sm:$0xff] %v280
  %297 = vst [vmem:[%s4 + $0x40] sm:$0xff] %v281
  %298 = vst [vmem:[%s4 + $0x48] sm:$0xff] %v282
  %299 = vst [vmem:[%s4 + $0x50] sm:$0xff] %v283
  %300 = vst [vmem:[%s4 + $0x58] sm:$0xff] %v284
  %301 = vst [vmem:[%s4 + $0x60] sm:$0xff] %v285
  %302 = vst [vmem:[%s4 + $0x68] sm:$0xff] %v286
  %303 = vst [vmem:[%s4 + $0x70] sm:$0xff] %v287
  %304 = vst [vmem:[%s4 + $0x78] sm:$0xff] %v288
  // Predicated region
  $region18: #{generator_forward.27} parent=0 // pred_check
    _
  $region19: #{generator_forward.27} parent=0 // pred_check_branch
    %306 = sbr.rel (0) target = $region21
  $region20: #{generator_forward.27} parent=0 // pred_region
    _
  $region21: #{generator_forward.27} parent=0 // pred_fallthru
    _
  // Predicated region
  $region22: #{generator_forward.27} parent=0 // pred_check
    _
  $region23: #{generator_forward.27} parent=0 // pred_check_branch
    %308 = sbr.rel (0) target = $region25
  $region24: #{generator_forward.27} parent=0 // pred_region
    _
  $region25: #{generator_forward.27} parent=0 // pred_fallthru
    _

// kernel: generator_forward.28
$region0: #{generator_forward.28}
  #allocation0 [shape = 'u32[]', space=smem, size = 0x4, offset = 0x4, fixed_abs, tag = 'smem constant byte address 0x4 - core index']
  #allocation1 [shape = 'u32[144,128]{1,0:T(1,128)}', space=vmem, size = 0x12000, scoped, tag = 'internal scratch']
  %s0 = inlined_call_operand.vmem [shape: f32[2,64,16], index: 0, kind: input, shape index: {}]
  %s1 = inlined_call_operand.vmem [shape: f32[2,1,16], index: 1, kind: input, shape index: {}]
  %s2 = inlined_call_operand.vmem [shape: f32[2,64,1], index: 2, kind: input, shape index: {}]
  %s3 = inlined_call_operand.vmem [shape: f32[1,1,16], index: 3, kind: input, shape index: {}]
  %s4 = inlined_call_operand.vmem [shape: f32[1,1,16], index: 4, kind: input, shape index: {}]
  %s5 = inlined_call_operand.vmem [shape: f32[2,64,16], index: 5, kind: output, shape index: {}]
  %s6 = sld [smem:[#allocation0]]
  $region53: #{generator_forward.28} parent=0
    _
  %s8 = ssub.s32 1, %s6
  %s9 = scalar_select 0, %s8, %s6
  loop: start=0, step=1, limit=4
  $region2: #{generator_forward.28} parent=0 // loop_pre_header
    _
  $region3: #{generator_forward.28} parent=0 // loop_header
    %s11 = sphi 0, %s15
    %p12 = scmp.ge.s32.totalorder %s11, 4
    %s18 = sphi 0, %s30
    %s19 = sphi 0, %s26
    %s20 = sphi 0, %s18
    %s21 = sphi 0, %s19
    %s22 = sphi 0, %s20
    %s23 = sphi 0, %s21
    %s35 = sphi 0, %s37
    %s38 = sphi 0, %s35
    %s39 = sphi 0, %s38
    %s55 = sphi 0, %s39
    %s61 = sphi 0, %s63
    %s64 = sphi 0, %s61
    %s65 = sphi 0, %s64
    %s81 = sphi 0, %s65
    %s89 = sphi 0, %s91
    %s92 = sphi 0, %s89
    %s93 = sphi 0, %s92
    %s109 = sphi 0, %s93
    %s113 = sphi 0, %s113
    %s115 = sphi 0, %s113
    %s116 = sphi 0, %s115
    %s130 = sphi 0, %s116
    %s134 = sphi 0, %s134
    %s136 = sphi 0, %s134
    %s137 = sphi 0, %s136
    %s151 = sphi 0, %s137
    %s159 = sphi 0, %s161
    %s162 = sphi 0, %s159
    %s163 = sphi 0, %s162
    %s179 = sphi 0, %s163
  $region4: #{generator_forward.28} parent=0 // loop_header_branch
    %14 = sbr.rel (%p12) target = $region8
  $region5: #{generator_forward.28} parent=0 // loop_body
    %s16 = ssub.s32 %s11, 1
    %s17 = ssub.s32 %s11, 2
    %s24 = sadd.s32 1, %s19
    %p25 = scmp.ge.s32.totalorder %s24, 1
    %s26 = scalar_select %p25, 0, %s24
    %s27 = sadd.s32 1, %s18
    %s28 = scalar_select %p25, %s27, %s18
    %p29 = scmp.ge.s32.totalorder %s28, 2
    %s30 = scalar_select %p29, 0, %s28
    %s31 = ssub.s32 %s18, %s30
    %s32 = ssub.s32 %s19, %s26
    %s33 = sor.u32 %s31, %s32
    %p34 = scmp.eq.s32.totalorder %s33, 0
    %s36 = sadd.s32 %s35, 1
    %s37 = scalar_select %p34, %s35, %s36
    %p40 = pneg %p34
    %p41 = scmp.eq.s32.totalorder %s11, 1
    %p42 = por %p40, %p41
    %p43 = scmp.ne.s32.totalorder %s35, %s38
    %p44 = scmp.eq.s32.totalorder %s11, 0
    %p45 = por %p43, %p44
    %p46 = scmp.ne.s32.totalorder %s35, %s38
    %p47 = scmp.eq.s32.totalorder %s16, 1
    %p48 = por %p46, %p47
    %p49 = scmp.ne.s32.totalorder %s38, %s39
    %p50 = scmp.eq.s32.totalorder %s16, 0
    %p51 = por %p49, %p50
    %p52 = scmp.ne.s32.totalorder %s38, %s39
    %p53 = scmp.eq.s32.totalorder %s17, 1
    %p54 = por %p52, %p53
    %p56 = scmp.ne.s32.totalorder %s39, %s55
    %p57 = scmp.eq.s32.totalorder %s17, 0
    %p58 = por %p56, %p57
    %s59 = ssub.s32 %s18, %s30
    %p60 = scmp.eq.s32.totalorder %s59, 0
    %s62 = sadd.s32 %s61, 1
    %s63 = scalar_select %p60, %s61, %s62
    %p66 = pneg %p60
    %p67 = scmp.eq.s32.totalorder %s11, 1
    %p68 = por %p66, %p67
    %p69 = scmp.ne.s32.totalorder %s61, %s64
    %p70 = scmp.eq.s32.totalorder %s11, 0
    %p71 = por %p69, %p70
    %p72 = scmp.ne.s32.totalorder %s61, %s64
    %p73 = scmp.eq.s32.totalorder %s16, 1
    %p74 = por %p72, %p73
    %p75 = scmp.ne.s32.totalorder %s64, %s65
    %p76 = scmp.eq.s32.totalorder %s16, 0
    %p77 = por %p75, %p76
    %p78 = scmp.ne.s32.totalorder %s64, %s65
    %p79 = scmp.eq.s32.totalorder %s17, 1
    %p80 = por %p78, %p79
    %p82 = scmp.ne.s32.totalorder %s65, %s81
    %p83 = scmp.eq.s32.totalorder %s17, 0
    %p84 = por %p82, %p83
    %s85 = ssub.s32 %s18, %s30
    %s86 = ssub.s32 %s19, %s26
    %s87 = sor.u32 %s85, %s86
    %p88 = scmp.eq.s32.totalorder %s87, 0
    %s90 = sadd.s32 %s89, 1
    %s91 = scalar_select %p88, %s89, %s90
    %p94 = pneg %p88
    %p95 = scmp.eq.s32.totalorder %s11, 1
    %p96 = por %p94, %p95
    %p97 = scmp.ne.s32.totalorder %s89, %s92
    %p98 = scmp.eq.s32.totalorder %s11, 0
    %p99 = por %p97, %p98
    %p100 = scmp.ne.s32.totalorder %s89, %s92
    %p101 = scmp.eq.s32.totalorder %s16, 1
    %p102 = por %p100, %p101
    %p103 = scmp.ne.s32.totalorder %s92, %s93
    %p104 = scmp.eq.s32.totalorder %s16, 0
    %p105 = por %p103, %p104
    %p106 = scmp.ne.s32.totalorder %s92, %s93
    %p107 = scmp.eq.s32.totalorder %s17, 1
    %p108 = por %p106, %p107
    %p110 = scmp.ne.s32.totalorder %s93, %s109
    %p111 = scmp.eq.s32.totalorder %s17, 0
    %p112 = por %p110, %p111
    %s114 = sadd.s32 %s113, 1
    %p117 = scmp.eq.s32.totalorder %s11, 1
    %p118 = scmp.ne.s32.totalorder %s113, %s115
    %p119 = scmp.eq.s32.totalorder %s11, 0
    %p120 = por %p118, %p119
    %p121 = scmp.ne.s32.totalorder %s113, %s115
    %p122 = scmp.eq.s32.totalorder %s16, 1
    %p123 = por %p121, %p122
    %p124 = scmp.ne.s32.totalorder %s115, %s116
    %p125 = scmp.eq.s32.totalorder %s16, 0
    %p126 = por %p124, %p125
    %p127 = scmp.ne.s32.totalorder %s115, %s116
    %p128 = scmp.eq.s32.totalorder %s17, 1
    %p129 = por %p127, %p128
    %p131 = scmp.ne.s32.totalorder %s116, %s130
    %p132 = scmp.eq.s32.totalorder %s17, 0
    %p133 = por %p131, %p132
    %s135 = sadd.s32 %s134, 1
    %p138 = scmp.eq.s32.totalorder %s11, 1
    %p139 = scmp.ne.s32.totalorder %s134, %s136
    %p140 = scmp.eq.s32.totalorder %s11, 0
    %p141 = por %p139, %p140
    %p142 = scmp.ne.s32.totalorder %s134, %s136
    %p143 = scmp.eq.s32.totalorder %s16, 1
    %p144 = por %p142, %p143
    %p145 = scmp.ne.s32.totalorder %s136, %s137
    %p146 = scmp.eq.s32.totalorder %s16, 0
    %p147 = por %p145, %p146
    %p148 = scmp.ne.s32.totalorder %s136, %s137
    %p149 = scmp.eq.s32.totalorder %s17, 1
    %p150 = por %p148, %p149
    %p152 = scmp.ne.s32.totalorder %s137, %s151
    %p153 = scmp.eq.s32.totalorder %s17, 0
    %p154 = por %p152, %p153
    %s155 = ssub.s32 %s18, %s30
    %s156 = ssub.s32 %s19, %s26
    %s157 = sor.u32 %s155, %s156
    %p158 = scmp.eq.s32.totalorder %s157, 0
    %s160 = sadd.s32 %s159, 1
    %s161 = scalar_select %p158, %s159, %s160
    %p164 = pneg %p158
    %p165 = scmp.eq.s32.totalorder %s11, 1
    %p166 = por %p164, %p165
    %p167 = scmp.ne.s32.totalorder %s159, %s162
    %p168 = scmp.eq.s32.totalorder %s11, 0
    %p169 = por %p167, %p168
    %p170 = scmp.ne.s32.totalorder %s159, %s162
    %p171 = scmp.eq.s32.totalorder %s16, 1
    %p172 = por %p170, %p171
    %p173 = scmp.ne.s32.totalorder %s162, %s163
    %p174 = scmp.eq.s32.totalorder %s16, 0
    %p175 = por %p173, %p174
    %p176 = scmp.ne.s32.totalorder %s162, %s163
    %p177 = scmp.eq.s32.totalorder %s17, 1
    %p178 = por %p176, %p177
    %p180 = scmp.ne.s32.totalorder %s163, %s179
    %p181 = scmp.eq.s32.totalorder %s17, 0
    %p182 = por %p180, %p181
    %p183 = scmp.le.s32.totalorder 1, %s11
    %p184 = scmp.lt.s32.totalorder %s11, 3
    %p185 = pnand %p183, %p184
    %p186 = pneg %p185
    // Predicated region
    $region9: #{generator_forward.28} parent=5 // pred_check
      _
    $region10: #{generator_forward.28} parent=5 // pred_check_branch
      %188 = sbr.rel (%p185) target = $region12
    $region11: #{generator_forward.28} parent=5 // pred_region
      %s189 = ssub.s32 %s11, 1
      // Predicated region
      $region13: #{generator_forward.28} parent=11 // pred_check
        %p190 = pneg %p126
      $region14: #{generator_forward.28} parent=11 // pred_check_branch
        %192 = sbr.rel (%p190) target = $region16
      $region15: #{generator_forward.28} parent=11 // pred_region
        _
      $region16: #{generator_forward.28} parent=11 // pred_fallthru
        _
      // Predicated region
      $region17: #{generator_forward.28} parent=11 // pred_check
        %p193 = pneg %p147
      $region18: #{generator_forward.28} parent=11 // pred_check_branch
        %195 = sbr.rel (%p193) target = $region20
      $region19: #{generator_forward.28} parent=11 // pred_region
        _
      $region20: #{generator_forward.28} parent=11 // pred_fallthru
        _
    $region12: #{generator_forward.28} parent=5 // pred_fallthru
      _
    %p196 = scmp.lt.s32.totalorder %s11, 2
    // Predicated region
    $region21: #{generator_forward.28} parent=5 // pred_check
      %p197 = pneg %p196
    $region22: #{generator_forward.28} parent=5 // pred_check_branch
      %199 = sbr.rel (%p197) target = $region24
    $region23: #{generator_forward.28} parent=5 // pred_region
      // Predicated region
      $region25: #{generator_forward.28} parent=23 // pred_check
        %p200 = pneg %p45
      $region26: #{generator_forward.28} parent=23 // pred_check_branch
        %202 = sbr.rel (%p200) target = $region28
      $region27: #{generator_forward.28} parent=23 // pred_region
        %s203 = smul.u32 8, %s19
        %p204 = scmp.lt.s32.totalorder %s18, 1
        %s205 = scalar_select %p204, %s18, 1
        %p206 = scmp.lt.s32.totalorder %s203, 7
        %s207 = scalar_select %p206, %s203, 7
        %s208 = smul.addr %s205, 8
        %s209 = sadd.s32 %s207, %s208
        %s210 = smul.addr %s209, 8
        %s211 = scalar_lea.vmem %s0, %s210
        %s212 = smul.u32 8, %s19
      $region28: #{generator_forward.28} parent=23 // pred_fallthru
        _
      // Predicated region
      $region29: #{generator_forward.28} parent=23 // pred_check
        %p213 = pneg %p71
      $region30: #{generator_forward.28} parent=23 // pred_check_branch
        %215 = sbr.rel (%p213) target = $region32
      $region31: #{generator_forward.28} parent=23 // pred_region
        %p216 = scmp.lt.s32.totalorder %s18, 1
        %s217 = scalar_select %p216, %s18, 1
        %s218 = scalar_lea.vmem %s1, %s217
      $region32: #{generator_forward.28} parent=23 // pred_fallthru
        _
      // Predicated region
      $region33: #{generator_forward.28} parent=23 // pred_check
        %p219 = pneg %p99
      $region34: #{generator_forward.28} parent=23 // pred_check_branch
        %221 = sbr.rel (%p219) target = $region36
      $region35: #{generator_forward.28} parent=23 // pred_region
        %s222 = smul.u32 8, %s19
        %p223 = scmp.lt.s32.totalorder %s18, 1
        %s224 = scalar_select %p223, %s18, 1
        %p225 = scmp.lt.s32.totalorder %s222, 7
        %s226 = scalar_select %p225, %s222, 7
        %s227 = smul.addr %s224, 8
        %s228 = sadd.s32 %s226, %s227
        %s229 = smul.addr %s228, 8
        %s230 = scalar_lea.vmem %s2, %s229
        %s231 = smul.u32 8, %s19
      $region36: #{generator_forward.28} parent=23 // pred_fallthru
        _
    $region24: #{generator_forward.28} parent=5 // pred_fallthru
      _
    %p232 = scmp.le.s32.totalorder 1, %s11
    %p233 = scmp.lt.s32.totalorder %s11, 3
    %p234 = pnand %p232, %p233
    %p235 = pneg %p234
    // Predicated region
    $region37: #{generator_forward.28} parent=5 // pred_check
      _
    $region38: #{generator_forward.28} parent=5 // pred_check_branch
      %237 = sbr.rel (%p234) target = $region40
    $region39: #{generator_forward.28} parent=5 // pred_region
      %s238 = ssub.s32 %s11, 1
      %s239 = smul.u32 8, %s21
      %p240 = scmp.lt.s32.totalorder %s20, 1
      %s241 = scalar_select %p240, %s20, 1
      %p242 = scmp.lt.s32.totalorder %s239, 7
      %s243 = scalar_select %p242, %s239, 7
      %s244 = smul.addr %s241, 8
      %s245 = sadd.s32 %s243, %s244
      %s246 = smul.addr %s245, 8
      %s247 = scalar_lea.vmem %s0, %s246
      %p248 = pneg %p51
      %p249 = pneg %p48
      %p250 = scmp.lt.s32.totalorder %s20, 1
      %s251 = scalar_select %p250, %s20, 1
      %s252 = scalar_lea.vmem %s1, %s251
      %p253 = pneg %p77
      %p254 = pneg %p74
      %s255 = smul.u32 8, %s21
      %p256 = scmp.lt.s32.totalorder %s20, 1
      %s257 = scalar_select %p256, %s20, 1
      %p258 = scmp.lt.s32.totalorder %s255, 7
      %s259 = scalar_select %p258, %s255, 7
      %s260 = smul.addr %s257, 8
      %s261 = sadd.s32 %s259, %s260
      %s262 = smul.addr %s261, 8
      %s263 = scalar_lea.vmem %s2, %s262
      %p264 = pneg %p105
      %p265 = pneg %p102
      %p266 = pneg %p126
      %p267 = pneg %p123
      %p268 = pneg %p147
      %p269 = pneg %p144
      %p270 = pneg %p175
      %p271 = pneg %p172
      %s272 = smul.u32 8, %s21
      %p273 = scmp.lt.s32.totalorder %s20, 1
      %s274 = scalar_select %p273, %s20, 1
      %p275 = scmp.lt.s32.totalorder %s272, 7
      %s276 = scalar_select %p275, %s272, 7
      %s277 = smul.addr %s274, 8
      %s278 = sadd.s32 %s276, %s277
      %s279 = smul.addr %s278, 8
      %s280 = scalar_lea.vmem %s5, %s279
      %s281 = smul.u32 8, %s21
      %p282 = scmp.lt.s32.totalorder %s20, 1
      %s283 = scalar_select %p282, %s20, 1
      %p284 = scmp.lt.s32.totalorder %s281, 7
      %s285 = scalar_select %p284, %s281, 7
      %s286 = smul.addr %s283, 8
      %s287 = sadd.s32 %s285, %s286
      %s288 = smul.addr %s287, 8
      %s289 = scalar_lea.vmem %s0, %s288
      %s290 = smul.u32 8, %s21
      %p291 = scmp.lt.s32.totalorder %s20, 1
      %s292 = scalar_select %p291, %s20, 1
      %s293 = scalar_lea.vmem %s1, %s292
      %s294 = smul.u32 8, %s21
      %p295 = scmp.lt.s32.totalorder %s20, 1
      %s296 = scalar_select %p295, %s20, 1
      %p297 = scmp.lt.s32.totalorder %s294, 7
      %s298 = scalar_select %p297, %s294, 7
      %s299 = smul.addr %s296, 8
      %s300 = sadd.s32 %s298, %s299
      %s301 = smul.addr %s300, 8
      %s302 = scalar_lea.vmem %s2, %s301
      %s303 = smul.u32 8, %s21
      %s304 = smul.u32 8, %s21
      %p305 = scmp.lt.s32.totalorder %s20, 1
      %s306 = scalar_select %p305, %s20, 1
      %p307 = scmp.lt.s32.totalorder %s304, 7
      %s308 = scalar_select %p307, %s304, 7
      %s309 = smul.addr %s306, 8
      %s310 = sadd.s32 %s308, %s309
      %s311 = smul.addr %s310, 8
      %s312 = scalar_lea.vmem %s5, %s311
      %s313 = smul.u32 8, %s21
      %v314 = vld [vmem:[%s289] sm:$0xff]
      %v315 = vld [vmem:[%s289 + $0x8] sm:$0xff]
      %v316 = vld [vmem:[%s289 + $0x10] sm:$0xff]
      %v317 = vld [vmem:[%s289 + $0x18] sm:$0xff]
      %v318 = vld [vmem:[%s289 + $0x20] sm:$0xff]
      %v319 = vld [vmem:[%s289 + $0x28] sm:$0xff]
      %v320 = vld [vmem:[%s289 + $0x30] sm:$0xff]
      %v321 = vld [vmem:[%s289 + $0x38] sm:$0xff]
      %v322 = vld [vmem:[%s293] sm:$0x1]
      %v324 = vlaneseq
      %v325 = vshrl.u32 %v324, 7
      %v326 = vsub.s32 0, %v325
      %v327 = vrot.slane %v322, %v326
      %v329 = vmul.f32 %v314, %v327
      %v330 = vmul.f32 %v315, %v327
      %v331 = vmul.f32 %v316, %v327
      %v332 = vmul.f32 %v317, %v327
      %v333 = vmul.f32 %v318, %v327
      %v334 = vmul.f32 %v319, %v327
      %v335 = vmul.f32 %v320, %v327
      %v336 = vmul.f32 %v321, %v327
      %v337 = vld [vmem:[%s302] sm:$0xff]
      %v338 = vld [vmem:[%s302 + $0x8] sm:$0xff]
      %v339 = vld [vmem:[%s302 + $0x10] sm:$0xff]
      %v340 = vld [vmem:[%s302 + $0x18] sm:$0xff]
      %v341 = vld [vmem:[%s302 + $0x20] sm:$0xff]
      %v342 = vld [vmem:[%s302 + $0x28] sm:$0xff]
      %v343 = vld [vmem:[%s302 + $0x30] sm:$0xff]
      %v344 = vld [vmem:[%s302 + $0x38] sm:$0xff]
      %346 = vset.pattern.permute.xlu0 0
      %347 = vperm.xlu0 %346, %v337
      %v348 = vpop.permute.xlu0 %347
      %351 = vset.pattern.permute.xlu0 0
      %352 = vperm.xlu0 %351, %v338
      %v353 = vpop.permute.xlu0 %352
      %356 = vset.pattern.permute.xlu0 0
      %357 = vperm.xlu0 %356, %v339
      %v358 = vpop.permute.xlu0 %357
      %361 = vset.pattern.permute.xlu0 0
      %362 = vperm.xlu0 %361, %v340
      %v363 = vpop.permute.xlu0 %362
      %366 = vset.pattern.permute.xlu0 0
      %367 = vperm.xlu0 %366, %v341
      %v368 = vpop.permute.xlu0 %367
      %371 = vset.pattern.permute.xlu0 0
      %372 = vperm.xlu0 %371, %v342
      %v373 = vpop.permute.xlu0 %372
      %376 = vset.pattern.permute.xlu0 0
      %377 = vperm.xlu0 %376, %v343
      %v378 = vpop.permute.xlu0 %377
      %381 = vset.pattern.permute.xlu0 0
      %382 = vperm.xlu0 %381, %v344
      %v383 = vpop.permute.xlu0 %382
      %v385 = vmul.f32 %v329, %v348
      %v386 = vmul.f32 %v330, %v353
      %v387 = vmul.f32 %v331, %v358
      %v388 = vmul.f32 %v332, %v363
      %v389 = vmul.f32 %v333, %v368
      %v390 = vmul.f32 %v334, %v373
      %v391 = vmul.f32 %v335, %v378
      %v392 = vmul.f32 %v336, %v383
      %v393 = vld [vmem:[%s3] sm:$0x1]
      %v395 = vlaneseq
      %v396 = vshrl.u32 %v395, 7
      %v397 = vsub.s32 0, %v396
      %v398 = vrot.slane %v393, %v397
      %v400 = vmul.f32 %v385, %v398
      %v401 = vmul.f32 %v386, %v398
      %v402 = vmul.f32 %v387, %v398
      %v403 = vmul.f32 %v388, %v398
      %v404 = vmul.f32 %v389, %v398
      %v405 = vmul.f32 %v390, %v398
      %v406 = vmul.f32 %v391, %v398
      %v407 = vmul.f32 %v392, %v398
      %v408 = vld [vmem:[%s4] sm:$0x1]
      %v410 = vlaneseq
      %v411 = vshrl.u32 %v410, 7
      %v412 = vsub.s32 0, %v411
      %v413 = vrot.slane %v408, %v412
      %v415 = vadd.f32 %v400, %v413
      %v416 = vadd.f32 %v401, %v413
      %v417 = vadd.f32 %v402, %v413
      %v418 = vadd.f32 %v403, %v413
      %v419 = vadd.f32 %v404, %v413
      %v420 = vadd.f32 %v405, %v413
      %v421 = vadd.f32 %v406, %v413
      %v422 = vadd.f32 %v407, %v413
      %v423 = vmax.f32 %v415, 0.0
      %v424 = vmax.f32 %v416, 0.0
      %v425 = vmax.f32 %v417, 0.0
      %v426 = vmax.f32 %v418, 0.0
      %v427 = vmax.f32 %v419, 0.0
      %v428 = vmax.f32 %v420, 0.0
      %v429 = vmax.f32 %v421, 0.0
      %v430 = vmax.f32 %v422, 0.0
      %vm431 = vcmask 130048
      %432 = vst.msk [vmem:[%s312] sm:$0xff] %vm431, %v423
      %433 = vst.msk [vmem:[%s312 + $0x8] sm:$0xff] %vm431, %v424
      %434 = vst.msk [vmem:[%s312 + $0x10] sm:$0xff] %vm431, %v425
      %435 = vst.msk [vmem:[%s312 + $0x18] sm:$0xff] %vm431, %v426
      %436 = vst.msk [vmem:[%s312 + $0x20] sm:$0xff] %vm431, %v427
      %437 = vst.msk [vmem:[%s312 + $0x28] sm:$0xff] %vm431, %v428
      %438 = vst.msk [vmem:[%s312 + $0x30] sm:$0xff] %vm431, %v429
      %439 = vst.msk [vmem:[%s312 + $0x38] sm:$0xff] %vm431, %v430
      %s440 = smul.u32 8, %s21
      %p441 = scmp.lt.s32.totalorder %s20, 1
      %s442 = scalar_select %p441, %s20, 1
      %p443 = scmp.lt.s32.totalorder %s440, 7
      %s444 = scalar_select %p443, %s440, 7
      %s445 = smul.addr %s442, 8
      %s446 = sadd.s32 %s444, %s445
      %s447 = smul.addr %s446, 8
      %s448 = scalar_lea.vmem %s5, %s447
      // Predicated region
      $region41: #{generator_forward.28} parent=39 // pred_check
        %p449 = pneg %p172
      $region42: #{generator_forward.28} parent=39 // pred_check_branch
        %451 = sbr.rel (%p449) target = $region44
      $region43: #{generator_forward.28} parent=39 // pred_region
        %s452 = smul.u32 8, %s21
      $region44: #{generator_forward.28} parent=39 // pred_fallthru
        _
    $region40: #{generator_forward.28} parent=5 // pred_fallthru
      _
    %p453 = scmp.le.s32.totalorder 2, %s11
    // Predicated region
    $region45: #{generator_forward.28} parent=5 // pred_check
      %p454 = pneg %p453
    $region46: #{generator_forward.28} parent=5 // pred_check_branch
      %456 = sbr.rel (%p454) target = $region48
    $region47: #{generator_forward.28} parent=5 // pred_region
      %s457 = ssub.s32 %s11, 2
      // Predicated region
      $region49: #{generator_forward.28} parent=47 // pred_check
        %p458 = pneg %p178
      $region50: #{generator_forward.28} parent=47 // pred_check_branch
        %460 = sbr.rel (%p458) target = $region52
      $region51: #{generator_forward.28} parent=47 // pred_region
        %s461 = smul.u32 8, %s23
        %p462 = scmp.lt.s32.totalorder %s22, 1
        %s463 = scalar_select %p462, %s22, 1
        %p464 = scmp.lt.s32.totalorder %s461, 7
        %s465 = scalar_select %p464, %s461, 7
        %s466 = smul.addr %s463, 8
        %s467 = sadd.s32 %s465, %s466
        %s468 = smul.addr %s467, 8
        %s469 = scalar_lea.vmem %s5, %s468
      $region52: #{generator_forward.28} parent=47 // pred_fallthru
        _
    $region48: #{generator_forward.28} parent=5 // pred_fallthru
      _
  $region6: #{generator_forward.28} parent=0 // loop_footer
    %s15 = sadd.s32 1, %s11
  $region7: #{generator_forward.28} parent=0 // loop_footer_branch
    %10 = sbr.rel target = $region3
  $region8: #{generator_forward.28} parent=0 // loop_exit
    _

// kernel: generator_forward.29
$region0: #{generator_forward.29}
  #allocation0 [shape = 'u32[]', space=smem, size = 0x4, offset = 0x4, fixed_abs, tag = 'smem constant byte address 0x4 - core index']
  #allocation1 [shape = 'u32[144,128]{1,0:T(1,128)}', space=vmem, size = 0x12000, scoped, tag = 'internal scratch']
  %s0 = inlined_call_operand.vmem [shape: bf16[32,256], index: 0, kind: input, shape index: {}]
  %s1 = inlined_call_operand.vmem [shape: bf16[256,128], index: 1, kind: input, shape index: {}]
  %s2 = inlined_call_operand.vmem [shape: f32[1,128], index: 2, kind: input, shape index: {}]
  %s3 = inlined_call_operand.vmem [shape: f32[1,128], index: 3, kind: input, shape index: {}]
  %s4 = inlined_call_operand.vmem [shape: f32[32,128], index: 4, kind: output, shape index: {}]
  %s5 = sld [smem:[#allocation0]]
  $region26: #{generator_forward.29} parent=0
    _
  %s7 = ssub.s32 1, %s5
  %s8 = scalar_select 0, %s7, %s5
  // Predicated region
  $region2: #{generator_forward.29} parent=0 // pred_check
    _
  $region3: #{generator_forward.29} parent=0 // pred_check_branch
    %10 = sbr.rel (0) target = $region5
  $region4: #{generator_forward.29} parent=0 // pred_region
    _
  $region5: #{generator_forward.29} parent=0 // pred_fallthru
    _
  // Predicated region
  $region6: #{generator_forward.29} parent=0 // pred_check
    _
  $region7: #{generator_forward.29} parent=0 // pred_check_branch
    %12 = sbr.rel (0) target = $region9
  $region8: #{generator_forward.29} parent=0 // pred_region
    _
  $region9: #{generator_forward.29} parent=0 // pred_fallthru
    _
  // Predicated region
  $region10: #{generator_forward.29} parent=0 // pred_check
    _
  $region11: #{generator_forward.29} parent=0 // pred_check_branch
    %14 = sbr.rel (0) target = $region13
  $region12: #{generator_forward.29} parent=0 // pred_region
    _
  $region13: #{generator_forward.29} parent=0 // pred_fallthru
    _
  // Predicated region
  $region14: #{generator_forward.29} parent=0 // pred_check
    _
  $region15: #{generator_forward.29} parent=0 // pred_check_branch
    %16 = sbr.rel (0) target = $region17
  $region16: #{generator_forward.29} parent=0 // pred_region
    _
  $region17: #{generator_forward.29} parent=0 // pred_fallthru
    _
  %v18 = vld [vmem:[%s0] sm:$0xff]
  %v19 = vld [vmem:[%s0 + $0x8] sm:$0xff]
  %v20 = vld [vmem:[%s0 + $0x10] sm:$0xff]
  %v21 = vld [vmem:[%s0 + $0x18] sm:$0xff]
  %v22 = vld [vmem:[%s1] sm:$0xf]
  %v23 = vld [vmem:[%s1 + $0x4] sm:$0xf]
  %v24 = vld [vmem:[%s1 + $0x8] sm:$0xf]
  %v25 = vld [vmem:[%s1 + $0xc] sm:$0xf]
  %v26 = vld [vmem:[%s1 + $0x10] sm:$0xf]
  %v27 = vld [vmem:[%s1 + $0x14] sm:$0xf]
  %v28 = vld [vmem:[%s1 + $0x18] sm:$0xf]
  %v29 = vld [vmem:[%s1 + $0x1c] sm:$0xf]
  %v30 = vld [vmem:[%s1 + $0x20] sm:$0xf]
  %v31 = vld [vmem:[%s1 + $0x24] sm:$0xf]
  %v32 = vld [vmem:[%s1 + $0x28] sm:$0xf]
  %v33 = vld [vmem:[%s1 + $0x2c] sm:$0xf]
  %v34 = vld [vmem:[%s1 + $0x30] sm:$0xf]
  %v35 = vld [vmem:[%s1 + $0x34] sm:$0xf]
  %v36 = vld [vmem:[%s1 + $0x38] sm:$0xf]
  %v37 = vld [vmem:[%s1 + $0x3c] sm:$0xf]
  %v38 = vld [vmem:[%s1 + $0x40] sm:$0xf]
  %v39 = vld [vmem:[%s1 + $0x44] sm:$0xf]
  %v40 = vld [vmem:[%s1 + $0x48] sm:$0xf]
  %v41 = vld [vmem:[%s1 + $0x4c] sm:$0xf]
  %v42 = vld [vmem:[%s1 + $0x50] sm:$0xf]
  %v43 = vld [vmem:[%s1 + $0x54] sm:$0xf]
  %v44 = vld [vmem:[%s1 + $0x58] sm:$0xf]
  %v45 = vld [vmem:[%s1 + $0x5c] sm:$0xf]
  %v46 = vld [vmem:[%s1 + $0x60] sm:$0xf]
  %v47 = vld [vmem:[%s1 + $0x64] sm:$0xf]
  %v48 = vld [vmem:[%s1 + $0x68] sm:$0xf]
  %v49 = vld [vmem:[%s1 + $0x6c] sm:$0xf]
  %v50 = vld [vmem:[%s1 + $0x70] sm:$0xf]
  %v51 = vld [vmem:[%s1 + $0x74] sm:$0xf]
  %v52 = vld [vmem:[%s1 + $0x78] sm:$0xf]
  %v53 = vld [vmem:[%s1 + $0x7c] sm:$0xf]
  %v58 = vunpack.c.l.b16 %v18
  %v59 = vunpack.c.h.b16 %v18
  %v60 = vunpack.c.l.b16 %v19
  %v61 = vunpack.c.h.b16 %v19
  %v62 = vunpack.c.l.b16 %v20
  %v63 = vunpack.c.h.b16 %v20
  %v64 = vunpack.c.l.b16 %v21
  %v65 = vunpack.c.h.b16 %v21
  %v66 = vpack.c.b16 %v60, %v58
  %v67 = vpack.c.b16 %v61, %v59
  %v68 = vpack.c.b16 %v64, %v62
  %v69 = vpack.c.b16 %v65, %v63
  %v106 = vunpack.c.l.b16 %v22
  %v107 = vunpack.c.l.b16 %v23
  %v108 = vunpack.c.l.b16 %v24
  %v109 = vunpack.c.l.b16 %v25
  %v110 = vunpack.c.l.b16 %v26
  %v111 = vunpack.c.l.b16 %v27
  %v112 = vunpack.c.l.b16 %v28
  %v113 = vunpack.c.l.b16 %v29
  %v114 = vunpack.c.l.b16 %v30
  %v115 = vunpack.c.l.b16 %v31
  %v116 = vunpack.c.l.b16 %v32
  %v117 = vunpack.c.l.b16 %v33
  %v118 = vunpack.c.l.b16 %v34
  %v119 = vunpack.c.l.b16 %v35
  %v120 = vunpack.c.l.b16 %v36
  %v121 = vunpack.c.l.b16 %v37
  %v122 = vunpack.c.l.b16 %v38
  %v123 = vunpack.c.l.b16 %v39
  %v124 = vunpack.c.l.b16 %v40
  %v125 = vunpack.c.l.b16 %v41
  %v126 = vunpack.c.l.b16 %v42
  %v127 = vunpack.c.l.b16 %v43
  %v128 = vunpack.c.l.b16 %v44
  %v129 = vunpack.c.l.b16 %v45
  %v130 = vunpack.c.l.b16 %v46
  %v131 = vunpack.c.l.b16 %v47
  %v132 = vunpack.c.l.b16 %v48
  %v133 = vunpack.c.l.b16 %v49
  %v134 = vunpack.c.l.b16 %v50
  %v135 = vunpack.c.l.b16 %v51
  %v136 = vunpack.c.l.b16 %v52
  %v137 = vunpack.c.l.b16 %v53
  %v138 = vpack.c.b16 %v107, %v106
  %v139 = vpack.c.b16 %v109, %v108
  %v140 = vpack.c.b16 %v111, %v110
  %v141 = vpack.c.b16 %v113, %v112
  %v142 = vpack.c.b16 %v115, %v114
  %v143 = vpack.c.b16 %v117, %v116
  %v144 = vpack.c.b16 %v119, %v118
  %v145 = vpack.c.b16 %v121, %v120
  %v146 = vpack.c.b16 %v123, %v122
  %v147 = vpack.c.b16 %v125, %v124
  %v148 = vpack.c.b16 %v127, %v126
  %v149 = vpack.c.b16 %v129, %v128
  %v150 = vpack.c.b16 %v131, %v130
  %v151 = vpack.c.b16 %v133, %v132
  %v152 = vpack.c.b16 %v135, %v134
  %v153 = vpack.c.b16 %v137, %v136
  %170 = vmatprep.subr.bf16.mxu0 0
  %171 = vmatpush1.bf16.msra.mxu0 %v138
  %172 = vmatprep.subr.bf16.mxu0 0
  %173 = vmatpush1.bf16.msra.mxu0 %v139
  %174 = vmatprep.subr.bf16.mxu0 0
  %175 = vmatpush1.bf16.msra.mxu0 %v140
  %176 = vmatprep.subr.bf16.mxu0 0
  %177 = vmatpush1.bf16.msra.mxu0 %v141
  %178 = vmatprep.subr.bf16.mxu0 0
  %179 = vmatpush1.bf16.msra.mxu0 %v142
  %180 = vmatprep.subr.bf16.mxu0 0
  %181 = vmatpush1.bf16.msra.mxu0 %v143
  %182 = vmatprep.subr.bf16.mxu0 0
  %183 = vmatpush1.bf16.msra.mxu0 %v144
  %184 = vmatprep.subr.bf16.mxu0 0
  %185 = vmatpush1.bf16.msra.mxu0 %v145
  %186 = vmatprep.subr.bf16.mxu0 0
  %187 = vmatpush1.bf16.msra.mxu0 %v146
  %188 = vmatprep.subr.bf16.mxu0 0
  %189 = vmatpush1.bf16.msra.mxu0 %v147
  %190 = vmatprep.subr.bf16.mxu0 0
  %191 = vmatpush1.bf16.msra.mxu0 %v148
  %192 = vmatprep.subr.bf16.mxu0 0
  %193 = vmatpush1.bf16.msra.mxu0 %v149
  %194 = vmatprep.subr.bf16.mxu0 0
  %195 = vmatpush1.bf16.msra.mxu0 %v150
  %196 = vmatprep.subr.bf16.mxu0 0
  %197 = vmatpush1.bf16.msra.mxu0 %v151
  %198 = vmatprep.subr.bf16.mxu0 0
  %199 = vmatpush1.bf16.msra.mxu0 %v152
  %200 = vmatprep.subr.bf16.mxu0 0
  %201 = vmatpush1.bf16.msra.mxu0 %v153
  %202 = vmatprep.mubr.bf16.mxu0 %v67
  %203 = vmatmul.mubr.bf16.gmra.mrb[0].mxu0 %v66
  %v204 = vpop.f32.mrb[0].mxu0
  %v205 = vadd.f32 0.0, %v204
  %v206 = vpop.f32.mrb[0].mxu0
  %v207 = vpop.f32.mrb[0].mxu0
  %v208 = vadd.f32 0.0, %v207
  %v209 = vpop.f32.mrb[0].mxu0
  %210 = vmatprep.mubr.bf16.mxu0 %v69
  %211 = vmatmul.mubr.bf16.gmra.mrb[0].mxu0 %v68
  %v212 = vpop.f32.mrb[0].mxu0
  %v213 = vadd.f32 0.0, %v212
  %v214 = vpop.f32.mrb[0].mxu0
  %v215 = vpop.f32.mrb[0].mxu0
  %v216 = vadd.f32 0.0, %v215
  %v217 = vpop.f32.mrb[0].mxu0
  %218 = vdwg.mxu0
  %v219 = vld [vmem:[%s2] sm:$0x1]
  %v221 = vlaneseq
  %v222 = vshrl.u32 %v221, 7
  %v223 = vsub.s32 0, %v222
  %v224 = vrot.slane %v219, %v223
  %v226 = vmul.f32 %v205, %v224
  %v227 = vmul.f32 %v208, %v224
  %v228 = vmul.f32 %v213, %v224
  %v229 = vmul.f32 %v216, %v224
  %v230 = vld [vmem:[%s3] sm:$0x1]
  %v232 = vlaneseq
  %v233 = vshrl.u32 %v232, 7
  %v234 = vsub.s32 0, %v233
  %v235 = vrot.slane %v230, %v234
  %v237 = vadd.f32 %v226, %v235
  %v238 = vadd.f32 %v227, %v235
  %v239 = vadd.f32 %v228, %v235
  %v240 = vadd.f32 %v229, %v235
  %241 = vst [vmem:[%s4] sm:$0xff] %v237
  %242 = vst [vmem:[%s4 + $0x8] sm:$0xff] %v238
  %243 = vst [vmem:[%s4 + $0x10] sm:$0xff] %v239
  %244 = vst [vmem:[%s4 + $0x18] sm:$0xff] %v240
  // Predicated region
  $region18: #{generator_forward.29} parent=0 // pred_check
    _
  $region19: #{generator_forward.29} parent=0 // pred_check_branch
    %246 = sbr.rel (0) target = $region21
  $region20: #{generator_forward.29} parent=0 // pred_region
    _
  $region21: #{generator_forward.29} parent=0 // pred_fallthru
    _
  // Predicated region
  $region22: #{generator_forward.29} parent=0 // pred_check
    _
  $region23: #{generator_forward.29} parent=0 // pred_check_branch
    %248 = sbr.rel (0) target = $region25
  $region24: #{generator_forward.29} parent=0 // pred_region
    _
  $region25: #{generator_forward.29} parent=0 // pred_fallthru
    _

// kernel: generator_forward.30
$region0: #{generator_forward.30}
  #allocation0 [shape = 'u32[]', space=smem, size = 0x4, offset = 0x4, fixed_abs, tag = 'smem constant byte address 0x4 - core index']
  #allocation1 [shape = 'u32[144,128]{1,0:T(1,128)}', space=vmem, size = 0x12000, scoped, tag = 'internal scratch']
  %s0 = inlined_call_operand.vmem [shape: f32[2,16,32], index: 0, kind: input, shape index: {}]
  %s1 = inlined_call_operand.vmem [shape: f32[2,1,32], index: 1, kind: input, shape index: {}]
  %s2 = inlined_call_operand.vmem [shape: f32[2,16,1], index: 2, kind: input, shape index: {}]
  %s3 = inlined_call_operand.vmem [shape: f32[1,1,32], index: 3, kind: input, shape index: {}]
  %s4 = inlined_call_operand.vmem [shape: f32[1,1,32], index: 4, kind: input, shape index: {}]
  %s5 = inlined_call_operand.vmem [shape: f32[2,16,32], index: 5, kind: output, shape index: {}]
  %s6 = sld [smem:[#allocation0]]
  $region53: #{generator_forward.30} parent=0
    _
  %s8 = ssub.s32 1, %s6
  %s9 = scalar_select 0, %s8, %s6
  loop: start=0, step=1, limit=4
  $region2: #{generator_forward.30} parent=0 // loop_pre_header
    _
  $region3: #{generator_forward.30} parent=0 // loop_header
    %s11 = sphi 0, %s15
    %p12 = scmp.ge.s32.totalorder %s11, 4
    %s18 = sphi 0, %s30
    %s19 = sphi 0, %s26
    %s20 = sphi 0, %s18
    %s21 = sphi 0, %s19
    %s22 = sphi 0, %s20
    %s23 = sphi 0, %s21
    %s35 = sphi 0, %s37
    %s38 = sphi 0, %s35
    %s39 = sphi 0, %s38
    %s55 = sphi 0, %s39
    %s61 = sphi 0, %s63
    %s64 = sphi 0, %s61
    %s65 = sphi 0, %s64
    %s81 = sphi 0, %s65
    %s89 = sphi 0, %s91
    %s92 = sphi 0, %s89
    %s93 = sphi 0, %s92
    %s109 = sphi 0, %s93
    %s113 = sphi 0, %s113
    %s115 = sphi 0, %s113
    %s116 = sphi 0, %s115
    %s130 = sphi 0, %s116
    %s134 = sphi 0, %s134
    %s136 = sphi 0, %s134
    %s137 = sphi 0, %s136
    %s151 = sphi 0, %s137
    %s159 = sphi 0, %s161
    %s162 = sphi 0, %s159
    %s163 = sphi 0, %s162
    %s179 = sphi 0, %s163
  $region4: #{generator_forward.30} parent=0 // loop_header_branch
    %14 = sbr.rel (%p12) target = $region8
  $region5: #{generator_forward.30} parent=0 // loop_body
    %s16 = ssub.s32 %s11, 1
    %s17 = ssub.s32 %s11, 2
    %s24 = sadd.s32 1, %s19
    %p25 = scmp.ge.s32.totalorder %s24, 1
    %s26 = scalar_select %p25, 0, %s24
    %s27 = sadd.s32 1, %s18
    %s28 = scalar_select %p25, %s27, %s18
    %p29 = scmp.ge.s32.totalorder %s28, 2
    %s30 = scalar_select %p29, 0, %s28
    %s31 = ssub.s32 %s18, %s30
    %s32 = ssub.s32 %s19, %s26
    %s33 = sor.u32 %s31, %s32
    %p34 = scmp.eq.s32.totalorder %s33, 0
    %s36 = sadd.s32 %s35, 1
    %s37 = scalar_select %p34, %s35, %s36
    %p40 = pneg %p34
    %p41 = scmp.eq.s32.totalorder %s11, 1
    %p42 = por %p40, %p41
    %p43 = scmp.ne.s32.totalorder %s35, %s38
    %p44 = scmp.eq.s32.totalorder %s11, 0
    %p45 = por %p43, %p44
    %p46 = scmp.ne.s32.totalorder %s35, %s38
    %p47 = scmp.eq.s32.totalorder %s16, 1
    %p48 = por %p46, %p47
    %p49 = scmp.ne.s32.totalorder %s38, %s39
    %p50 = scmp.eq.s32.totalorder %s16, 0
    %p51 = por %p49, %p50
    %p52 = scmp.ne.s32.totalorder %s38, %s39
    %p53 = scmp.eq.s32.totalorder %s17, 1
    %p54 = por %p52, %p53
    %p56 = scmp.ne.s32.totalorder %s39, %s55
    %p57 = scmp.eq.s32.totalorder %s17, 0
    %p58 = por %p56, %p57
    %s59 = ssub.s32 %s18, %s30
    %p60 = scmp.eq.s32.totalorder %s59, 0
    %s62 = sadd.s32 %s61, 1
    %s63 = scalar_select %p60, %s61, %s62
    %p66 = pneg %p60
    %p67 = scmp.eq.s32.totalorder %s11, 1
    %p68 = por %p66, %p67
    %p69 = scmp.ne.s32.totalorder %s61, %s64
    %p70 = scmp.eq.s32.totalorder %s11, 0
    %p71 = por %p69, %p70
    %p72 = scmp.ne.s32.totalorder %s61, %s64
    %p73 = scmp.eq.s32.totalorder %s16, 1
    %p74 = por %p72, %p73
    %p75 = scmp.ne.s32.totalorder %s64, %s65
    %p76 = scmp.eq.s32.totalorder %s16, 0
    %p77 = por %p75, %p76
    %p78 = scmp.ne.s32.totalorder %s64, %s65
    %p79 = scmp.eq.s32.totalorder %s17, 1
    %p80 = por %p78, %p79
    %p82 = scmp.ne.s32.totalorder %s65, %s81
    %p83 = scmp.eq.s32.totalorder %s17, 0
    %p84 = por %p82, %p83
    %s85 = ssub.s32 %s18, %s30
    %s86 = ssub.s32 %s19, %s26
    %s87 = sor.u32 %s85, %s86
    %p88 = scmp.eq.s32.totalorder %s87, 0
    %s90 = sadd.s32 %s89, 1
    %s91 = scalar_select %p88, %s89, %s90
    %p94 = pneg %p88
    %p95 = scmp.eq.s32.totalorder %s11, 1
    %p96 = por %p94, %p95
    %p97 = scmp.ne.s32.totalorder %s89, %s92
    %p98 = scmp.eq.s32.totalorder %s11, 0
    %p99 = por %p97, %p98
    %p100 = scmp.ne.s32.totalorder %s89, %s92
    %p101 = scmp.eq.s32.totalorder %s16, 1
    %p102 = por %p100, %p101
    %p103 = scmp.ne.s32.totalorder %s92, %s93
    %p104 = scmp.eq.s32.totalorder %s16, 0
    %p105 = por %p103, %p104
    %p106 = scmp.ne.s32.totalorder %s92, %s93
    %p107 = scmp.eq.s32.totalorder %s17, 1
    %p108 = por %p106, %p107
    %p110 = scmp.ne.s32.totalorder %s93, %s109
    %p111 = scmp.eq.s32.totalorder %s17, 0
    %p112 = por %p110, %p111
    %s114 = sadd.s32 %s113, 1
    %p117 = scmp.eq.s32.totalorder %s11, 1
    %p118 = scmp.ne.s32.totalorder %s113, %s115
    %p119 = scmp.eq.s32.totalorder %s11, 0
    %p120 = por %p118, %p119
    %p121 = scmp.ne.s32.totalorder %s113, %s115
    %p122 = scmp.eq.s32.totalorder %s16, 1
    %p123 = por %p121, %p122
    %p124 = scmp.ne.s32.totalorder %s115, %s116
    %p125 = scmp.eq.s32.totalorder %s16, 0
    %p126 = por %p124, %p125
    %p127 = scmp.ne.s32.totalorder %s115, %s116
    %p128 = scmp.eq.s32.totalorder %s17, 1
    %p129 = por %p127, %p128
    %p131 = scmp.ne.s32.totalorder %s116, %s130
    %p132 = scmp.eq.s32.totalorder %s17, 0
    %p133 = por %p131, %p132
    %s135 = sadd.s32 %s134, 1
    %p138 = scmp.eq.s32.totalorder %s11, 1
    %p139 = scmp.ne.s32.totalorder %s134, %s136
    %p140 = scmp.eq.s32.totalorder %s11, 0
    %p141 = por %p139, %p140
    %p142 = scmp.ne.s32.totalorder %s134, %s136
    %p143 = scmp.eq.s32.totalorder %s16, 1
    %p144 = por %p142, %p143
    %p145 = scmp.ne.s32.totalorder %s136, %s137
    %p146 = scmp.eq.s32.totalorder %s16, 0
    %p147 = por %p145, %p146
    %p148 = scmp.ne.s32.totalorder %s136, %s137
    %p149 = scmp.eq.s32.totalorder %s17, 1
    %p150 = por %p148, %p149
    %p152 = scmp.ne.s32.totalorder %s137, %s151
    %p153 = scmp.eq.s32.totalorder %s17, 0
    %p154 = por %p152, %p153
    %s155 = ssub.s32 %s18, %s30
    %s156 = ssub.s32 %s19, %s26
    %s157 = sor.u32 %s155, %s156
    %p158 = scmp.eq.s32.totalorder %s157, 0
    %s160 = sadd.s32 %s159, 1
    %s161 = scalar_select %p158, %s159, %s160
    %p164 = pneg %p158
    %p165 = scmp.eq.s32.totalorder %s11, 1
    %p166 = por %p164, %p165
    %p167 = scmp.ne.s32.totalorder %s159, %s162
    %p168 = scmp.eq.s32.totalorder %s11, 0
    %p169 = por %p167, %p168
    %p170 = scmp.ne.s32.totalorder %s159, %s162
    %p171 = scmp.eq.s32.totalorder %s16, 1
    %p172 = por %p170, %p171
    %p173 = scmp.ne.s32.totalorder %s162, %s163
    %p174 = scmp.eq.s32.totalorder %s16, 0
    %p175 = por %p173, %p174
    %p176 = scmp.ne.s32.totalorder %s162, %s163
    %p177 = scmp.eq.s32.totalorder %s17, 1
    %p178 = por %p176, %p177
    %p180 = scmp.ne.s32.totalorder %s163, %s179
    %p181 = scmp.eq.s32.totalorder %s17, 0
    %p182 = por %p180, %p181
    %p183 = scmp.le.s32.totalorder 1, %s11
    %p184 = scmp.lt.s32.totalorder %s11, 3
    %p185 = pnand %p183, %p184
    %p186 = pneg %p185
    // Predicated region
    $region9: #{generator_forward.30} parent=5 // pred_check
      _
    $region10: #{generator_forward.30} parent=5 // pred_check_branch
      %188 = sbr.rel (%p185) target = $region12
    $region11: #{generator_forward.30} parent=5 // pred_region
      %s189 = ssub.s32 %s11, 1
      // Predicated region
      $region13: #{generator_forward.30} parent=11 // pred_check
        %p190 = pneg %p126
      $region14: #{generator_forward.30} parent=11 // pred_check_branch
        %192 = sbr.rel (%p190) target = $region16
      $region15: #{generator_forward.30} parent=11 // pred_region
        _
      $region16: #{generator_forward.30} parent=11 // pred_fallthru
        _
      // Predicated region
      $region17: #{generator_forward.30} parent=11 // pred_check
        %p193 = pneg %p147
      $region18: #{generator_forward.30} parent=11 // pred_check_branch
        %195 = sbr.rel (%p193) target = $region20
      $region19: #{generator_forward.30} parent=11 // pred_region
        _
      $region20: #{generator_forward.30} parent=11 // pred_fallthru
        _
    $region12: #{generator_forward.30} parent=5 // pred_fallthru
      _
    %p196 = scmp.lt.s32.totalorder %s11, 2
    // Predicated region
    $region21: #{generator_forward.30} parent=5 // pred_check
      %p197 = pneg %p196
    $region22: #{generator_forward.30} parent=5 // pred_check_branch
      %199 = sbr.rel (%p197) target = $region24
    $region23: #{generator_forward.30} parent=5 // pred_region
      // Predicated region
      $region25: #{generator_forward.30} parent=23 // pred_check
        %p200 = pneg %p45
      $region26: #{generator_forward.30} parent=23 // pred_check_branch
        %202 = sbr.rel (%p200) target = $region28
      $region27: #{generator_forward.30} parent=23 // pred_region
        %s203 = smul.u32 2, %s19
        %p204 = scmp.lt.s32.totalorder %s18, 1
        %s205 = scalar_select %p204, %s18, 1
        %p206 = scmp.lt.s32.totalorder %s203, 1
        %s207 = scalar_select %p206, %s203, 1
        %s208 = smul.addr %s205, 2
        %s209 = sadd.s32 %s207, %s208
        %s210 = smul.addr %s209, 8
        %s211 = scalar_lea.vmem %s0, %s210
        %s212 = smul.u32 2, %s19
      $region28: #{generator_forward.30} parent=23 // pred_fallthru
        _
      // Predicated region
      $region29: #{generator_forward.30} parent=23 // pred_check
        %p213 = pneg %p71
      $region30: #{generator_forward.30} parent=23 // pred_check_branch
        %215 = sbr.rel (%p213) target = $region32
      $region31: #{generator_forward.30} parent=23 // pred_region
        %p216 = scmp.lt.s32.totalorder %s18, 1
        %s217 = scalar_select %p216, %s18, 1
        %s218 = scalar_lea.vmem %s1, %s217
      $region32: #{generator_forward.30} parent=23 // pred_fallthru
        _
      // Predicated region
      $region33: #{generator_forward.30} parent=23 // pred_check
        %p219 = pneg %p99
      $region34: #{generator_forward.30} parent=23 // pred_check_branch
        %221 = sbr.rel (%p219) target = $region36
      $region35: #{generator_forward.30} parent=23 // pred_region
        %s222 = smul.u32 2, %s19
        %p223 = scmp.lt.s32.totalorder %s18, 1
        %s224 = scalar_select %p223, %s18, 1
        %p225 = scmp.lt.s32.totalorder %s222, 1
        %s226 = scalar_select %p225, %s222, 1
        %s227 = smul.addr %s224, 2
        %s228 = sadd.s32 %s226, %s227
        %s229 = smul.addr %s228, 8
        %s230 = scalar_lea.vmem %s2, %s229
        %s231 = smul.u32 2, %s19
      $region36: #{generator_forward.30} parent=23 // pred_fallthru
        _
    $region24: #{generator_forward.30} parent=5 // pred_fallthru
      _
    %p232 = scmp.le.s32.totalorder 1, %s11
    %p233 = scmp.lt.s32.totalorder %s11, 3
    %p234 = pnand %p232, %p233
    %p235 = pneg %p234
    // Predicated region
    $region37: #{generator_forward.30} parent=5 // pred_check
      _
    $region38: #{generator_forward.30} parent=5 // pred_check_branch
      %237 = sbr.rel (%p234) target = $region40
    $region39: #{generator_forward.30} parent=5 // pred_region
      %s238 = ssub.s32 %s11, 1
      %s239 = smul.u32 2, %s21
      %p240 = scmp.lt.s32.totalorder %s20, 1
      %s241 = scalar_select %p240, %s20, 1
      %p242 = scmp.lt.s32.totalorder %s239, 1
      %s243 = scalar_select %p242, %s239, 1
      %s244 = smul.addr %s241, 2
      %s245 = sadd.s32 %s243, %s244
      %s246 = smul.addr %s245, 8
      %s247 = scalar_lea.vmem %s0, %s246
      %p248 = pneg %p51
      %p249 = pneg %p48
      %p250 = scmp.lt.s32.totalorder %s20, 1
      %s251 = scalar_select %p250, %s20, 1
      %s252 = scalar_lea.vmem %s1, %s251
      %p253 = pneg %p77
      %p254 = pneg %p74
      %s255 = smul.u32 2, %s21
      %p256 = scmp.lt.s32.totalorder %s20, 1
      %s257 = scalar_select %p256, %s20, 1
      %p258 = scmp.lt.s32.totalorder %s255, 1
      %s259 = scalar_select %p258, %s255, 1
      %s260 = smul.addr %s257, 2
      %s261 = sadd.s32 %s259, %s260
      %s262 = smul.addr %s261, 8
      %s263 = scalar_lea.vmem %s2, %s262
      %p264 = pneg %p105
      %p265 = pneg %p102
      %p266 = pneg %p126
      %p267 = pneg %p123
      %p268 = pneg %p147
      %p269 = pneg %p144
      %p270 = pneg %p175
      %p271 = pneg %p172
      %s272 = smul.u32 2, %s21
      %p273 = scmp.lt.s32.totalorder %s20, 1
      %s274 = scalar_select %p273, %s20, 1
      %p275 = scmp.lt.s32.totalorder %s272, 1
      %s276 = scalar_select %p275, %s272, 1
      %s277 = smul.addr %s274, 2
      %s278 = sadd.s32 %s276, %s277
      %s279 = smul.addr %s278, 8
      %s280 = scalar_lea.vmem %s5, %s279
      %s281 = smul.u32 2, %s21
      %p282 = scmp.lt.s32.totalorder %s20, 1
      %s283 = scalar_select %p282, %s20, 1
      %p284 = scmp.lt.s32.totalorder %s281, 1
      %s285 = scalar_select %p284, %s281, 1
      %s286 = smul.addr %s283, 2
      %s287 = sadd.s32 %s285, %s286
      %s288 = smul.addr %s287, 8
      %s289 = scalar_lea.vmem %s0, %s288
      %s290 = smul.u32 2, %s21
      %p291 = scmp.lt.s32.totalorder %s20, 1
      %s292 = scalar_select %p291, %s20, 1
      %s293 = scalar_lea.vmem %s1, %s292
      %s294 = smul.u32 2, %s21
      %p295 = scmp.lt.s32.totalorder %s20, 1
      %s296 = scalar_select %p295, %s20, 1
      %p297 = scmp.lt.s32.totalorder %s294, 1
      %s298 = scalar_select %p297, %s294, 1
      %s299 = smul.addr %s296, 2
      %s300 = sadd.s32 %s298, %s299
      %s301 = smul.addr %s300, 8
      %s302 = scalar_lea.vmem %s2, %s301
      %s303 = smul.u32 2, %s21
      %s304 = smul.u32 2, %s21
      %p305 = scmp.lt.s32.totalorder %s20, 1
      %s306 = scalar_select %p305, %s20, 1
      %p307 = scmp.lt.s32.totalorder %s304, 1
      %s308 = scalar_select %p307, %s304, 1
      %s309 = smul.addr %s306, 2
      %s310 = sadd.s32 %s308, %s309
      %s311 = smul.addr %s310, 8
      %s312 = scalar_lea.vmem %s5, %s311
      %s313 = smul.u32 2, %s21
      %v314 = vld [vmem:[%s289] sm:$0xff]
      %v315 = vld [vmem:[%s289 + $0x8] sm:$0xff]
      %v316 = vld [vmem:[%s293] sm:$0x1]
      %v318 = vlaneseq
      %v319 = vshrl.u32 %v318, 7
      %v320 = vsub.s32 0, %v319
      %v321 = vrot.slane %v316, %v320
      %v323 = vmul.f32 %v314, %v321
      %v324 = vmul.f32 %v315, %v321
      %v325 = vld [vmem:[%s302] sm:$0xff]
      %v326 = vld [vmem:[%s302 + $0x8] sm:$0xff]
      %328 = vset.pattern.permute.xlu0 0
      %329 = vperm.xlu0 %328, %v325
      %v330 = vpop.permute.xlu0 %329
      %333 = vset.pattern.permute.xlu0 0
      %334 = vperm.xlu0 %333, %v326
      %v335 = vpop.permute.xlu0 %334
      %v337 = vmul.f32 %v323, %v330
      %v338 = vmul.f32 %v324, %v335
      %v339 = vld [vmem:[%s3] sm:$0x1]
      %v341 = vlaneseq
      %v342 = vshrl.u32 %v341, 7
      %v343 = vsub.s32 0, %v342
      %v344 = vrot.slane %v339, %v343
      %v346 = vmul.f32 %v337, %v344
      %v347 = vmul.f32 %v338, %v344
      %v348 = vld [vmem:[%s4] sm:$0x1]
      %v350 = vlaneseq
      %v351 = vshrl.u32 %v350, 7
      %v352 = vsub.s32 0, %v351
      %v353 = vrot.slane %v348, %v352
      %v355 = vadd.f32 %v346, %v353
      %v356 = vadd.f32 %v347, %v353
      %v357 = vmax.f32 %v355, 0.0
      %v358 = vmax.f32 %v356, 0.0
      %vm359 = vcmask 261120
      %360 = vst.msk [vmem:[%s312] sm:$0xff] %vm359, %v357
      %361 = vst.msk [vmem:[%s312 + $0x8] sm:$0xff] %vm359, %v358
      %s362 = smul.u32 2, %s21
      %p363 = scmp.lt.s32.totalorder %s20, 1
      %s364 = scalar_select %p363, %s20, 1
      %p365 = scmp.lt.s32.totalorder %s362, 1
      %s366 = scalar_select %p365, %s362, 1
      %s367 = smul.addr %s364, 2
      %s368 = sadd.s32 %s366, %s367
      %s369 = smul.addr %s368, 8
      %s370 = scalar_lea.vmem %s5, %s369
      // Predicated region
      $region41: #{generator_forward.30} parent=39 // pred_check
        %p371 = pneg %p172
      $region42: #{generator_forward.30} parent=39 // pred_check_branch
        %373 = sbr.rel (%p371) target = $region44
      $region43: #{generator_forward.30} parent=39 // pred_region
        %s374 = smul.u32 2, %s21
      $region44: #{generator_forward.30} parent=39 // pred_fallthru
        _
    $region40: #{generator_forward.30} parent=5 // pred_fallthru
      _
    %p375 = scmp.le.s32.totalorder 2, %s11
    // Predicated region
    $region45: #{generator_forward.30} parent=5 // pred_check
      %p376 = pneg %p375
    $region46: #{generator_forward.30} parent=5 // pred_check_branch
      %378 = sbr.rel (%p376) target = $region48
    $region47: #{generator_forward.30} parent=5 // pred_region
      %s379 = ssub.s32 %s11, 2
      // Predicated region
      $region49: #{generator_forward.30} parent=47 // pred_check
        %p380 = pneg %p178
      $region50: #{generator_forward.30} parent=47 // pred_check_branch
        %382 = sbr.rel (%p380) target = $region52
      $region51: #{generator_forward.30} parent=47 // pred_region
        %s383 = smul.u32 2, %s23
        %p384 = scmp.lt.s32.totalorder %s22, 1
        %s385 = scalar_select %p384, %s22, 1
        %p386 = scmp.lt.s32.totalorder %s383, 1
        %s387 = scalar_select %p386, %s383, 1
        %s388 = smul.addr %s385, 2
        %s389 = sadd.s32 %s387, %s388
        %s390 = smul.addr %s389, 8
        %s391 = scalar_lea.vmem %s5, %s390
      $region52: #{generator_forward.30} parent=47 // pred_fallthru
        _
    $region48: #{generator_forward.30} parent=5 // pred_fallthru
      _
  $region6: #{generator_forward.30} parent=0 // loop_footer
    %s15 = sadd.s32 1, %s11
  $region7: #{generator_forward.30} parent=0 // loop_footer_branch
    %10 = sbr.rel target = $region3
  $region8: #{generator_forward.30} parent=0 // loop_exit
    _

// kernel: generator_forward.31
$region0: #{generator_forward.31}
  #allocation0 [shape = 'u32[]', space=smem, size = 0x4, offset = 0x4, fixed_abs, tag = 'smem constant byte address 0x4 - core index']
  #allocation1 [shape = 'u32[144,128]{1,0:T(1,128)}', space=vmem, size = 0x12000, scoped, tag = 'internal scratch']
  %s0 = inlined_call_operand.vmem [shape: bf16[32,384], index: 0, kind: input, shape index: {}]
  %s1 = inlined_call_operand.vmem [shape: bf16[384,128], index: 1, kind: input, shape index: {}]
  %s2 = inlined_call_operand.vmem [shape: f32[1,128], index: 2, kind: input, shape index: {}]
  %s3 = inlined_call_operand.vmem [shape: f32[1,128], index: 3, kind: input, shape index: {}]
  %s4 = inlined_call_operand.vmem [shape: f32[32,128], index: 4, kind: output, shape index: {}]
  %s5 = sld [smem:[#allocation0]]
  $region26: #{generator_forward.31} parent=0
    _
  %s7 = ssub.s32 1, %s5
  %s8 = scalar_select 0, %s7, %s5
  // Predicated region
  $region2: #{generator_forward.31} parent=0 // pred_check
    _
  $region3: #{generator_forward.31} parent=0 // pred_check_branch
    %10 = sbr.rel (0) target = $region5
  $region4: #{generator_forward.31} parent=0 // pred_region
    _
  $region5: #{generator_forward.31} parent=0 // pred_fallthru
    _
  // Predicated region
  $region6: #{generator_forward.31} parent=0 // pred_check
    _
  $region7: #{generator_forward.31} parent=0 // pred_check_branch
    %12 = sbr.rel (0) target = $region9
  $region8: #{generator_forward.31} parent=0 // pred_region
    _
  $region9: #{generator_forward.31} parent=0 // pred_fallthru
    _
  // Predicated region
  $region10: #{generator_forward.31} parent=0 // pred_check
    _
  $region11: #{generator_forward.31} parent=0 // pred_check_branch
    %14 = sbr.rel (0) target = $region13
  $region12: #{generator_forward.31} parent=0 // pred_region
    _
  $region13: #{generator_forward.31} parent=0 // pred_fallthru
    _
  // Predicated region
  $region14: #{generator_forward.31} parent=0 // pred_check
    _
  $region15: #{generator_forward.31} parent=0 // pred_check_branch
    %16 = sbr.rel (0) target = $region17
  $region16: #{generator_forward.31} parent=0 // pred_region
    _
  $region17: #{generator_forward.31} parent=0 // pred_fallthru
    _
  %v18 = vld [vmem:[%s0] sm:$0xff]
  %v19 = vld [vmem:[%s0 + $0x8] sm:$0xf]
  %v20 = vld [vmem:[%s0 + $0xc] sm:$0xff]
  %v21 = vld [vmem:[%s0 + $0x14] sm:$0xf]
  %v22 = vld [vmem:[%s0 + $0x18] sm:$0xff]
  %v23 = vld [vmem:[%s0 + $0x20] sm:$0xf]
  %v24 = vld [vmem:[%s0 + $0x24] sm:$0xff]
  %v25 = vld [vmem:[%s0 + $0x2c] sm:$0xf]
  %v26 = vld [vmem:[%s1] sm:$0xf]
  %v27 = vld [vmem:[%s1 + $0x4] sm:$0xf]
  %v28 = vld [vmem:[%s1 + $0x8] sm:$0xf]
  %v29 = vld [vmem:[%s1 + $0xc] sm:$0xf]
  %v30 = vld [vmem:[%s1 + $0x10] sm:$0xf]
  %v31 = vld [vmem:[%s1 + $0x14] sm:$0xf]
  %v32 = vld [vmem:[%s1 + $0x18] sm:$0xf]
  %v33 = vld [vmem:[%s1 + $0x1c] sm:$0xf]
  %v34 = vld [vmem:[%s1 + $0x20] sm:$0xf]
  %v35 = vld [vmem:[%s1 + $0x24] sm:$0xf]
  %v36 = vld [vmem:[%s1 + $0x28] sm:$0xf]
  %v37 = vld [vmem:[%s1 + $0x2c] sm:$0xf]
  %v38 = vld [vmem:[%s1 + $0x30] sm:$0xf]
  %v39 = vld [vmem:[%s1 + $0x34] sm:$0xf]
  %v40 = vld [vmem:[%s1 + $0x38] sm:$0xf]
  %v41 = vld [vmem:[%s1 + $0x3c] sm:$0xf]
  %v42 = vld [vmem:[%s1 + $0x40] sm:$0xf]
  %v43 = vld [vmem:[%s1 + $0x44] sm:$0xf]
  %v44 = vld [vmem:[%s1 + $0x48] sm:$0xf]
  %v45 = vld [vmem:[%s1 + $0x4c] sm:$0xf]
  %v46 = vld [vmem:[%s1 + $0x50] sm:$0xf]
  %v47 = vld [vmem:[%s1 + $0x54] sm:$0xf]
  %v48 = vld [vmem:[%s1 + $0x58] sm:$0xf]
  %v49 = vld [vmem:[%s1 + $0x5c] sm:$0xf]
  %v50 = vld [vmem:[%s1 + $0x60] sm:$0xf]
  %v51 = vld [vmem:[%s1 + $0x64] sm:$0xf]
  %v52 = vld [vmem:[%s1 + $0x68] sm:$0xf]
  %v53 = vld [vmem:[%s1 + $0x6c] sm:$0xf]
  %v54 = vld [vmem:[%s1 + $0x70] sm:$0xf]
  %v55 = vld [vmem:[%s1 + $0x74] sm:$0xf]
  %v56 = vld [vmem:[%s1 + $0x78] sm:$0xf]
  %v57 = vld [vmem:[%s1 + $0x7c] sm:$0xf]
  %v58 = vld [vmem:[%s1 + $0x80] sm:$0xf]
  %v59 = vld [vmem:[%s1 + $0x84] sm:$0xf]
  %v60 = vld [vmem:[%s1 + $0x88] sm:$0xf]
  %v61 = vld [vmem:[%s1 + $0x8c] sm:$0xf]
  %v62 = vld [vmem:[%s1 + $0x90] sm:$0xf]
  %v63 = vld [vmem:[%s1 + $0x94] sm:$0xf]
  %v64 = vld [vmem:[%s1 + $0x98] sm:$0xf]
  %v65 = vld [vmem:[%s1 + $0x9c] sm:$0xf]
  %v66 = vld [vmem:[%s1 + $0xa0] sm:$0xf]
  %v67 = vld [vmem:[%s1 + $0xa4] sm:$0xf]
  %v68 = vld [vmem:[%s1 + $0xa8] sm:$0xf]
  %v69 = vld [vmem:[%s1 + $0xac] sm:$0xf]
  %v70 = vld [vmem:[%s1 + $0xb0] sm:$0xf]
  %v71 = vld [vmem:[%s1 + $0xb4] sm:$0xf]
  %v72 = vld [vmem:[%s1 + $0xb8] sm:$0xf]
  %v73 = vld [vmem:[%s1 + $0xbc] sm:$0xf]
  %v82 = vunpack.c.l.b16 %v18
  %v83 = vunpack.c.h.b16 %v18
  %v84 = vunpack.c.l.b16 %v19
  %v85 = vunpack.c.l.b16 %v20
  %v86 = vunpack.c.h.b16 %v20
  %v87 = vunpack.c.l.b16 %v21
  %v88 = vunpack.c.l.b16 %v22
  %v89 = vunpack.c.h.b16 %v22
  %v90 = vunpack.c.l.b16 %v23
  %v91 = vunpack.c.l.b16 %v24
  %v92 = vunpack.c.h.b16 %v24
  %v93 = vunpack.c.l.b16 %v25
  %v94 = vpack.c.b16 %v85, %v82
  %v95 = vpack.c.b16 %v86, %v83
  %v96 = vpack.c.b16 %v87, %v84
  %v97 = vpack.c.b16 %v91, %v88
  %v98 = vpack.c.b16 %v92, %v89
  %v99 = vpack.c.b16 %v93, %v90
  %v154 = vunpack.c.l.b16 %v26
  %v155 = vunpack.c.l.b16 %v27
  %v156 = vunpack.c.l.b16 %v28
  %v157 = vunpack.c.l.b16 %v29
  %v158 = vunpack.c.l.b16 %v30
  %v159 = vunpack.c.l.b16 %v31
  %v160 = vunpack.c.l.b16 %v32
  %v161 = vunpack.c.l.b16 %v33
  %v162 = vunpack.c.l.b16 %v34
  %v163 = vunpack.c.l.b16 %v35
  %v164 = vunpack.c.l.b16 %v36
  %v165 = vunpack.c.l.b16 %v37
  %v166 = vunpack.c.l.b16 %v38
  %v167 = vunpack.c.l.b16 %v39
  %v168 = vunpack.c.l.b16 %v40
  %v169 = vunpack.c.l.b16 %v41
  %v170 = vunpack.c.l.b16 %v42
  %v171 = vunpack.c.l.b16 %v43
  %v172 = vunpack.c.l.b16 %v44
  %v173 = vunpack.c.l.b16 %v45
  %v174 = vunpack.c.l.b16 %v46
  %v175 = vunpack.c.l.b16 %v47
  %v176 = vunpack.c.l.b16 %v48
  %v177 = vunpack.c.l.b16 %v49
  %v178 = vunpack.c.l.b16 %v50
  %v179 = vunpack.c.l.b16 %v51
  %v180 = vunpack.c.l.b16 %v52
  %v181 = vunpack.c.l.b16 %v53
  %v182 = vunpack.c.l.b16 %v54
  %v183 = vunpack.c.l.b16 %v55
  %v184 = vunpack.c.l.b16 %v56
  %v185 = vunpack.c.l.b16 %v57
  %v186 = vunpack.c.l.b16 %v58
  %v187 = vunpack.c.l.b16 %v59
  %v188 = vunpack.c.l.b16 %v60
  %v189 = vunpack.c.l.b16 %v61
  %v190 = vunpack.c.l.b16 %v62
  %v191 = vunpack.c.l.b16 %v63
  %v192 = vunpack.c.l.b16 %v64
  %v193 = vunpack.c.l.b16 %v65
  %v194 = vunpack.c.l.b16 %v66
  %v195 = vunpack.c.l.b16 %v67
  %v196 = vunpack.c.l.b16 %v68
  %v197 = vunpack.c.l.b16 %v69
  %v198 = vunpack.c.l.b16 %v70
  %v199 = vunpack.c.l.b16 %v71
  %v200 = vunpack.c.l.b16 %v72
  %v201 = vunpack.c.l.b16 %v73
  %v202 = vpack.c.b16 %v155, %v154
  %v203 = vpack.c.b16 %v157, %v156
  %v204 = vpack.c.b16 %v159, %v158
  %v205 = vpack.c.b16 %v161, %v160
  %v206 = vpack.c.b16 %v163, %v162
  %v207 = vpack.c.b16 %v165, %v164
  %v208 = vpack.c.b16 %v167, %v166
  %v209 = vpack.c.b16 %v169, %v168
  %v210 = vpack.c.b16 %v171, %v170
  %v211 = vpack.c.b16 %v173, %v172
  %v212 = vpack.c.b16 %v175, %v174
  %v213 = vpack.c.b16 %v177, %v176
  %v214 = vpack.c.b16 %v179, %v178
  %v215 = vpack.c.b16 %v181, %v180
  %v216 = vpack.c.b16 %v183, %v182
  %v217 = vpack.c.b16 %v185, %v184
  %v218 = vpack.c.b16 %v187, %v186
  %v219 = vpack.c.b16 %v189, %v188
  %v220 = vpack.c.b16 %v191, %v190
  %v221 = vpack.c.b16 %v193, %v192
  %v222 = vpack.c.b16 %v195, %v194
  %v223 = vpack.c.b16 %v197, %v196
  %v224 = vpack.c.b16 %v199, %v198
  %v225 = vpack.c.b16 %v201, %v200
  %250 = vmatprep.subr.bf16.mxu0 0
  %251 = vmatpush1.bf16.msra.mxu0 %v202
  %252 = vmatprep.subr.bf16.mxu0 0
  %253 = vmatpush1.bf16.msra.mxu0 %v203
  %254 = vmatprep.subr.bf16.mxu0 0
  %255 = vmatpush1.bf16.msra.mxu0 %v204
  %256 = vmatprep.subr.bf16.mxu0 0
  %257 = vmatpush1.bf16.msra.mxu0 %v205
  %258 = vmatprep.subr.bf16.mxu0 0
  %259 = vmatpush1.bf16.msra.mxu0 %v206
  %260 = vmatprep.subr.bf16.mxu0 0
  %261 = vmatpush1.bf16.msra.mxu0 %v207
  %262 = vmatprep.subr.bf16.mxu0 0
  %263 = vmatpush1.bf16.msra.mxu0 %v208
  %264 = vmatprep.subr.bf16.mxu0 0
  %265 = vmatpush1.bf16.msra.mxu0 %v209
  %266 = vmatprep.subr.bf16.mxu0 0
  %267 = vmatpush1.bf16.msra.mxu0 %v210
  %268 = vmatprep.subr.bf16.mxu0 0
  %269 = vmatpush1.bf16.msra.mxu0 %v211
  %270 = vmatprep.subr.bf16.mxu0 0
  %271 = vmatpush1.bf16.msra.mxu0 %v212
  %272 = vmatprep.subr.bf16.mxu0 0
  %273 = vmatpush1.bf16.msra.mxu0 %v213
  %274 = vmatprep.subr.bf16.mxu0 0
  %275 = vmatpush1.bf16.msra.mxu0 %v214
  %276 = vmatprep.subr.bf16.mxu0 0
  %277 = vmatpush1.bf16.msra.mxu0 %v215
  %278 = vmatprep.subr.bf16.mxu0 0
  %279 = vmatpush1.bf16.msra.mxu0 %v216
  %280 = vmatprep.subr.bf16.mxu0 0
  %281 = vmatpush1.bf16.msra.mxu0 %v217
  %282 = vmatprep.mubr.bf16.mxu0 %v95
  %283 = vmatmul.mubr.bf16.gmra.mrb[0].mxu0 %v94
  %v284 = vpop.f32.mrb[0].mxu0
  %v285 = vadd.f32 0.0, %v284
  %v286 = vpop.f32.mrb[0].mxu0
  %v287 = vpop.f32.mrb[0].mxu0
  %v288 = vadd.f32 0.0, %v287
  %v289 = vpop.f32.mrb[0].mxu0
  %290 = vmatprep.mubr.bf16.mxu0 %v98
  %291 = vmatmul.mubr.bf16.gmra.mrb[0].mxu0 %v97
  %v292 = vpop.f32.mrb[0].mxu0
  %v293 = vadd.f32 0.0, %v292
  %v294 = vpop.f32.mrb[0].mxu0
  %v295 = vpop.f32.mrb[0].mxu0
  %v296 = vadd.f32 0.0, %v295
  %v297 = vpop.f32.mrb[0].mxu0
  %298 = vdwg.mxu0
  %299 = vmatprep.subr.bf16.mxu0 0
  %300 = vmatpush1.bf16.msra.mxu0 %v218
  %301 = vmatprep.subr.bf16.mxu0 0
  %302 = vmatpush1.bf16.msra.mxu0 %v219
  %303 = vmatprep.subr.bf16.mxu0 0
  %304 = vmatpush1.bf16.msra.mxu0 %v220
  %305 = vmatprep.subr.bf16.mxu0 0
  %306 = vmatpush1.bf16.msra.mxu0 %v221
  %307 = vmatprep.subr.bf16.mxu0 0
  %308 = vmatpush1.bf16.msra.mxu0 %v222
  %309 = vmatprep.subr.bf16.mxu0 0
  %310 = vmatpush1.bf16.msra.mxu0 %v223
  %311 = vmatprep.subr.bf16.mxu0 0
  %312 = vmatpush1.bf16.msra.mxu0 %v224
  %313 = vmatprep.subr.bf16.mxu0 0
  %314 = vmatpush1.bf16.msra.mxu0 %v225
  %315 = vmatprep.subr.bf16.mxu0 0
  %316 = vmatpush1.bf16.msra.mxu0 0
  %317 = vmatprep.subr.bf16.mxu0 0
  %318 = vmatpush1.bf16.msra.mxu0 0
  %319 = vmatprep.subr.bf16.mxu0 0
  %320 = vmatpush1.bf16.msra.mxu0 0
  %321 = vmatprep.subr.bf16.mxu0 0
  %322 = vmatpush1.bf16.msra.mxu0 0
  %323 = vmatprep.subr.bf16.mxu0 0
  %324 = vmatpush1.bf16.msra.mxu0 0
  %325 = vmatprep.subr.bf16.mxu0 0
  %326 = vmatpush1.bf16.msra.mxu0 0
  %327 = vmatprep.subr.bf16.mxu0 0
  %328 = vmatpush1.bf16.msra.mxu0 0
  %329 = vmatprep.subr.bf16.mxu0 0
  %330 = vmatpush1.bf16.msra.mxu0 0
  %331 = vmatprep.mubr.bf16.mxu0 0
  %332 = vmatmul.mubr.bf16.gmra.mrb[0].mxu0 %v96
  %v333 = vpop.f32.mrb[0].mxu0
  %v334 = vadd.f32 %v285, %v333
  %v335 = vpop.f32.mrb[0].mxu0
  %v336 = vpop.f32.mrb[0].mxu0
  %v337 = vadd.f32 %v288, %v336
  %v338 = vpop.f32.mrb[0].mxu0
  %339 = vmatprep.mubr.bf16.mxu0 0
  %340 = vmatmul.mubr.bf16.gmra.mrb[0].mxu0 %v99
  %v341 = vpop.f32.mrb[0].mxu0
  %v342 = vadd.f32 %v293, %v341
  %v343 = vpop.f32.mrb[0].mxu0
  %v344 = vpop.f32.mrb[0].mxu0
  %v345 = vadd.f32 %v296, %v344
  %v346 = vpop.f32.mrb[0].mxu0
  %347 = vdwg.mxu0
  %v348 = vld [vmem:[%s2] sm:$0x1]
  %v350 = vlaneseq
  %v351 = vshrl.u32 %v350, 7
  %v352 = vsub.s32 0, %v351
  %v353 = vrot.slane %v348, %v352
  %v355 = vmul.f32 %v334, %v353
  %v356 = vmul.f32 %v337, %v353
  %v357 = vmul.f32 %v342, %v353
  %v358 = vmul.f32 %v345, %v353
  %v359 = vld [vmem:[%s3] sm:$0x1]
  %v361 = vlaneseq
  %v362 = vshrl.u32 %v361, 7
  %v363 = vsub.s32 0, %v362
  %v364 = vrot.slane %v359, %v363
  %v366 = vadd.f32 %v355, %v364
  %v367 = vadd.f32 %v356, %v364
  %v368 = vadd.f32 %v357, %v364
  %v369 = vadd.f32 %v358, %v364
  %370 = vst [vmem:[%s4] sm:$0xff] %v366
  %371 = vst [vmem:[%s4 + $0x8] sm:$0xff] %v367
  %372 = vst [vmem:[%s4 + $0x10] sm:$0xff] %v368
  %373 = vst [vmem:[%s4 + $0x18] sm:$0xff] %v369
  // Predicated region
  $region18: #{generator_forward.31} parent=0 // pred_check
    _
  $region19: #{generator_forward.31} parent=0 // pred_check_branch
    %375 = sbr.rel (0) target = $region21
  $region20: #{generator_forward.31} parent=0 // pred_region
    _
  $region21: #{generator_forward.31} parent=0 // pred_fallthru
    _
  // Predicated region
  $region22: #{generator_forward.31} parent=0 // pred_check
    _
  $region23: #{generator_forward.31} parent=0 // pred_check_branch
    %377 = sbr.rel (0) target = $region25
  $region24: #{generator_forward.31} parent=0 // pred_region
    _
  $region25: #{generator_forward.31} parent=0 // pred_fallthru
    _

// kernel: generator_forward.34
$region0: #{generator_forward.34}
  #allocation0 [shape = 'u32[]', space=smem, size = 0x4, offset = 0x4, fixed_abs, tag = 'smem constant byte address 0x4 - core index']
  #allocation1 [shape = 'u32[144,128]{1,0:T(1,128)}', space=vmem, size = 0x12000, scoped, tag = 'internal scratch']
  %s0 = inlined_call_operand.vmem [shape: f32[32,32], index: 0, kind: input, shape index: {}]
  %s1 = inlined_call_operand.vmem [shape: f32[1,32], index: 1, kind: input, shape index: {}]
  %s2 = inlined_call_operand.vmem [shape: f32[1,32], index: 2, kind: input, shape index: {}]
  %s3 = inlined_call_operand.vmem [shape: f32[32,32], index: 3, kind: input, shape index: {}]
  %s4 = inlined_call_operand.vmem [shape: f32[32,32], index: 4, kind: output, shape index: {}]
  %s5 = sld [smem:[#allocation0]]
  $region26: #{generator_forward.34} parent=0
    _
  %s7 = ssub.s32 1, %s5
  %s8 = scalar_select 0, %s7, %s5
  // Predicated region
  $region2: #{generator_forward.34} parent=0 // pred_check
    _
  $region3: #{generator_forward.34} parent=0 // pred_check_branch
    %10 = sbr.rel (0) target = $region5
  $region4: #{generator_forward.34} parent=0 // pred_region
    _
  $region5: #{generator_forward.34} parent=0 // pred_fallthru
    _
  // Predicated region
  $region6: #{generator_forward.34} parent=0 // pred_check
    _
  $region7: #{generator_forward.34} parent=0 // pred_check_branch
    %12 = sbr.rel (0) target = $region9
  $region8: #{generator_forward.34} parent=0 // pred_region
    _
  $region9: #{generator_forward.34} parent=0 // pred_fallthru
    _
  // Predicated region
  $region10: #{generator_forward.34} parent=0 // pred_check
    _
  $region11: #{generator_forward.34} parent=0 // pred_check_branch
    %14 = sbr.rel (0) target = $region13
  $region12: #{generator_forward.34} parent=0 // pred_region
    _
  $region13: #{generator_forward.34} parent=0 // pred_fallthru
    _
  // Predicated region
  $region14: #{generator_forward.34} parent=0 // pred_check
    _
  $region15: #{generator_forward.34} parent=0 // pred_check_branch
    %16 = sbr.rel (0) target = $region17
  $region16: #{generator_forward.34} parent=0 // pred_region
    _
  $region17: #{generator_forward.34} parent=0 // pred_fallthru
    _
  %v17 = vld [vmem:[%s0] sm:$0xff]
  %v18 = vld [vmem:[%s0 + $0x8] sm:$0xff]
  %v19 = vld [vmem:[%s0 + $0x10] sm:$0xff]
  %v20 = vld [vmem:[%s0 + $0x18] sm:$0xff]
  %v21 = vld [vmem:[%s1] sm:$0x1]
  %v23 = vlaneseq
  %v24 = vshrl.u32 %v23, 7
  %v25 = vsub.s32 0, %v24
  %v26 = vrot.slane %v21, %v25
  %v28 = vmul.f32 %v17, %v26
  %v29 = vmul.f32 %v18, %v26
  %v30 = vmul.f32 %v19, %v26
  %v31 = vmul.f32 %v20, %v26
  %v32 = vld [vmem:[%s2] sm:$0x1]
  %v34 = vlaneseq
  %v35 = vshrl.u32 %v34, 7
  %v36 = vsub.s32 0, %v35
  %v37 = vrot.slane %v32, %v36
  %v39 = vadd.f32 %v28, %v37
  %v40 = vadd.f32 %v29, %v37
  %v41 = vadd.f32 %v30, %v37
  %v42 = vadd.f32 %v31, %v37
  %v43 = vld [vmem:[%s3] sm:$0xff]
  %v44 = vld [vmem:[%s3 + $0x8] sm:$0xff]
  %v45 = vld [vmem:[%s3 + $0x10] sm:$0xff]
  %v46 = vld [vmem:[%s3 + $0x18] sm:$0xff]
  %v47 = vadd.f32 %v39, %v43
  %v48 = vadd.f32 %v40, %v44
  %v49 = vadd.f32 %v41, %v45
  %v50 = vadd.f32 %v42, %v46
  %vm51 = vcmask 261120
  %52 = vst.msk [vmem:[%s4] sm:$0xff] %vm51, %v47
  %53 = vst.msk [vmem:[%s4 + $0x8] sm:$0xff] %vm51, %v48
  %54 = vst.msk [vmem:[%s4 + $0x10] sm:$0xff] %vm51, %v49
  %55 = vst.msk [vmem:[%s4 + $0x18] sm:$0xff] %vm51, %v50
  // Predicated region
  $region18: #{generator_forward.34} parent=0 // pred_check
    _
  $region19: #{generator_forward.34} parent=0 // pred_check_branch
    %57 = sbr.rel (0) target = $region21
  $region20: #{generator_forward.34} parent=0 // pred_region
    _
  $region21: #{generator_forward.34} parent=0 // pred_fallthru
    _
  // Predicated region
  $region22: #{generator_forward.34} parent=0 // pred_check
    _
  $region23: #{generator_forward.34} parent=0 // pred_check_branch
    %59 = sbr.rel (0) target = $region25
  $region24: #{generator_forward.34} parent=0 // pred_region
    _
  $region25: #{generator_forward.34} parent=0 // pred_fallthru
    _

// kernel: generator_forward.32
$region0: #{generator_forward.32}
  #allocation0 [shape = 'u32[]', space=smem, size = 0x4, offset = 0x4, fixed_abs, tag = 'smem constant byte address 0x4 - core index']
  #allocation1 [shape = 'u32[144,128]{1,0:T(1,128)}', space=vmem, size = 0x12000, scoped, tag = 'internal scratch']
  %s0 = inlined_call_operand.vmem [shape: f32[32,32], index: 0, kind: input, shape index: {}]
  %s1 = inlined_call_operand.vmem [shape: f32[1,32], index: 1, kind: input, shape index: {}]
  %s2 = inlined_call_operand.vmem [shape: f32[1,32], index: 2, kind: input, shape index: {}]
  %s3 = inlined_call_operand.vmem [shape: f32[32,32], index: 3, kind: output, shape index: {}]
  %s4 = sld [smem:[#allocation0]]
  $region22: #{generator_forward.32} parent=0
    _
  %s6 = ssub.s32 1, %s4
  %s7 = scalar_select 0, %s6, %s4
  // Predicated region
  $region2: #{generator_forward.32} parent=0 // pred_check
    _
  $region3: #{generator_forward.32} parent=0 // pred_check_branch
    %9 = sbr.rel (0) target = $region5
  $region4: #{generator_forward.32} parent=0 // pred_region
    _
  $region5: #{generator_forward.32} parent=0 // pred_fallthru
    _
  // Predicated region
  $region6: #{generator_forward.32} parent=0 // pred_check
    _
  $region7: #{generator_forward.32} parent=0 // pred_check_branch
    %11 = sbr.rel (0) target = $region9
  $region8: #{generator_forward.32} parent=0 // pred_region
    _
  $region9: #{generator_forward.32} parent=0 // pred_fallthru
    _
  // Predicated region
  $region10: #{generator_forward.32} parent=0 // pred_check
    _
  $region11: #{generator_forward.32} parent=0 // pred_check_branch
    %13 = sbr.rel (0) target = $region13
  $region12: #{generator_forward.32} parent=0 // pred_region
    _
  $region13: #{generator_forward.32} parent=0 // pred_fallthru
    _
  %v14 = vld [vmem:[%s0] sm:$0xff]
  %v15 = vld [vmem:[%s0 + $0x8] sm:$0xff]
  %v16 = vld [vmem:[%s0 + $0x10] sm:$0xff]
  %v17 = vld [vmem:[%s0 + $0x18] sm:$0xff]
  %v18 = vld [vmem:[%s1] sm:$0x1]
  %v20 = vlaneseq
  %v21 = vshrl.u32 %v20, 7
  %v22 = vsub.s32 0, %v21
  %v23 = vrot.slane %v18, %v22
  %v25 = vmul.f32 %v14, %v23
  %v26 = vmul.f32 %v15, %v23
  %v27 = vmul.f32 %v16, %v23
  %v28 = vmul.f32 %v17, %v23
  %v29 = vld [vmem:[%s2] sm:$0x1]
  %v31 = vlaneseq
  %v32 = vshrl.u32 %v31, 7
  %v33 = vsub.s32 0, %v32
  %v34 = vrot.slane %v29, %v33
  %v36 = vadd.f32 %v25, %v34
  %v37 = vadd.f32 %v26, %v34
  %v38 = vadd.f32 %v27, %v34
  %v39 = vadd.f32 %v28, %v34
  %v40 = vmax.f32 %v36, 0.0
  %v41 = vmax.f32 %v37, 0.0
  %v42 = vmax.f32 %v38, 0.0
  %v43 = vmax.f32 %v39, 0.0
  %vm44 = vcmask 261120
  %45 = vst.msk [vmem:[%s3] sm:$0xff] %vm44, %v40
  %46 = vst.msk [vmem:[%s3 + $0x8] sm:$0xff] %vm44, %v41
  %47 = vst.msk [vmem:[%s3 + $0x10] sm:$0xff] %vm44, %v42
  %48 = vst.msk [vmem:[%s3 + $0x18] sm:$0xff] %vm44, %v43
  // Predicated region
  $region14: #{generator_forward.32} parent=0 // pred_check
    _
  $region15: #{generator_forward.32} parent=0 // pred_check_branch
    %50 = sbr.rel (0) target = $region17
  $region16: #{generator_forward.32} parent=0 // pred_region
    _
  $region17: #{generator_forward.32} parent=0 // pred_fallthru
    _
  // Predicated region
  $region18: #{generator_forward.32} parent=0 // pred_check
    _
  $region19: #{generator_forward.32} parent=0 // pred_check_branch
    %52 = sbr.rel (0) target = $region21
  $region20: #{generator_forward.32} parent=0 // pred_region
    _
  $region21: #{generator_forward.32} parent=0 // pred_fallthru
    _

// kernel: generator_forward.40
$region0: #{generator_forward.40}
  #allocation0 [shape = 'u32[]', space=smem, size = 0x4, offset = 0x4, fixed_abs, tag = 'smem constant byte address 0x4 - core index']
  #allocation1 [shape = 'u32[144,128]{1,0:T(1,128)}', space=vmem, size = 0x12000, scoped, tag = 'internal scratch']
  %s0 = inlined_call_operand.vmem [shape: bf16[32,128], index: 0, kind: input, shape index: {}]
  %s1 = inlined_call_operand.vmem [shape: bf16[128,128], index: 1, kind: input, shape index: {}]
  %s2 = inlined_call_operand.vmem [shape: f32[1,128], index: 2, kind: input, shape index: {}]
  %s3 = inlined_call_operand.vmem [shape: f32[1,128], index: 3, kind: input, shape index: {}]
  %s4 = inlined_call_operand.vmem [shape: f32[32,128], index: 4, kind: output, shape index: {}]
  %s5 = sld [smem:[#allocation0]]
  $region26: #{generator_forward.40} parent=0
    _
  %s7 = ssub.s32 1, %s5
  %s8 = scalar_select 0, %s7, %s5
  // Predicated region
  $region2: #{generator_forward.40} parent=0 // pred_check
    _
  $region3: #{generator_forward.40} parent=0 // pred_check_branch
    %10 = sbr.rel (0) target = $region5
  $region4: #{generator_forward.40} parent=0 // pred_region
    _
  $region5: #{generator_forward.40} parent=0 // pred_fallthru
    _
  // Predicated region
  $region6: #{generator_forward.40} parent=0 // pred_check
    _
  $region7: #{generator_forward.40} parent=0 // pred_check_branch
    %12 = sbr.rel (0) target = $region9
  $region8: #{generator_forward.40} parent=0 // pred_region
    _
  $region9: #{generator_forward.40} parent=0 // pred_fallthru
    _
  // Predicated region
  $region10: #{generator_forward.40} parent=0 // pred_check
    _
  $region11: #{generator_forward.40} parent=0 // pred_check_branch
    %14 = sbr.rel (0) target = $region13
  $region12: #{generator_forward.40} parent=0 // pred_region
    _
  $region13: #{generator_forward.40} parent=0 // pred_fallthru
    _
  // Predicated region
  $region14: #{generator_forward.40} parent=0 // pred_check
    _
  $region15: #{generator_forward.40} parent=0 // pred_check_branch
    %16 = sbr.rel (0) target = $region17
  $region16: #{generator_forward.40} parent=0 // pred_region
    _
  $region17: #{generator_forward.40} parent=0 // pred_fallthru
    _
  %v18 = vld [vmem:[%s0] sm:$0xf]
  %v19 = vld [vmem:[%s0 + $0x4] sm:$0xf]
  %v20 = vld [vmem:[%s0 + $0x8] sm:$0xf]
  %v21 = vld [vmem:[%s0 + $0xc] sm:$0xf]
  %v22 = vld [vmem:[%s1] sm:$0xf]
  %v23 = vld [vmem:[%s1 + $0x4] sm:$0xf]
  %v24 = vld [vmem:[%s1 + $0x8] sm:$0xf]
  %v25 = vld [vmem:[%s1 + $0xc] sm:$0xf]
  %v26 = vld [vmem:[%s1 + $0x10] sm:$0xf]
  %v27 = vld [vmem:[%s1 + $0x14] sm:$0xf]
  %v28 = vld [vmem:[%s1 + $0x18] sm:$0xf]
  %v29 = vld [vmem:[%s1 + $0x1c] sm:$0xf]
  %v30 = vld [vmem:[%s1 + $0x20] sm:$0xf]
  %v31 = vld [vmem:[%s1 + $0x24] sm:$0xf]
  %v32 = vld [vmem:[%s1 + $0x28] sm:$0xf]
  %v33 = vld [vmem:[%s1 + $0x2c] sm:$0xf]
  %v34 = vld [vmem:[%s1 + $0x30] sm:$0xf]
  %v35 = vld [vmem:[%s1 + $0x34] sm:$0xf]
  %v36 = vld [vmem:[%s1 + $0x38] sm:$0xf]
  %v37 = vld [vmem:[%s1 + $0x3c] sm:$0xf]
  %v42 = vunpack.c.l.b16 %v18
  %v43 = vunpack.c.l.b16 %v19
  %v44 = vunpack.c.l.b16 %v20
  %v45 = vunpack.c.l.b16 %v21
  %v46 = vpack.c.b16 %v43, %v42
  %v47 = vpack.c.b16 %v45, %v44
  %v66 = vunpack.c.l.b16 %v22
  %v67 = vunpack.c.l.b16 %v23
  %v68 = vunpack.c.l.b16 %v24
  %v69 = vunpack.c.l.b16 %v25
  %v70 = vunpack.c.l.b16 %v26
  %v71 = vunpack.c.l.b16 %v27
  %v72 = vunpack.c.l.b16 %v28
  %v73 = vunpack.c.l.b16 %v29
  %v74 = vunpack.c.l.b16 %v30
  %v75 = vunpack.c.l.b16 %v31
  %v76 = vunpack.c.l.b16 %v32
  %v77 = vunpack.c.l.b16 %v33
  %v78 = vunpack.c.l.b16 %v34
  %v79 = vunpack.c.l.b16 %v35
  %v80 = vunpack.c.l.b16 %v36
  %v81 = vunpack.c.l.b16 %v37
  %v82 = vpack.c.b16 %v67, %v66
  %v83 = vpack.c.b16 %v69, %v68
  %v84 = vpack.c.b16 %v71, %v70
  %v85 = vpack.c.b16 %v73, %v72
  %v86 = vpack.c.b16 %v75, %v74
  %v87 = vpack.c.b16 %v77, %v76
  %v88 = vpack.c.b16 %v79, %v78
  %v89 = vpack.c.b16 %v81, %v80
  %98 = vmatprep.subr.bf16.mxu0 0
  %99 = vmatpush1.bf16.msra.mxu0 %v82
  %100 = vmatprep.subr.bf16.mxu0 0
  %101 = vmatpush1.bf16.msra.mxu0 %v83
  %102 = vmatprep.subr.bf16.mxu0 0
  %103 = vmatpush1.bf16.msra.mxu0 %v84
  %104 = vmatprep.subr.bf16.mxu0 0
  %105 = vmatpush1.bf16.msra.mxu0 %v85
  %106 = vmatprep.subr.bf16.mxu0 0
  %107 = vmatpush1.bf16.msra.mxu0 %v86
  %108 = vmatprep.subr.bf16.mxu0 0
  %109 = vmatpush1.bf16.msra.mxu0 %v87
  %110 = vmatprep.subr.bf16.mxu0 0
  %111 = vmatpush1.bf16.msra.mxu0 %v88
  %112 = vmatprep.subr.bf16.mxu0 0
  %113 = vmatpush1.bf16.msra.mxu0 %v89
  %114 = vmatprep.subr.bf16.mxu0 0
  %115 = vmatpush1.bf16.msra.mxu0 0
  %116 = vmatprep.subr.bf16.mxu0 0
  %117 = vmatpush1.bf16.msra.mxu0 0
  %118 = vmatprep.subr.bf16.mxu0 0
  %119 = vmatpush1.bf16.msra.mxu0 0
  %120 = vmatprep.subr.bf16.mxu0 0
  %121 = vmatpush1.bf16.msra.mxu0 0
  %122 = vmatprep.subr.bf16.mxu0 0
  %123 = vmatpush1.bf16.msra.mxu0 0
  %124 = vmatprep.subr.bf16.mxu0 0
  %125 = vmatpush1.bf16.msra.mxu0 0
  %126 = vmatprep.subr.bf16.mxu0 0
  %127 = vmatpush1.bf16.msra.mxu0 0
  %128 = vmatprep.subr.bf16.mxu0 0
  %129 = vmatpush1.bf16.msra.mxu0 0
  %130 = vmatprep.mubr.bf16.mxu0 0
  %131 = vmatmul.mubr.bf16.gmra.mrb[0].mxu0 %v46
  %v132 = vpop.f32.mrb[0].mxu0
  %v133 = vadd.f32 0.0, %v132
  %v134 = vpop.f32.mrb[0].mxu0
  %v135 = vpop.f32.mrb[0].mxu0
  %v136 = vadd.f32 0.0, %v135
  %v137 = vpop.f32.mrb[0].mxu0
  %138 = vmatprep.mubr.bf16.mxu0 0
  %139 = vmatmul.mubr.bf16.gmra.mrb[0].mxu0 %v47
  %v140 = vpop.f32.mrb[0].mxu0
  %v141 = vadd.f32 0.0, %v140
  %v142 = vpop.f32.mrb[0].mxu0
  %v143 = vpop.f32.mrb[0].mxu0
  %v144 = vadd.f32 0.0, %v143
  %v145 = vpop.f32.mrb[0].mxu0
  %146 = vdwg.mxu0
  %v147 = vld [vmem:[%s2] sm:$0x1]
  %v149 = vlaneseq
  %v150 = vshrl.u32 %v149, 7
  %v151 = vsub.s32 0, %v150
  %v152 = vrot.slane %v147, %v151
  %v154 = vmul.f32 %v133, %v152
  %v155 = vmul.f32 %v136, %v152
  %v156 = vmul.f32 %v141, %v152
  %v157 = vmul.f32 %v144, %v152
  %v158 = vld [vmem:[%s3] sm:$0x1]
  %v160 = vlaneseq
  %v161 = vshrl.u32 %v160, 7
  %v162 = vsub.s32 0, %v161
  %v163 = vrot.slane %v158, %v162
  %v165 = vadd.f32 %v154, %v163
  %v166 = vadd.f32 %v155, %v163
  %v167 = vadd.f32 %v156, %v163
  %v168 = vadd.f32 %v157, %v163
  %169 = vst [vmem:[%s4] sm:$0xff] %v165
  %170 = vst [vmem:[%s4 + $0x8] sm:$0xff] %v166
  %171 = vst [vmem:[%s4 + $0x10] sm:$0xff] %v167
  %172 = vst [vmem:[%s4 + $0x18] sm:$0xff] %v168
  // Predicated region
  $region18: #{generator_forward.40} parent=0 // pred_check
    _
  $region19: #{generator_forward.40} parent=0 // pred_check_branch
    %174 = sbr.rel (0) target = $region21
  $region20: #{generator_forward.40} parent=0 // pred_region
    _
  $region21: #{generator_forward.40} parent=0 // pred_fallthru
    _
  // Predicated region
  $region22: #{generator_forward.40} parent=0 // pred_check
    _
  $region23: #{generator_forward.40} parent=0 // pred_check_branch
    %176 = sbr.rel (0) target = $region25
  $region24: #{generator_forward.40} parent=0 // pred_region
    _
  $region25: #{generator_forward.40} parent=0 // pred_fallthru
    _

// kernel: generator_forward.49
$region0: #{generator_forward.49}
  #allocation0 [shape = 'u32[]', space=smem, size = 0x4, offset = 0x4, fixed_abs, tag = 'smem constant byte address 0x4 - core index']
  #allocation1 [shape = 'u32[144,128]{1,0:T(1,128)}', space=vmem, size = 0x12000, scoped, tag = 'internal scratch']
  %s0 = inlined_call_operand.vmem [shape: bf16[512,512], index: 0, kind: input, shape index: {}]
  %s1 = inlined_call_operand.vmem [shape: bf16[512,128], index: 1, kind: input, shape index: {}]
  %s2 = inlined_call_operand.vmem [shape: f32[1,128], index: 2, kind: input, shape index: {}]
  %s3 = inlined_call_operand.vmem [shape: f32[1,128], index: 3, kind: input, shape index: {}]
  %s4 = inlined_call_operand.vmem [shape: f32[512,128], index: 4, kind: output, shape index: {}]
  %s5 = sld [smem:[#allocation0]]
  $region26: #{generator_forward.49} parent=0
    _
  %s7 = ssub.s32 1, %s5
  %s8 = scalar_select 0, %s7, %s5
  // Predicated region
  $region2: #{generator_forward.49} parent=0 // pred_check
    _
  $region3: #{generator_forward.49} parent=0 // pred_check_branch
    %10 = sbr.rel (0) target = $region5
  $region4: #{generator_forward.49} parent=0 // pred_region
    _
  $region5: #{generator_forward.49} parent=0 // pred_fallthru
    _
  // Predicated region
  $region6: #{generator_forward.49} parent=0 // pred_check
    _
  $region7: #{generator_forward.49} parent=0 // pred_check_branch
    %12 = sbr.rel (0) target = $region9
  $region8: #{generator_forward.49} parent=0 // pred_region
    _
  $region9: #{generator_forward.49} parent=0 // pred_fallthru
    _
  // Predicated region
  $region10: #{generator_forward.49} parent=0 // pred_check
    _
  $region11: #{generator_forward.49} parent=0 // pred_check_branch
    %14 = sbr.rel (0) target = $region13
  $region12: #{generator_forward.49} parent=0 // pred_region
    _
  $region13: #{generator_forward.49} parent=0 // pred_fallthru
    _
  // Predicated region
  $region14: #{generator_forward.49} parent=0 // pred_check
    _
  $region15: #{generator_forward.49} parent=0 // pred_check_branch
    %16 = sbr.rel (0) target = $region17
  $region16: #{generator_forward.49} parent=0 // pred_region
    _
  $region17: #{generator_forward.49} parent=0 // pred_fallthru
    _
  %v18 = vld [vmem:[%s0] sm:$0xff]
  %v19 = vld [vmem:[%s0 + $0x8] sm:$0xff]
  %v20 = vld [vmem:[%s0 + $0x10] sm:$0xff]
  %v21 = vld [vmem:[%s0 + $0x18] sm:$0xff]
  %v22 = vld [vmem:[%s0 + $0x20] sm:$0xff]
  %v23 = vld [vmem:[%s0 + $0x28] sm:$0xff]
  %v24 = vld [vmem:[%s0 + $0x30] sm:$0xff]
  %v25 = vld [vmem:[%s0 + $0x38] sm:$0xff]
  %v26 = vld [vmem:[%s0 + $0x40] sm:$0xff]
  %v27 = vld [vmem:[%s0 + $0x48] sm:$0xff]
  %v28 = vld [vmem:[%s0 + $0x50] sm:$0xff]
  %v29 = vld [vmem:[%s0 + $0x58] sm:$0xff]
  %v30 = vld [vmem:[%s0 + $0x60] sm:$0xff]
  %v31 = vld [vmem:[%s0 + $0x68] sm:$0xff]
  %v32 = vld [vmem:[%s0 + $0x70] sm:$0xff]
  %v33 = vld [vmem:[%s0 + $0x78] sm:$0xff]
  %v34 = vld [vmem:[%s0 + $0x80] sm:$0xff]
  %v35 = vld [vmem:[%s0 + $0x88] sm:$0xff]
  %v36 = vld [vmem:[%s0 + $0x90] sm:$0xff]
  %v37 = vld [vmem:[%s0 + $0x98] sm:$0xff]
  %v38 = vld [vmem:[%s0 + $0xa0] sm:$0xff]
  %v39 = vld [vmem:[%s0 + $0xa8] sm:$0xff]
  %v40 = vld [vmem:[%s0 + $0xb0] sm:$0xff]
  %v41 = vld [vmem:[%s0 + $0xb8] sm:$0xff]
  %v42 = vld [vmem:[%s0 + $0xc0] sm:$0xff]
  %v43 = vld [vmem:[%s0 + $0xc8] sm:$0xff]
  %v44 = vld [vmem:[%s0 + $0xd0] sm:$0xff]
  %v45 = vld [vmem:[%s0 + $0xd8] sm:$0xff]
  %v46 = vld [vmem:[%s0 + $0xe0] sm:$0xff]
  %v47 = vld [vmem:[%s0 + $0xe8] sm:$0xff]
  %v48 = vld [vmem:[%s0 + $0xf0] sm:$0xff]
  %v49 = vld [vmem:[%s0 + $0xf8] sm:$0xff]
  %v50 = vld [vmem:[%s0 + $0x100] sm:$0xff]
  %v51 = vld [vmem:[%s0 + $0x108] sm:$0xff]
  %v52 = vld [vmem:[%s0 + $0x110] sm:$0xff]
  %v53 = vld [vmem:[%s0 + $0x118] sm:$0xff]
  %v54 = vld [vmem:[%s0 + $0x120] sm:$0xff]
  %v55 = vld [vmem:[%s0 + $0x128] sm:$0xff]
  %v56 = vld [vmem:[%s0 + $0x130] sm:$0xff]
  %v57 = vld [vmem:[%s0 + $0x138] sm:$0xff]
  %v58 = vld [vmem:[%s0 + $0x140] sm:$0xff]
  %v59 = vld [vmem:[%s0 + $0x148] sm:$0xff]
  %v60 = vld [vmem:[%s0 + $0x150] sm:$0xff]
  %v61 = vld [vmem:[%s0 + $0x158] sm:$0xff]
  %v62 = vld [vmem:[%s0 + $0x160] sm:$0xff]
  %v63 = vld [vmem:[%s0 + $0x168] sm:$0xff]
  %v64 = vld [vmem:[%s0 + $0x170] sm:$0xff]
  %v65 = vld [vmem:[%s0 + $0x178] sm:$0xff]
  %v66 = vld [vmem:[%s0 + $0x180] sm:$0xff]
  %v67 = vld [vmem:[%s0 + $0x188] sm:$0xff]
  %v68 = vld [vmem:[%s0 + $0x190] sm:$0xff]
  %v69 = vld [vmem:[%s0 + $0x198] sm:$0xff]
  %v70 = vld [vmem:[%s0 + $0x1a0] sm:$0xff]
  %v71 = vld [vmem:[%s0 + $0x1a8] sm:$0xff]
  %v72 = vld [vmem:[%s0 + $0x1b0] sm:$0xff]
  %v73 = vld [vmem:[%s0 + $0x1b8] sm:$0xff]
  %v74 = vld [vmem:[%s0 + $0x1c0] sm:$0xff]
  %v75 = vld [vmem:[%s0 + $0x1c8] sm:$0xff]
  %v76 = vld [vmem:[%s0 + $0x1d0] sm:$0xff]
  %v77 = vld [vmem:[%s0 + $0x1d8] sm:$0xff]
  %v78 = vld [vmem:[%s0 + $0x1e0] sm:$0xff]
  %v79 = vld [vmem:[%s0 + $0x1e8] sm:$0xff]
  %v80 = vld [vmem:[%s0 + $0x1f0] sm:$0xff]
  %v81 = vld [vmem:[%s0 + $0x1f8] sm:$0xff]
  %v82 = vld [vmem:[%s0 + $0x200] sm:$0xff]
  %v83 = vld [vmem:[%s0 + $0x208] sm:$0xff]
  %v84 = vld [vmem:[%s0 + $0x210] sm:$0xff]
  %v85 = vld [vmem:[%s0 + $0x218] sm:$0xff]
  %v86 = vld [vmem:[%s0 + $0x220] sm:$0xff]
  %v87 = vld [vmem:[%s0 + $0x228] sm:$0xff]
  %v88 = vld [vmem:[%s0 + $0x230] sm:$0xff]
  %v89 = vld [vmem:[%s0 + $0x238] sm:$0xff]
  %v90 = vld [vmem:[%s0 + $0x240] sm:$0xff]
  %v91 = vld [vmem:[%s0 + $0x248] sm:$0xff]
  %v92 = vld [vmem:[%s0 + $0x250] sm:$0xff]
  %v93 = vld [vmem:[%s0 + $0x258] sm:$0xff]
  %v94 = vld [vmem:[%s0 + $0x260] sm:$0xff]
  %v95 = vld [vmem:[%s0 + $0x268] sm:$0xff]
  %v96 = vld [vmem:[%s0 + $0x270] sm:$0xff]
  %v97 = vld [vmem:[%s0 + $0x278] sm:$0xff]
  %v98 = vld [vmem:[%s0 + $0x280] sm:$0xff]
  %v99 = vld [vmem:[%s0 + $0x288] sm:$0xff]
  %v100 = vld [vmem:[%s0 + $0x290] sm:$0xff]
  %v101 = vld [vmem:[%s0 + $0x298] sm:$0xff]
  %v102 = vld [vmem:[%s0 + $0x2a0] sm:$0xff]
  %v103 = vld [vmem:[%s0 + $0x2a8] sm:$0xff]
  %v104 = vld [vmem:[%s0 + $0x2b0] sm:$0xff]
  %v105 = vld [vmem:[%s0 + $0x2b8] sm:$0xff]
  %v106 = vld [vmem:[%s0 + $0x2c0] sm:$0xff]
  %v107 = vld [vmem:[%s0 + $0x2c8] sm:$0xff]
  %v108 = vld [vmem:[%s0 + $0x2d0] sm:$0xff]
  %v109 = vld [vmem:[%s0 + $0x2d8] sm:$0xff]
  %v110 = vld [vmem:[%s0 + $0x2e0] sm:$0xff]
  %v111 = vld [vmem:[%s0 + $0x2e8] sm:$0xff]
  %v112 = vld [vmem:[%s0 + $0x2f0] sm:$0xff]
  %v113 = vld [vmem:[%s0 + $0x2f8] sm:$0xff]
  %v114 = vld [vmem:[%s0 + $0x300] sm:$0xff]
  %v115 = vld [vmem:[%s0 + $0x308] sm:$0xff]
  %v116 = vld [vmem:[%s0 + $0x310] sm:$0xff]
  %v117 = vld [vmem:[%s0 + $0x318] sm:$0xff]
  %v118 = vld [vmem:[%s0 + $0x320] sm:$0xff]
  %v119 = vld [vmem:[%s0 + $0x328] sm:$0xff]
  %v120 = vld [vmem:[%s0 + $0x330] sm:$0xff]
  %v121 = vld [vmem:[%s0 + $0x338] sm:$0xff]
  %v122 = vld [vmem:[%s0 + $0x340] sm:$0xff]
  %v123 = vld [vmem:[%s0 + $0x348] sm:$0xff]
  %v124 = vld [vmem:[%s0 + $0x350] sm:$0xff]
  %v125 = vld [vmem:[%s0 + $0x358] sm:$0xff]
  %v126 = vld [vmem:[%s0 + $0x360] sm:$0xff]
  %v127 = vld [vmem:[%s0 + $0x368] sm:$0xff]
  %v128 = vld [vmem:[%s0 + $0x370] sm:$0xff]
  %v129 = vld [vmem:[%s0 + $0x378] sm:$0xff]
  %v130 = vld [vmem:[%s0 + $0x380] sm:$0xff]
  %v131 = vld [vmem:[%s0 + $0x388] sm:$0xff]
  %v132 = vld [vmem:[%s0 + $0x390] sm:$0xff]
  %v133 = vld [vmem:[%s0 + $0x398] sm:$0xff]
  %v134 = vld [vmem:[%s0 + $0x3a0] sm:$0xff]
  %v135 = vld [vmem:[%s0 + $0x3a8] sm:$0xff]
  %v136 = vld [vmem:[%s0 + $0x3b0] sm:$0xff]
  %v137 = vld [vmem:[%s0 + $0x3b8] sm:$0xff]
  %v138 = vld [vmem:[%s0 + $0x3c0] sm:$0xff]
  %v139 = vld [vmem:[%s0 + $0x3c8] sm:$0xff]
  %v140 = vld [vmem:[%s0 + $0x3d0] sm:$0xff]
  %v141 = vld [vmem:[%s0 + $0x3d8] sm:$0xff]
  %v142 = vld [vmem:[%s0 + $0x3e0] sm:$0xff]
  %v143 = vld [vmem:[%s0 + $0x3e8] sm:$0xff]
  %v144 = vld [vmem:[%s0 + $0x3f0] sm:$0xff]
  %v145 = vld [vmem:[%s0 + $0x3f8] sm:$0xff]
  %v146 = vld [vmem:[%s1] sm:$0xf]
  %v147 = vld [vmem:[%s1 + $0x4] sm:$0xf]
  %v148 = vld [vmem:[%s1 + $0x8] sm:$0xf]
  %v149 = vld [vmem:[%s1 + $0xc] sm:$0xf]
  %v150 = vld [vmem:[%s1 + $0x10] sm:$0xf]
  %v151 = vld [vmem:[%s1 + $0x14] sm:$0xf]
  %v152 = vld [vmem:[%s1 + $0x18] sm:$0xf]
  %v153 = vld [vmem:[%s1 + $0x1c] sm:$0xf]
  %v154 = vld [vmem:[%s1 + $0x20] sm:$0xf]
  %v155 = vld [vmem:[%s1 + $0x24] sm:$0xf]
  %v156 = vld [vmem:[%s1 + $0x28] sm:$0xf]
  %v157 = vld [vmem:[%s1 + $0x2c] sm:$0xf]
  %v158 = vld [vmem:[%s1 + $0x30] sm:$0xf]
  %v159 = vld [vmem:[%s1 + $0x34] sm:$0xf]
  %v160 = vld [vmem:[%s1 + $0x38] sm:$0xf]
  %v161 = vld [vmem:[%s1 + $0x3c] sm:$0xf]
  %v162 = vld [vmem:[%s1 + $0x40] sm:$0xf]
  %v163 = vld [vmem:[%s1 + $0x44] sm:$0xf]
  %v164 = vld [vmem:[%s1 + $0x48] sm:$0xf]
  %v165 = vld [vmem:[%s1 + $0x4c] sm:$0xf]
  %v166 = vld [vmem:[%s1 + $0x50] sm:$0xf]
  %v167 = vld [vmem:[%s1 + $0x54] sm:$0xf]
  %v168 = vld [vmem:[%s1 + $0x58] sm:$0xf]
  %v169 = vld [vmem:[%s1 + $0x5c] sm:$0xf]
  %v170 = vld [vmem:[%s1 + $0x60] sm:$0xf]
  %v171 = vld [vmem:[%s1 + $0x64] sm:$0xf]
  %v172 = vld [vmem:[%s1 + $0x68] sm:$0xf]
  %v173 = vld [vmem:[%s1 + $0x6c] sm:$0xf]
  %v174 = vld [vmem:[%s1 + $0x70] sm:$0xf]
  %v175 = vld [vmem:[%s1 + $0x74] sm:$0xf]
  %v176 = vld [vmem:[%s1 + $0x78] sm:$0xf]
  %v177 = vld [vmem:[%s1 + $0x7c] sm:$0xf]
  %v178 = vld [vmem:[%s1 + $0x80] sm:$0xf]
  %v179 = vld [vmem:[%s1 + $0x84] sm:$0xf]
  %v180 = vld [vmem:[%s1 + $0x88] sm:$0xf]
  %v181 = vld [vmem:[%s1 + $0x8c] sm:$0xf]
  %v182 = vld [vmem:[%s1 + $0x90] sm:$0xf]
  %v183 = vld [vmem:[%s1 + $0x94] sm:$0xf]
  %v184 = vld [vmem:[%s1 + $0x98] sm:$0xf]
  %v185 = vld [vmem:[%s1 + $0x9c] sm:$0xf]
  %v186 = vld [vmem:[%s1 + $0xa0] sm:$0xf]
  %v187 = vld [vmem:[%s1 + $0xa4] sm:$0xf]
  %v188 = vld [vmem:[%s1 + $0xa8] sm:$0xf]
  %v189 = vld [vmem:[%s1 + $0xac] sm:$0xf]
  %v190 = vld [vmem:[%s1 + $0xb0] sm:$0xf]
  %v191 = vld [vmem:[%s1 + $0xb4] sm:$0xf]
  %v192 = vld [vmem:[%s1 + $0xb8] sm:$0xf]
  %v193 = vld [vmem:[%s1 + $0xbc] sm:$0xf]
  %v194 = vld [vmem:[%s1 + $0xc0] sm:$0xf]
  %v195 = vld [vmem:[%s1 + $0xc4] sm:$0xf]
  %v196 = vld [vmem:[%s1 + $0xc8] sm:$0xf]
  %v197 = vld [vmem:[%s1 + $0xcc] sm:$0xf]
  %v198 = vld [vmem:[%s1 + $0xd0] sm:$0xf]
  %v199 = vld [vmem:[%s1 + $0xd4] sm:$0xf]
  %v200 = vld [vmem:[%s1 + $0xd8] sm:$0xf]
  %v201 = vld [vmem:[%s1 + $0xdc] sm:$0xf]
  %v202 = vld [vmem:[%s1 + $0xe0] sm:$0xf]
  %v203 = vld [vmem:[%s1 + $0xe4] sm:$0xf]
  %v204 = vld [vmem:[%s1 + $0xe8] sm:$0xf]
  %v205 = vld [vmem:[%s1 + $0xec] sm:$0xf]
  %v206 = vld [vmem:[%s1 + $0xf0] sm:$0xf]
  %v207 = vld [vmem:[%s1 + $0xf4] sm:$0xf]
  %v208 = vld [vmem:[%s1 + $0xf8] sm:$0xf]
  %v209 = vld [vmem:[%s1 + $0xfc] sm:$0xf]
  %v338 = vunpack.c.l.b16 %v18
  %v339 = vunpack.c.h.b16 %v18
  %v340 = vunpack.c.l.b16 %v19
  %v341 = vunpack.c.h.b16 %v19
  %v342 = vunpack.c.l.b16 %v20
  %v343 = vunpack.c.h.b16 %v20
  %v344 = vunpack.c.l.b16 %v21
  %v345 = vunpack.c.h.b16 %v21
  %v346 = vunpack.c.l.b16 %v22
  %v347 = vunpack.c.h.b16 %v22
  %v348 = vunpack.c.l.b16 %v23
  %v349 = vunpack.c.h.b16 %v23
  %v350 = vunpack.c.l.b16 %v24
  %v351 = vunpack.c.h.b16 %v24
  %v352 = vunpack.c.l.b16 %v25
  %v353 = vunpack.c.h.b16 %v25
  %v354 = vunpack.c.l.b16 %v26
  %v355 = vunpack.c.h.b16 %v26
  %v356 = vunpack.c.l.b16 %v27
  %v357 = vunpack.c.h.b16 %v27
  %v358 = vunpack.c.l.b16 %v28
  %v359 = vunpack.c.h.b16 %v28
  %v360 = vunpack.c.l.b16 %v29
  %v361 = vunpack.c.h.b16 %v29
  %v362 = vunpack.c.l.b16 %v30
  %v363 = vunpack.c.h.b16 %v30
  %v364 = vunpack.c.l.b16 %v31
  %v365 = vunpack.c.h.b16 %v31
  %v366 = vunpack.c.l.b16 %v32
  %v367 = vunpack.c.h.b16 %v32
  %v368 = vunpack.c.l.b16 %v33
  %v369 = vunpack.c.h.b16 %v33
  %v370 = vunpack.c.l.b16 %v34
  %v371 = vunpack.c.h.b16 %v34
  %v372 = vunpack.c.l.b16 %v35
  %v373 = vunpack.c.h.b16 %v35
  %v374 = vunpack.c.l.b16 %v36
  %v375 = vunpack.c.h.b16 %v36
  %v376 = vunpack.c.l.b16 %v37
  %v377 = vunpack.c.h.b16 %v37
  %v378 = vunpack.c.l.b16 %v38
  %v379 = vunpack.c.h.b16 %v38
  %v380 = vunpack.c.l.b16 %v39
  %v381 = vunpack.c.h.b16 %v39
  %v382 = vunpack.c.l.b16 %v40
  %v383 = vunpack.c.h.b16 %v40
  %v384 = vunpack.c.l.b16 %v41
  %v385 = vunpack.c.h.b16 %v41
  %v386 = vunpack.c.l.b16 %v42
  %v387 = vunpack.c.h.b16 %v42
  %v388 = vunpack.c.l.b16 %v43
  %v389 = vunpack.c.h.b16 %v43
  %v390 = vunpack.c.l.b16 %v44
  %v391 = vunpack.c.h.b16 %v44
  %v392 = vunpack.c.l.b16 %v45
  %v393 = vunpack.c.h.b16 %v45
  %v394 = vunpack.c.l.b16 %v46
  %v395 = vunpack.c.h.b16 %v46
  %v396 = vunpack.c.l.b16 %v47
  %v397 = vunpack.c.h.b16 %v47
  %v398 = vunpack.c.l.b16 %v48
  %v399 = vunpack.c.h.b16 %v48
  %v400 = vunpack.c.l.b16 %v49
  %v401 = vunpack.c.h.b16 %v49
  %v402 = vunpack.c.l.b16 %v50
  %v403 = vunpack.c.h.b16 %v50
  %v404 = vunpack.c.l.b16 %v51
  %v405 = vunpack.c.h.b16 %v51
  %v406 = vunpack.c.l.b16 %v52
  %v407 = vunpack.c.h.b16 %v52
  %v408 = vunpack.c.l.b16 %v53
  %v409 = vunpack.c.h.b16 %v53
  %v410 = vunpack.c.l.b16 %v54
  %v411 = vunpack.c.h.b16 %v54
  %v412 = vunpack.c.l.b16 %v55
  %v413 = vunpack.c.h.b16 %v55
  %v414 = vunpack.c.l.b16 %v56
  %v415 = vunpack.c.h.b16 %v56
  %v416 = vunpack.c.l.b16 %v57
  %v417 = vunpack.c.h.b16 %v57
  %v418 = vunpack.c.l.b16 %v58
  %v419 = vunpack.c.h.b16 %v58
  %v420 = vunpack.c.l.b16 %v59
  %v421 = vunpack.c.h.b16 %v59
  %v422 = vunpack.c.l.b16 %v60
  %v423 = vunpack.c.h.b16 %v60
  %v424 = vunpack.c.l.b16 %v61
  %v425 = vunpack.c.h.b16 %v61
  %v426 = vunpack.c.l.b16 %v62
  %v427 = vunpack.c.h.b16 %v62
  %v428 = vunpack.c.l.b16 %v63
  %v429 = vunpack.c.h.b16 %v63
  %v430 = vunpack.c.l.b16 %v64
  %v431 = vunpack.c.h.b16 %v64
  %v432 = vunpack.c.l.b16 %v65
  %v433 = vunpack.c.h.b16 %v65
  %v434 = vunpack.c.l.b16 %v66
  %v435 = vunpack.c.h.b16 %v66
  %v436 = vunpack.c.l.b16 %v67
  %v437 = vunpack.c.h.b16 %v67
  %v438 = vunpack.c.l.b16 %v68
  %v439 = vunpack.c.h.b16 %v68
  %v440 = vunpack.c.l.b16 %v69
  %v441 = vunpack.c.h.b16 %v69
  %v442 = vunpack.c.l.b16 %v70
  %v443 = vunpack.c.h.b16 %v70
  %v444 = vunpack.c.l.b16 %v71
  %v445 = vunpack.c.h.b16 %v71
  %v446 = vunpack.c.l.b16 %v72
  %v447 = vunpack.c.h.b16 %v72
  %v448 = vunpack.c.l.b16 %v73
  %v449 = vunpack.c.h.b16 %v73
  %v450 = vunpack.c.l.b16 %v74
  %v451 = vunpack.c.h.b16 %v74
  %v452 = vunpack.c.l.b16 %v75
  %v453 = vunpack.c.h.b16 %v75
  %v454 = vunpack.c.l.b16 %v76
  %v455 = vunpack.c.h.b16 %v76
  %v456 = vunpack.c.l.b16 %v77
  %v457 = vunpack.c.h.b16 %v77
  %v458 = vunpack.c.l.b16 %v78
  %v459 = vunpack.c.h.b16 %v78
  %v460 = vunpack.c.l.b16 %v79
  %v461 = vunpack.c.h.b16 %v79
  %v462 = vunpack.c.l.b16 %v80
  %v463 = vunpack.c.h.b16 %v80
  %v464 = vunpack.c.l.b16 %v81
  %v465 = vunpack.c.h.b16 %v81
  %v466 = vunpack.c.l.b16 %v82
  %v467 = vunpack.c.h.b16 %v82
  %v468 = vunpack.c.l.b16 %v83
  %v469 = vunpack.c.h.b16 %v83
  %v470 = vunpack.c.l.b16 %v84
  %v471 = vunpack.c.h.b16 %v84
  %v472 = vunpack.c.l.b16 %v85
  %v473 = vunpack.c.h.b16 %v85
  %v474 = vunpack.c.l.b16 %v86
  %v475 = vunpack.c.h.b16 %v86
  %v476 = vunpack.c.l.b16 %v87
  %v477 = vunpack.c.h.b16 %v87
  %v478 = vunpack.c.l.b16 %v88
  %v479 = vunpack.c.h.b16 %v88
  %v480 = vunpack.c.l.b16 %v89
  %v481 = vunpack.c.h.b16 %v89
  %v482 = vunpack.c.l.b16 %v90
  %v483 = vunpack.c.h.b16 %v90
  %v484 = vunpack.c.l.b16 %v91
  %v485 = vunpack.c.h.b16 %v91
  %v486 = vunpack.c.l.b16 %v92
  %v487 = vunpack.c.h.b16 %v92
  %v488 = vunpack.c.l.b16 %v93
  %v489 = vunpack.c.h.b16 %v93
  %v490 = vunpack.c.l.b16 %v94
  %v491 = vunpack.c.h.b16 %v94
  %v492 = vunpack.c.l.b16 %v95
  %v493 = vunpack.c.h.b16 %v95
  %v494 = vunpack.c.l.b16 %v96
  %v495 = vunpack.c.h.b16 %v96
  %v496 = vunpack.c.l.b16 %v97
  %v497 = vunpack.c.h.b16 %v97
  %v498 = vunpack.c.l.b16 %v98
  %v499 = vunpack.c.h.b16 %v98
  %v500 = vunpack.c.l.b16 %v99
  %v501 = vunpack.c.h.b16 %v99
  %v502 = vunpack.c.l.b16 %v100
  %v503 = vunpack.c.h.b16 %v100
  %v504 = vunpack.c.l.b16 %v101
  %v505 = vunpack.c.h.b16 %v101
  %v506 = vunpack.c.l.b16 %v102
  %v507 = vunpack.c.h.b16 %v102
  %v508 = vunpack.c.l.b16 %v103
  %v509 = vunpack.c.h.b16 %v103
  %v510 = vunpack.c.l.b16 %v104
  %v511 = vunpack.c.h.b16 %v104
  %v512 = vunpack.c.l.b16 %v105
  %v513 = vunpack.c.h.b16 %v105
  %v514 = vunpack.c.l.b16 %v106
  %v515 = vunpack.c.h.b16 %v106
  %v516 = vunpack.c.l.b16 %v107
  %v517 = vunpack.c.h.b16 %v107
  %v518 = vunpack.c.l.b16 %v108
  %v519 = vunpack.c.h.b16 %v108
  %v520 = vunpack.c.l.b16 %v109
  %v521 = vunpack.c.h.b16 %v109
  %v522 = vunpack.c.l.b16 %v110
  %v523 = vunpack.c.h.b16 %v110
  %v524 = vunpack.c.l.b16 %v111
  %v525 = vunpack.c.h.b16 %v111
  %v526 = vunpack.c.l.b16 %v112
  %v527 = vunpack.c.h.b16 %v112
  %v528 = vunpack.c.l.b16 %v113
  %v529 = vunpack.c.h.b16 %v113
  %v530 = vunpack.c.l.b16 %v114
  %v531 = vunpack.c.h.b16 %v114
  %v532 = vunpack.c.l.b16 %v115
  %v533 = vunpack.c.h.b16 %v115
  %v534 = vunpack.c.l.b16 %v116
  %v535 = vunpack.c.h.b16 %v116
  %v536 = vunpack.c.l.b16 %v117
  %v537 = vunpack.c.h.b16 %v117
  %v538 = vunpack.c.l.b16 %v118
  %v539 = vunpack.c.h.b16 %v118
  %v540 = vunpack.c.l.b16 %v119
  %v541 = vunpack.c.h.b16 %v119
  %v542 = vunpack.c.l.b16 %v120
  %v543 = vunpack.c.h.b16 %v120
  %v544 = vunpack.c.l.b16 %v121
  %v545 = vunpack.c.h.b16 %v121
  %v546 = vunpack.c.l.b16 %v122
  %v547 = vunpack.c.h.b16 %v122
  %v548 = vunpack.c.l.b16 %v123
  %v549 = vunpack.c.h.b16 %v123
  %v550 = vunpack.c.l.b16 %v124
  %v551 = vunpack.c.h.b16 %v124
  %v552 = vunpack.c.l.b16 %v125
  %v553 = vunpack.c.h.b16 %v125
  %v554 = vunpack.c.l.b16 %v126
  %v555 = vunpack.c.h.b16 %v126
  %v556 = vunpack.c.l.b16 %v127
  %v557 = vunpack.c.h.b16 %v127
  %v558 = vunpack.c.l.b16 %v128
  %v559 = vunpack.c.h.b16 %v128
  %v560 = vunpack.c.l.b16 %v129
  %v561 = vunpack.c.h.b16 %v129
  %v562 = vunpack.c.l.b16 %v130
  %v563 = vunpack.c.h.b16 %v130
  %v564 = vunpack.c.l.b16 %v131
  %v565 = vunpack.c.h.b16 %v131
  %v566 = vunpack.c.l.b16 %v132
  %v567 = vunpack.c.h.b16 %v132
  %v568 = vunpack.c.l.b16 %v133
  %v569 = vunpack.c.h.b16 %v133
  %v570 = vunpack.c.l.b16 %v134
  %v571 = vunpack.c.h.b16 %v134
  %v572 = vunpack.c.l.b16 %v135
  %v573 = vunpack.c.h.b16 %v135
  %v574 = vunpack.c.l.b16 %v136
  %v575 = vunpack.c.h.b16 %v136
  %v576 = vunpack.c.l.b16 %v137
  %v577 = vunpack.c.h.b16 %v137
  %v578 = vunpack.c.l.b16 %v138
  %v579 = vunpack.c.h.b16 %v138
  %v580 = vunpack.c.l.b16 %v139
  %v581 = vunpack.c.h.b16 %v139
  %v582 = vunpack.c.l.b16 %v140
  %v583 = vunpack.c.h.b16 %v140
  %v584 = vunpack.c.l.b16 %v141
  %v585 = vunpack.c.h.b16 %v141
  %v586 = vunpack.c.l.b16 %v142
  %v587 = vunpack.c.h.b16 %v142
  %v588 = vunpack.c.l.b16 %v143
  %v589 = vunpack.c.h.b16 %v143
  %v590 = vunpack.c.l.b16 %v144
  %v591 = vunpack.c.h.b16 %v144
  %v592 = vunpack.c.l.b16 %v145
  %v593 = vunpack.c.h.b16 %v145
  %v594 = vpack.c.b16 %v342, %v338
  %v595 = vpack.c.b16 %v343, %v339
  %v596 = vpack.c.b16 %v344, %v340
  %v597 = vpack.c.b16 %v345, %v341
  %v598 = vpack.c.b16 %v350, %v346
  %v599 = vpack.c.b16 %v351, %v347
  %v600 = vpack.c.b16 %v352, %v348
  %v601 = vpack.c.b16 %v353, %v349
  %v602 = vpack.c.b16 %v358, %v354
  %v603 = vpack.c.b16 %v359, %v355
  %v604 = vpack.c.b16 %v360, %v356
  %v605 = vpack.c.b16 %v361, %v357
  %v606 = vpack.c.b16 %v366, %v362
  %v607 = vpack.c.b16 %v367, %v363
  %v608 = vpack.c.b16 %v368, %v364
  %v609 = vpack.c.b16 %v369, %v365
  %v610 = vpack.c.b16 %v374, %v370
  %v611 = vpack.c.b16 %v375, %v371
  %v612 = vpack.c.b16 %v376, %v372
  %v613 = vpack.c.b16 %v377, %v373
  %v614 = vpack.c.b16 %v382, %v378
  %v615 = vpack.c.b16 %v383, %v379
  %v616 = vpack.c.b16 %v384, %v380
  %v617 = vpack.c.b16 %v385, %v381
  %v618 = vpack.c.b16 %v390, %v386
  %v619 = vpack.c.b16 %v391, %v387
  %v620 = vpack.c.b16 %v392, %v388
  %v621 = vpack.c.b16 %v393, %v389
  %v622 = vpack.c.b16 %v398, %v394
  %v623 = vpack.c.b16 %v399, %v395
  %v624 = vpack.c.b16 %v400, %v396
  %v625 = vpack.c.b16 %v401, %v397
  %v626 = vpack.c.b16 %v406, %v402
  %v627 = vpack.c.b16 %v407, %v403
  %v628 = vpack.c.b16 %v408, %v404
  %v629 = vpack.c.b16 %v409, %v405
  %v630 = vpack.c.b16 %v414, %v410
  %v631 = vpack.c.b16 %v415, %v411
  %v632 = vpack.c.b16 %v416, %v412
  %v633 = vpack.c.b16 %v417, %v413
  %v634 = vpack.c.b16 %v422, %v418
  %v635 = vpack.c.b16 %v423, %v419
  %v636 = vpack.c.b16 %v424, %v420
  %v637 = vpack.c.b16 %v425, %v421
  %v638 = vpack.c.b16 %v430, %v426
  %v639 = vpack.c.b16 %v431, %v427
  %v640 = vpack.c.b16 %v432, %v428
  %v641 = vpack.c.b16 %v433, %v429
  %v642 = vpack.c.b16 %v438, %v434
  %v643 = vpack.c.b16 %v439, %v435
  %v644 = vpack.c.b16 %v440, %v436
  %v645 = vpack.c.b16 %v441, %v437
  %v646 = vpack.c.b16 %v446, %v442
  %v647 = vpack.c.b16 %v447, %v443
  %v648 = vpack.c.b16 %v448, %v444
  %v649 = vpack.c.b16 %v449, %v445
  %v650 = vpack.c.b16 %v454, %v450
  %v651 = vpack.c.b16 %v455, %v451
  %v652 = vpack.c.b16 %v456, %v452
  %v653 = vpack.c.b16 %v457, %v453
  %v654 = vpack.c.b16 %v462, %v458
  %v655 = vpack.c.b16 %v463, %v459
  %v656 = vpack.c.b16 %v464, %v460
  %v657 = vpack.c.b16 %v465, %v461
  %v658 = vpack.c.b16 %v470, %v466
  %v659 = vpack.c.b16 %v471, %v467
  %v660 = vpack.c.b16 %v472, %v468
  %v661 = vpack.c.b16 %v473, %v469
  %v662 = vpack.c.b16 %v478, %v474
  %v663 = vpack.c.b16 %v479, %v475
  %v664 = vpack.c.b16 %v480, %v476
  %v665 = vpack.c.b16 %v481, %v477
  %v666 = vpack.c.b16 %v486, %v482
  %v667 = vpack.c.b16 %v487, %v483
  %v668 = vpack.c.b16 %v488, %v484
  %v669 = vpack.c.b16 %v489, %v485
  %v670 = vpack.c.b16 %v494, %v490
  %v671 = vpack.c.b16 %v495, %v491
  %v672 = vpack.c.b16 %v496, %v492
  %v673 = vpack.c.b16 %v497, %v493
  %v674 = vpack.c.b16 %v502, %v498
  %v675 = vpack.c.b16 %v503, %v499
  %v676 = vpack.c.b16 %v504, %v500
  %v677 = vpack.c.b16 %v505, %v501
  %v678 = vpack.c.b16 %v510, %v506
  %v679 = vpack.c.b16 %v511, %v507
  %v680 = vpack.c.b16 %v512, %v508
  %v681 = vpack.c.b16 %v513, %v509
  %v682 = vpack.c.b16 %v518, %v514
  %v683 = vpack.c.b16 %v519, %v515
  %v684 = vpack.c.b16 %v520, %v516
  %v685 = vpack.c.b16 %v521, %v517
  %v686 = vpack.c.b16 %v526, %v522
  %v687 = vpack.c.b16 %v527, %v523
  %v688 = vpack.c.b16 %v528, %v524
  %v689 = vpack.c.b16 %v529, %v525
  %v690 = vpack.c.b16 %v534, %v530
  %v691 = vpack.c.b16 %v535, %v531
  %v692 = vpack.c.b16 %v536, %v532
  %v693 = vpack.c.b16 %v537, %v533
  %v694 = vpack.c.b16 %v542, %v538
  %v695 = vpack.c.b16 %v543, %v539
  %v696 = vpack.c.b16 %v544, %v540
  %v697 = vpack.c.b16 %v545, %v541
  %v698 = vpack.c.b16 %v550, %v546
  %v699 = vpack.c.b16 %v551, %v547
  %v700 = vpack.c.b16 %v552, %v548
  %v701 = vpack.c.b16 %v553, %v549
  %v702 = vpack.c.b16 %v558, %v554
  %v703 = vpack.c.b16 %v559, %v555
  %v704 = vpack.c.b16 %v560, %v556
  %v705 = vpack.c.b16 %v561, %v557
  %v706 = vpack.c.b16 %v566, %v562
  %v707 = vpack.c.b16 %v567, %v563
  %v708 = vpack.c.b16 %v568, %v564
  %v709 = vpack.c.b16 %v569, %v565
  %v710 = vpack.c.b16 %v574, %v570
  %v711 = vpack.c.b16 %v575, %v571
  %v712 = vpack.c.b16 %v576, %v572
  %v713 = vpack.c.b16 %v577, %v573
  %v714 = vpack.c.b16 %v582, %v578
  %v715 = vpack.c.b16 %v583, %v579
  %v716 = vpack.c.b16 %v584, %v580
  %v717 = vpack.c.b16 %v585, %v581
  %v718 = vpack.c.b16 %v590, %v586
  %v719 = vpack.c.b16 %v591, %v587
  %v720 = vpack.c.b16 %v592, %v588
  %v721 = vpack.c.b16 %v593, %v589
  %v914 = vunpack.c.l.b16 %v146
  %v915 = vunpack.c.l.b16 %v147
  %v916 = vunpack.c.l.b16 %v148
  %v917 = vunpack.c.l.b16 %v149
  %v918 = vunpack.c.l.b16 %v150
  %v919 = vunpack.c.l.b16 %v151
  %v920 = vunpack.c.l.b16 %v152
  %v921 = vunpack.c.l.b16 %v153
  %v922 = vunpack.c.l.b16 %v154
  %v923 = vunpack.c.l.b16 %v155
  %v924 = vunpack.c.l.b16 %v156
  %v925 = vunpack.c.l.b16 %v157
  %v926 = vunpack.c.l.b16 %v158
  %v927 = vunpack.c.l.b16 %v159
  %v928 = vunpack.c.l.b16 %v160
  %v929 = vunpack.c.l.b16 %v161
  %v930 = vunpack.c.l.b16 %v162
  %v931 = vunpack.c.l.b16 %v163
  %v932 = vunpack.c.l.b16 %v164
  %v933 = vunpack.c.l.b16 %v165
  %v934 = vunpack.c.l.b16 %v166
  %v935 = vunpack.c.l.b16 %v167
  %v936 = vunpack.c.l.b16 %v168
  %v937 = vunpack.c.l.b16 %v169
  %v938 = vunpack.c.l.b16 %v170
  %v939 = vunpack.c.l.b16 %v171
  %v940 = vunpack.c.l.b16 %v172
  %v941 = vunpack.c.l.b16 %v173
  %v942 = vunpack.c.l.b16 %v174
  %v943 = vunpack.c.l.b16 %v175
  %v944 = vunpack.c.l.b16 %v176
  %v945 = vunpack.c.l.b16 %v177
  %v946 = vunpack.c.l.b16 %v178
  %v947 = vunpack.c.l.b16 %v179
  %v948 = vunpack.c.l.b16 %v180
  %v949 = vunpack.c.l.b16 %v181
  %v950 = vunpack.c.l.b16 %v182
  %v951 = vunpack.c.l.b16 %v183
  %v952 = vunpack.c.l.b16 %v184
  %v953 = vunpack.c.l.b16 %v185
  %v954 = vunpack.c.l.b16 %v186
  %v955 = vunpack.c.l.b16 %v187
  %v956 = vunpack.c.l.b16 %v188
  %v957 = vunpack.c.l.b16 %v189
  %v958 = vunpack.c.l.b16 %v190
  %v959 = vunpack.c.l.b16 %v191
  %v960 = vunpack.c.l.b16 %v192
  %v961 = vunpack.c.l.b16 %v193
  %v962 = vunpack.c.l.b16 %v194
  %v963 = vunpack.c.l.b16 %v195
  %v964 = vunpack.c.l.b16 %v196
  %v965 = vunpack.c.l.b16 %v197
  %v966 = vunpack.c.l.b16 %v198
  %v967 = vunpack.c.l.b16 %v199
  %v968 = vunpack.c.l.b16 %v200
  %v969 = vunpack.c.l.b16 %v201
  %v970 = vunpack.c.l.b16 %v202
  %v971 = vunpack.c.l.b16 %v203
  %v972 = vunpack.c.l.b16 %v204
  %v973 = vunpack.c.l.b16 %v205
  %v974 = vunpack.c.l.b16 %v206
  %v975 = vunpack.c.l.b16 %v207
  %v976 = vunpack.c.l.b16 %v208
  %v977 = vunpack.c.l.b16 %v209
  %v978 = vpack.c.b16 %v915, %v914
  %v979 = vpack.c.b16 %v917, %v916
  %v980 = vpack.c.b16 %v919, %v918
  %v981 = vpack.c.b16 %v921, %v920
  %v982 = vpack.c.b16 %v923, %v922
  %v983 = vpack.c.b16 %v925, %v924
  %v984 = vpack.c.b16 %v927, %v926
  %v985 = vpack.c.b16 %v929, %v928
  %v986 = vpack.c.b16 %v931, %v930
  %v987 = vpack.c.b16 %v933, %v932
  %v988 = vpack.c.b16 %v935, %v934
  %v989 = vpack.c.b16 %v937, %v936
  %v990 = vpack.c.b16 %v939, %v938
  %v991 = vpack.c.b16 %v941, %v940
  %v992 = vpack.c.b16 %v943, %v942
  %v993 = vpack.c.b16 %v945, %v944
  %v994 = vpack.c.b16 %v947, %v946
  %v995 = vpack.c.b16 %v949, %v948
  %v996 = vpack.c.b16 %v951, %v950
  %v997 = vpack.c.b16 %v953, %v952
  %v998 = vpack.c.b16 %v955, %v954
  %v999 = vpack.c.b16 %v957, %v956
  %v1000 = vpack.c.b16 %v959, %v958
  %v1001 = vpack.c.b16 %v961, %v960
  %v1002 = vpack.c.b16 %v963, %v962
  %v1003 = vpack.c.b16 %v965, %v964
  %v1004 = vpack.c.b16 %v967, %v966
  %v1005 = vpack.c.b16 %v969, %v968
  %v1006 = vpack.c.b16 %v971, %v970
  %v1007 = vpack.c.b16 %v973, %v972
  %v1008 = vpack.c.b16 %v975, %v974
  %v1009 = vpack.c.b16 %v977, %v976
  %1042 = vmatprep.subr.bf16.mxu0 0
  %1043 = vmatpush1.bf16.msra.mxu0 %v978
  %1044 = vmatprep.subr.bf16.mxu0 0
  %1045 = vmatpush1.bf16.msra.mxu0 %v979
  %1046 = vmatprep.subr.bf16.mxu0 0
  %1047 = vmatpush1.bf16.msra.mxu0 %v980
  %1048 = vmatprep.subr.bf16.mxu0 0
  %1049 = vmatpush1.bf16.msra.mxu0 %v981
  %1050 = vmatprep.subr.bf16.mxu0 0
  %1051 = vmatpush1.bf16.msra.mxu0 %v982
  %1052 = vmatprep.subr.bf16.mxu0 0
  %1053 = vmatpush1.bf16.msra.mxu0 %v983
  %1054 = vmatprep.subr.bf16.mxu0 0
  %1055 = vmatpush1.bf16.msra.mxu0 %v984
  %1056 = vmatprep.subr.bf16.mxu0 0
  %1057 = vmatpush1.bf16.msra.mxu0 %v985
  %1058 = vmatprep.subr.bf16.mxu0 0
  %1059 = vmatpush1.bf16.msra.mxu0 %v986
  %1060 = vmatprep.subr.bf16.mxu0 0
  %1061 = vmatpush1.bf16.msra.mxu0 %v987
  %1062 = vmatprep.subr.bf16.mxu0 0
  %1063 = vmatpush1.bf16.msra.mxu0 %v988
  %1064 = vmatprep.subr.bf16.mxu0 0
  %1065 = vmatpush1.bf16.msra.mxu0 %v989
  %1066 = vmatprep.subr.bf16.mxu0 0
  %1067 = vmatpush1.bf16.msra.mxu0 %v990
  %1068 = vmatprep.subr.bf16.mxu0 0
  %1069 = vmatpush1.bf16.msra.mxu0 %v991
  %1070 = vmatprep.subr.bf16.mxu0 0
  %1071 = vmatpush1.bf16.msra.mxu0 %v992
  %1072 = vmatprep.subr.bf16.mxu0 0
  %1073 = vmatpush1.bf16.msra.mxu0 %v993
  %1074 = vmatprep.mubr.bf16.mxu0 %v595
  %1075 = vmatmul.mubr.bf16.gmra.mrb[0].mxu0 %v594
  %v1076 = vpop.f32.mrb[0].mxu0
  %v1077 = vadd.f32 0.0, %v1076
  %v1078 = vpop.f32.mrb[0].mxu0
  %v1079 = vpop.f32.mrb[0].mxu0
  %v1080 = vadd.f32 0.0, %v1079
  %v1081 = vpop.f32.mrb[0].mxu0
  %1082 = vmatprep.mubr.bf16.mxu0 %v599
  %1083 = vmatmul.mubr.bf16.gmra.mrb[0].mxu0 %v598
  %v1084 = vpop.f32.mrb[0].mxu0
  %v1085 = vadd.f32 0.0, %v1084
  %v1086 = vpop.f32.mrb[0].mxu0
  %v1087 = vpop.f32.mrb[0].mxu0
  %v1088 = vadd.f32 0.0, %v1087
  %v1089 = vpop.f32.mrb[0].mxu0
  %1090 = vmatprep.mubr.bf16.mxu0 %v603
  %1091 = vmatmul.mubr.bf16.gmra.mrb[0].mxu0 %v602
  %v1092 = vpop.f32.mrb[0].mxu0
  %v1093 = vadd.f32 0.0, %v1092
  %v1094 = vpop.f32.mrb[0].mxu0
  %v1095 = vpop.f32.mrb[0].mxu0
  %v1096 = vadd.f32 0.0, %v1095
  %v1097 = vpop.f32.mrb[0].mxu0
  %1098 = vmatprep.mubr.bf16.mxu0 %v607
  %1099 = vmatmul.mubr.bf16.gmra.mrb[0].mxu0 %v606
  %v1100 = vpop.f32.mrb[0].mxu0
  %v1101 = vadd.f32 0.0, %v1100
  %v1102 = vpop.f32.mrb[0].mxu0
  %v1103 = vpop.f32.mrb[0].mxu0
  %v1104 = vadd.f32 0.0, %v1103
  %v1105 = vpop.f32.mrb[0].mxu0
  %1106 = vmatprep.mubr.bf16.mxu0 %v611
  %1107 = vmatmul.mubr.bf16.gmra.mrb[0].mxu0 %v610
  %v1108 = vpop.f32.mrb[0].mxu0
  %v1109 = vadd.f32 0.0, %v1108
  %v1110 = vpop.f32.mrb[0].mxu0
  %v1111 = vpop.f32.mrb[0].mxu0
  %v1112 = vadd.f32 0.0, %v1111
  %v1113 = vpop.f32.mrb[0].mxu0
  %1114 = vmatprep.mubr.bf16.mxu0 %v615
  %1115 = vmatmul.mubr.bf16.gmra.mrb[0].mxu0 %v614
  %v1116 = vpop.f32.mrb[0].mxu0
  %v1117 = vadd.f32 0.0, %v1116
  %v1118 = vpop.f32.mrb[0].mxu0
  %v1119 = vpop.f32.mrb[0].mxu0
  %v1120 = vadd.f32 0.0, %v1119
  %v1121 = vpop.f32.mrb[0].mxu0
  %1122 = vmatprep.mubr.bf16.mxu0 %v619
  %1123 = vmatmul.mubr.bf16.gmra.mrb[0].mxu0 %v618
  %v1124 = vpop.f32.mrb[0].mxu0
  %v1125 = vadd.f32 0.0, %v1124
  %v1126 = vpop.f32.mrb[0].mxu0
  %v1127 = vpop.f32.mrb[0].mxu0
  %v1128 = vadd.f32 0.0, %v1127
  %v1129 = vpop.f32.mrb[0].mxu0
  %1130 = vmatprep.mubr.bf16.mxu0 %v623
  %1131 = vmatmul.mubr.bf16.gmra.mrb[0].mxu0 %v622
  %v1132 = vpop.f32.mrb[0].mxu0
  %v1133 = vadd.f32 0.0, %v1132
  %v1134 = vpop.f32.mrb[0].mxu0
  %v1135 = vpop.f32.mrb[0].mxu0
  %v1136 = vadd.f32 0.0, %v1135
  %v1137 = vpop.f32.mrb[0].mxu0
  %1138 = vmatprep.mubr.bf16.mxu0 %v627
  %1139 = vmatmul.mubr.bf16.gmra.mrb[0].mxu0 %v626
  %v1140 = vpop.f32.mrb[0].mxu0
  %v1141 = vadd.f32 0.0, %v1140
  %v1142 = vpop.f32.mrb[0].mxu0
  %v1143 = vpop.f32.mrb[0].mxu0
  %v1144 = vadd.f32 0.0, %v1143
  %v1145 = vpop.f32.mrb[0].mxu0
  %1146 = vmatprep.mubr.bf16.mxu0 %v631
  %1147 = vmatmul.mubr.bf16.gmra.mrb[0].mxu0 %v630
  %v1148 = vpop.f32.mrb[0].mxu0
  %v1149 = vadd.f32 0.0, %v1148
  %v1150 = vpop.f32.mrb[0].mxu0
  %v1151 = vpop.f32.mrb[0].mxu0
  %v1152 = vadd.f32 0.0, %v1151
  %v1153 = vpop.f32.mrb[0].mxu0
  %1154 = vmatprep.mubr.bf16.mxu0 %v635
  %1155 = vmatmul.mubr.bf16.gmra.mrb[0].mxu0 %v634
  %v1156 = vpop.f32.mrb[0].mxu0
  %v1157 = vadd.f32 0.0, %v1156
  %v1158 = vpop.f32.mrb[0].mxu0
  %v1159 = vpop.f32.mrb[0].mxu0
  %v1160 = vadd.f32 0.0, %v1159
  %v1161 = vpop.f32.mrb[0].mxu0
  %1162 = vmatprep.mubr.bf16.mxu0 %v639
  %1163 = vmatmul.mubr.bf16.gmra.mrb[0].mxu0 %v638
  %v1164 = vpop.f32.mrb[0].mxu0
  %v1165 = vadd.f32 0.0, %v1164
  %v1166 = vpop.f32.mrb[0].mxu0
  %v1167 = vpop.f32.mrb[0].mxu0
  %v1168 = vadd.f32 0.0, %v1167
  %v1169 = vpop.f32.mrb[0].mxu0
  %1170 = vmatprep.mubr.bf16.mxu0 %v643
  %1171 = vmatmul.mubr.bf16.gmra.mrb[0].mxu0 %v642
  %v1172 = vpop.f32.mrb[0].mxu0
  %v1173 = vadd.f32 0.0, %v1172
  %v1174 = vpop.f32.mrb[0].mxu0
  %v1175 = vpop.f32.mrb[0].mxu0
  %v1176 = vadd.f32 0.0, %v1175
  %v1177 = vpop.f32.mrb[0].mxu0
  %1178 = vmatprep.mubr.bf16.mxu0 %v647
  %1179 = vmatmul.mubr.bf16.gmra.mrb[0].mxu0 %v646
  %v1180 = vpop.f32.mrb[0].mxu0
  %v1181 = vadd.f32 0.0, %v1180
  %v1182 = vpop.f32.mrb[0].mxu0
  %v1183 = vpop.f32.mrb[0].mxu0
  %v1184 = vadd.f32 0.0, %v1183
  %v1185 = vpop.f32.mrb[0].mxu0
  %1186 = vmatprep.mubr.bf16.mxu0 %v651
  %1187 = vmatmul.mubr.bf16.gmra.mrb[0].mxu0 %v650
  %v1188 = vpop.f32.mrb[0].mxu0
  %v1189 = vadd.f32 0.0, %v1188
  %v1190 = vpop.f32.mrb[0].mxu0
  %v1191 = vpop.f32.mrb[0].mxu0
  %v1192 = vadd.f32 0.0, %v1191
  %v1193 = vpop.f32.mrb[0].mxu0
  %1194 = vmatprep.mubr.bf16.mxu0 %v655
  %1195 = vmatmul.mubr.bf16.gmra.mrb[0].mxu0 %v654
  %v1196 = vpop.f32.mrb[0].mxu0
  %v1197 = vadd.f32 0.0, %v1196
  %v1198 = vpop.f32.mrb[0].mxu0
  %v1199 = vpop.f32.mrb[0].mxu0
  %v1200 = vadd.f32 0.0, %v1199
  %v1201 = vpop.f32.mrb[0].mxu0
  %1202 = vmatprep.mubr.bf16.mxu0 %v659
  %1203 = vmatmul.mubr.bf16.gmra.mrb[0].mxu0 %v658
  %v1204 = vpop.f32.mrb[0].mxu0
  %v1205 = vadd.f32 0.0, %v1204
  %v1206 = vpop.f32.mrb[0].mxu0
  %v1207 = vpop.f32.mrb[0].mxu0
  %v1208 = vadd.f32 0.0, %v1207
  %v1209 = vpop.f32.mrb[0].mxu0
  %1210 = vmatprep.mubr.bf16.mxu0 %v663
  %1211 = vmatmul.mubr.bf16.gmra.mrb[0].mxu0 %v662
  %v1212 = vpop.f32.mrb[0].mxu0
  %v1213 = vadd.f32 0.0, %v1212
  %v1214 = vpop.f32.mrb[0].mxu0
  %v1215 = vpop.f32.mrb[0].mxu0
  %v1216 = vadd.f32 0.0, %v1215
  %v1217 = vpop.f32.mrb[0].mxu0
  %1218 = vmatprep.mubr.bf16.mxu0 %v667
  %1219 = vmatmul.mubr.bf16.gmra.mrb[0].mxu0 %v666
  %v1220 = vpop.f32.mrb[0].mxu0
  %v1221 = vadd.f32 0.0, %v1220
  %v1222 = vpop.f32.mrb[0].mxu0
  %v1223 = vpop.f32.mrb[0].mxu0
  %v1224 = vadd.f32 0.0, %v1223
  %v1225 = vpop.f32.mrb[0].mxu0
  %1226 = vmatprep.mubr.bf16.mxu0 %v671
  %1227 = vmatmul.mubr.bf16.gmra.mrb[0].mxu0 %v670
  %v1228 = vpop.f32.mrb[0].mxu0
  %v1229 = vadd.f32 0.0, %v1228
  %v1230 = vpop.f32.mrb[0].mxu0
  %v1231 = vpop.f32.mrb[0].mxu0
  %v1232 = vadd.f32 0.0, %v1231
  %v1233 = vpop.f32.mrb[0].mxu0
  %1234 = vmatprep.mubr.bf16.mxu0 %v675
  %1235 = vmatmul.mubr.bf16.gmra.mrb[0].mxu0 %v674
  %v1236 = vpop.f32.mrb[0].mxu0
  %v1237 = vadd.f32 0.0, %v1236
  %v1238 = vpop.f32.mrb[0].mxu0
  %v1239 = vpop.f32.mrb[0].mxu0
  %v1240 = vadd.f32 0.0, %v1239
  %v1241 = vpop.f32.mrb[0].mxu0
  %1242 = vmatprep.mubr.bf16.mxu0 %v679
  %1243 = vmatmul.mubr.bf16.gmra.mrb[0].mxu0 %v678
  %v1244 = vpop.f32.mrb[0].mxu0
  %v1245 = vadd.f32 0.0, %v1244
  %v1246 = vpop.f32.mrb[0].mxu0
  %v1247 = vpop.f32.mrb[0].mxu0
  %v1248 = vadd.f32 0.0, %v1247
  %v1249 = vpop.f32.mrb[0].mxu0
  %1250 = vmatprep.mubr.bf16.mxu0 %v683
  %1251 = vmatmul.mubr.bf16.gmra.mrb[0].mxu0 %v682
  %v1252 = vpop.f32.mrb[0].mxu0
  %v1253 = vadd.f32 0.0, %v1252
  %v1254 = vpop.f32.mrb[0].mxu0
  %v1255 = vpop.f32.mrb[0].mxu0
  %v1256 = vadd.f32 0.0, %v1255
  %v1257 = vpop.f32.mrb[0].mxu0
  %1258 = vmatprep.mubr.bf16.mxu0 %v687
  %1259 = vmatmul.mubr.bf16.gmra.mrb[0].mxu0 %v686
  %v1260 = vpop.f32.mrb[0].mxu0
  %v1261 = vadd.f32 0.0, %v1260
  %v1262 = vpop.f32.mrb[0].mxu0
  %v1263 = vpop.f32.mrb[0].mxu0
  %v1264 = vadd.f32 0.0, %v1263
  %v1265 = vpop.f32.mrb[0].mxu0
  %1266 = vmatprep.mubr.bf16.mxu0 %v691
  %1267 = vmatmul.mubr.bf16.gmra.mrb[0].mxu0 %v690
  %v1268 = vpop.f32.mrb[0].mxu0
  %v1269 = vadd.f32 0.0, %v1268
  %v1270 = vpop.f32.mrb[0].mxu0
  %v1271 = vpop.f32.mrb[0].mxu0
  %v1272 = vadd.f32 0.0, %v1271
  %v1273 = vpop.f32.mrb[0].mxu0
  %1274 = vmatprep.mubr.bf16.mxu0 %v695
  %1275 = vmatmul.mubr.bf16.gmra.mrb[0].mxu0 %v694
  %v1276 = vpop.f32.mrb[0].mxu0
  %v1277 = vadd.f32 0.0, %v1276
  %v1278 = vpop.f32.mrb[0].mxu0
  %v1279 = vpop.f32.mrb[0].mxu0
  %v1280 = vadd.f32 0.0, %v1279
  %v1281 = vpop.f32.mrb[0].mxu0
  %1282 = vmatprep.mubr.bf16.mxu0 %v699
  %1283 = vmatmul.mubr.bf16.gmra.mrb[0].mxu0 %v698
  %v1284 = vpop.f32.mrb[0].mxu0
  %v1285 = vadd.f32 0.0, %v1284
  %v1286 = vpop.f32.mrb[0].mxu0
  %v1287 = vpop.f32.mrb[0].mxu0
  %v1288 = vadd.f32 0.0, %v1287
  %v1289 = vpop.f32.mrb[0].mxu0
  %1290 = vmatprep.mubr.bf16.mxu0 %v703
  %1291 = vmatmul.mubr.bf16.gmra.mrb[0].mxu0 %v702
  %v1292 = vpop.f32.mrb[0].mxu0
  %v1293 = vadd.f32 0.0, %v1292
  %v1294 = vpop.f32.mrb[0].mxu0
  %v1295 = vpop.f32.mrb[0].mxu0
  %v1296 = vadd.f32 0.0, %v1295
  %v1297 = vpop.f32.mrb[0].mxu0
  %1298 = vmatprep.mubr.bf16.mxu0 %v707
  %1299 = vmatmul.mubr.bf16.gmra.mrb[0].mxu0 %v706
  %v1300 = vpop.f32.mrb[0].mxu0
  %v1301 = vadd.f32 0.0, %v1300
  %v1302 = vpop.f32.mrb[0].mxu0
  %v1303 = vpop.f32.mrb[0].mxu0
  %v1304 = vadd.f32 0.0, %v1303
  %v1305 = vpop.f32.mrb[0].mxu0
  %1306 = vmatprep.mubr.bf16.mxu0 %v711
  %1307 = vmatmul.mubr.bf16.gmra.mrb[0].mxu0 %v710
  %v1308 = vpop.f32.mrb[0].mxu0
  %v1309 = vadd.f32 0.0, %v1308
  %v1310 = vpop.f32.mrb[0].mxu0
  %v1311 = vpop.f32.mrb[0].mxu0
  %v1312 = vadd.f32 0.0, %v1311
  %v1313 = vpop.f32.mrb[0].mxu0
  %1314 = vmatprep.mubr.bf16.mxu0 %v715
  %1315 = vmatmul.mubr.bf16.gmra.mrb[0].mxu0 %v714
  %v1316 = vpop.f32.mrb[0].mxu0
  %v1317 = vadd.f32 0.0, %v1316
  %v1318 = vpop.f32.mrb[0].mxu0
  %v1319 = vpop.f32.mrb[0].mxu0
  %v1320 = vadd.f32 0.0, %v1319
  %v1321 = vpop.f32.mrb[0].mxu0
  %1322 = vmatprep.mubr.bf16.mxu0 %v719
  %1323 = vmatmul.mubr.bf16.gmra.mrb[0].mxu0 %v718
  %v1324 = vpop.f32.mrb[0].mxu0
  %v1325 = vadd.f32 0.0, %v1324
  %v1326 = vpop.f32.mrb[0].mxu0
  %v1327 = vpop.f32.mrb[0].mxu0
  %v1328 = vadd.f32 0.0, %v1327
  %v1329 = vpop.f32.mrb[0].mxu0
  %1330 = vdwg.mxu0
  %1331 = vmatprep.subr.bf16.mxu0 0
  %1332 = vmatpush1.bf16.msra.mxu0 %v994
  %1333 = vmatprep.subr.bf16.mxu0 0
  %1334 = vmatpush1.bf16.msra.mxu0 %v995
  %1335 = vmatprep.subr.bf16.mxu0 0
  %1336 = vmatpush1.bf16.msra.mxu0 %v996
  %1337 = vmatprep.subr.bf16.mxu0 0
  %1338 = vmatpush1.bf16.msra.mxu0 %v997
  %1339 = vmatprep.subr.bf16.mxu0 0
  %1340 = vmatpush1.bf16.msra.mxu0 %v998
  %1341 = vmatprep.subr.bf16.mxu0 0
  %1342 = vmatpush1.bf16.msra.mxu0 %v999
  %1343 = vmatprep.subr.bf16.mxu0 0
  %1344 = vmatpush1.bf16.msra.mxu0 %v1000
  %1345 = vmatprep.subr.bf16.mxu0 0
  %1346 = vmatpush1.bf16.msra.mxu0 %v1001
  %1347 = vmatprep.subr.bf16.mxu0 0
  %1348 = vmatpush1.bf16.msra.mxu0 %v1002
  %1349 = vmatprep.subr.bf16.mxu0 0
  %1350 = vmatpush1.bf16.msra.mxu0 %v1003
  %1351 = vmatprep.subr.bf16.mxu0 0
  %1352 = vmatpush1.bf16.msra.mxu0 %v1004
  %1353 = vmatprep.subr.bf16.mxu0 0
  %1354 = vmatpush1.bf16.msra.mxu0 %v1005
  %1355 = vmatprep.subr.bf16.mxu0 0
  %1356 = vmatpush1.bf16.msra.mxu0 %v1006
  %1357 = vmatprep.subr.bf16.mxu0 0
  %1358 = vmatpush1.bf16.msra.mxu0 %v1007
  %1359 = vmatprep.subr.bf16.mxu0 0
  %1360 = vmatpush1.bf16.msra.mxu0 %v1008
  %1361 = vmatprep.subr.bf16.mxu0 0
  %1362 = vmatpush1.bf16.msra.mxu0 %v1009
  %1363 = vmatprep.mubr.bf16.mxu0 %v597
  %1364 = vmatmul.mubr.bf16.gmra.mrb[0].mxu0 %v596
  %v1365 = vpop.f32.mrb[0].mxu0
  %v1366 = vadd.f32 %v1077, %v1365
  %v1367 = vpop.f32.mrb[0].mxu0
  %v1368 = vpop.f32.mrb[0].mxu0
  %v1369 = vadd.f32 %v1080, %v1368
  %v1370 = vpop.f32.mrb[0].mxu0
  %1371 = vmatprep.mubr.bf16.mxu0 %v601
  %1372 = vmatmul.mubr.bf16.gmra.mrb[0].mxu0 %v600
  %v1373 = vpop.f32.mrb[0].mxu0
  %v1374 = vadd.f32 %v1085, %v1373
  %v1375 = vpop.f32.mrb[0].mxu0
  %v1376 = vpop.f32.mrb[0].mxu0
  %v1377 = vadd.f32 %v1088, %v1376
  %v1378 = vpop.f32.mrb[0].mxu0
  %1379 = vmatprep.mubr.bf16.mxu0 %v605
  %1380 = vmatmul.mubr.bf16.gmra.mrb[0].mxu0 %v604
  %v1381 = vpop.f32.mrb[0].mxu0
  %v1382 = vadd.f32 %v1093, %v1381
  %v1383 = vpop.f32.mrb[0].mxu0
  %v1384 = vpop.f32.mrb[0].mxu0
  %v1385 = vadd.f32 %v1096, %v1384
  %v1386 = vpop.f32.mrb[0].mxu0
  %1387 = vmatprep.mubr.bf16.mxu0 %v609
  %1388 = vmatmul.mubr.bf16.gmra.mrb[0].mxu0 %v608
  %v1389 = vpop.f32.mrb[0].mxu0
  %v1390 = vadd.f32 %v1101, %v1389
  %v1391 = vpop.f32.mrb[0].mxu0
  %v1392 = vpop.f32.mrb[0].mxu0
  %v1393 = vadd.f32 %v1104, %v1392
  %v1394 = vpop.f32.mrb[0].mxu0
  %1395 = vmatprep.mubr.bf16.mxu0 %v613
  %1396 = vmatmul.mubr.bf16.gmra.mrb[0].mxu0 %v612
  %v1397 = vpop.f32.mrb[0].mxu0
  %v1398 = vadd.f32 %v1109, %v1397
  %v1399 = vpop.f32.mrb[0].mxu0
  %v1400 = vpop.f32.mrb[0].mxu0
  %v1401 = vadd.f32 %v1112, %v1400
  %v1402 = vpop.f32.mrb[0].mxu0
  %1403 = vmatprep.mubr.bf16.mxu0 %v617
  %1404 = vmatmul.mubr.bf16.gmra.mrb[0].mxu0 %v616
  %v1405 = vpop.f32.mrb[0].mxu0
  %v1406 = vadd.f32 %v1117, %v1405
  %v1407 = vpop.f32.mrb[0].mxu0
  %v1408 = vpop.f32.mrb[0].mxu0
  %v1409 = vadd.f32 %v1120, %v1408
  %v1410 = vpop.f32.mrb[0].mxu0
  %1411 = vmatprep.mubr.bf16.mxu0 %v621
  %1412 = vmatmul.mubr.bf16.gmra.mrb[0].mxu0 %v620
  %v1413 = vpop.f32.mrb[0].mxu0
  %v1414 = vadd.f32 %v1125, %v1413
  %v1415 = vpop.f32.mrb[0].mxu0
  %v1416 = vpop.f32.mrb[0].mxu0
  %v1417 = vadd.f32 %v1128, %v1416
  %v1418 = vpop.f32.mrb[0].mxu0
  %1419 = vmatprep.mubr.bf16.mxu0 %v625
  %1420 = vmatmul.mubr.bf16.gmra.mrb[0].mxu0 %v624
  %v1421 = vpop.f32.mrb[0].mxu0
  %v1422 = vadd.f32 %v1133, %v1421
  %v1423 = vpop.f32.mrb[0].mxu0
  %v1424 = vpop.f32.mrb[0].mxu0
  %v1425 = vadd.f32 %v1136, %v1424
  %v1426 = vpop.f32.mrb[0].mxu0
  %1427 = vmatprep.mubr.bf16.mxu0 %v629
  %1428 = vmatmul.mubr.bf16.gmra.mrb[0].mxu0 %v628
  %v1429 = vpop.f32.mrb[0].mxu0
  %v1430 = vadd.f32 %v1141, %v1429
  %v1431 = vpop.f32.mrb[0].mxu0
  %v1432 = vpop.f32.mrb[0].mxu0
  %v1433 = vadd.f32 %v1144, %v1432
  %v1434 = vpop.f32.mrb[0].mxu0
  %1435 = vmatprep.mubr.bf16.mxu0 %v633
  %1436 = vmatmul.mubr.bf16.gmra.mrb[0].mxu0 %v632
  %v1437 = vpop.f32.mrb[0].mxu0
  %v1438 = vadd.f32 %v1149, %v1437
  %v1439 = vpop.f32.mrb[0].mxu0
  %v1440 = vpop.f32.mrb[0].mxu0
  %v1441 = vadd.f32 %v1152, %v1440
  %v1442 = vpop.f32.mrb[0].mxu0
  %1443 = vmatprep.mubr.bf16.mxu0 %v637
  %1444 = vmatmul.mubr.bf16.gmra.mrb[0].mxu0 %v636
  %v1445 = vpop.f32.mrb[0].mxu0
  %v1446 = vadd.f32 %v1157, %v1445
  %v1447 = vpop.f32.mrb[0].mxu0
  %v1448 = vpop.f32.mrb[0].mxu0
  %v1449 = vadd.f32 %v1160, %v1448
  %v1450 = vpop.f32.mrb[0].mxu0
  %1451 = vmatprep.mubr.bf16.mxu0 %v641
  %1452 = vmatmul.mubr.bf16.gmra.mrb[0].mxu0 %v640
  %v1453 = vpop.f32.mrb[0].mxu0
  %v1454 = vadd.f32 %v1165, %v1453
  %v1455 = vpop.f32.mrb[0].mxu0
  %v1456 = vpop.f32.mrb[0].mxu0
  %v1457 = vadd.f32 %v1168, %v1456
  %v1458 = vpop.f32.mrb[0].mxu0
  %1459 = vmatprep.mubr.bf16.mxu0 %v645
  %1460 = vmatmul.mubr.bf16.gmra.mrb[0].mxu0 %v644
  %v1461 = vpop.f32.mrb[0].mxu0
  %v1462 = vadd.f32 %v1173, %v1461
  %v1463 = vpop.f32.mrb[0].mxu0
  %v1464 = vpop.f32.mrb[0].mxu0
  %v1465 = vadd.f32 %v1176, %v1464
  %v1466 = vpop.f32.mrb[0].mxu0
  %1467 = vmatprep.mubr.bf16.mxu0 %v649
  %1468 = vmatmul.mubr.bf16.gmra.mrb[0].mxu0 %v648
  %v1469 = vpop.f32.mrb[0].mxu0
  %v1470 = vadd.f32 %v1181, %v1469
  %v1471 = vpop.f32.mrb[0].mxu0
  %v1472 = vpop.f32.mrb[0].mxu0
  %v1473 = vadd.f32 %v1184, %v1472
  %v1474 = vpop.f32.mrb[0].mxu0
  %1475 = vmatprep.mubr.bf16.mxu0 %v653
  %1476 = vmatmul.mubr.bf16.gmra.mrb[0].mxu0 %v652
  %v1477 = vpop.f32.mrb[0].mxu0
  %v1478 = vadd.f32 %v1189, %v1477
  %v1479 = vpop.f32.mrb[0].mxu0
  %v1480 = vpop.f32.mrb[0].mxu0
  %v1481 = vadd.f32 %v1192, %v1480
  %v1482 = vpop.f32.mrb[0].mxu0
  %1483 = vmatprep.mubr.bf16.mxu0 %v657
  %1484 = vmatmul.mubr.bf16.gmra.mrb[0].mxu0 %v656
  %v1485 = vpop.f32.mrb[0].mxu0
  %v1486 = vadd.f32 %v1197, %v1485
  %v1487 = vpop.f32.mrb[0].mxu0
  %v1488 = vpop.f32.mrb[0].mxu0
  %v1489 = vadd.f32 %v1200, %v1488
  %v1490 = vpop.f32.mrb[0].mxu0
  %1491 = vmatprep.mubr.bf16.mxu0 %v661
  %1492 = vmatmul.mubr.bf16.gmra.mrb[0].mxu0 %v660
  %v1493 = vpop.f32.mrb[0].mxu0
  %v1494 = vadd.f32 %v1205, %v1493
  %v1495 = vpop.f32.mrb[0].mxu0
  %v1496 = vpop.f32.mrb[0].mxu0
  %v1497 = vadd.f32 %v1208, %v1496
  %v1498 = vpop.f32.mrb[0].mxu0
  %1499 = vmatprep.mubr.bf16.mxu0 %v665
  %1500 = vmatmul.mubr.bf16.gmra.mrb[0].mxu0 %v664
  %v1501 = vpop.f32.mrb[0].mxu0
  %v1502 = vadd.f32 %v1213, %v1501
  %v1503 = vpop.f32.mrb[0].mxu0
  %v1504 = vpop.f32.mrb[0].mxu0
  %v1505 = vadd.f32 %v1216, %v1504
  %v1506 = vpop.f32.mrb[0].mxu0
  %1507 = vmatprep.mubr.bf16.mxu0 %v669
  %1508 = vmatmul.mubr.bf16.gmra.mrb[0].mxu0 %v668
  %v1509 = vpop.f32.mrb[0].mxu0
  %v1510 = vadd.f32 %v1221, %v1509
  %v1511 = vpop.f32.mrb[0].mxu0
  %v1512 = vpop.f32.mrb[0].mxu0
  %v1513 = vadd.f32 %v1224, %v1512
  %v1514 = vpop.f32.mrb[0].mxu0
  %1515 = vmatprep.mubr.bf16.mxu0 %v673
  %1516 = vmatmul.mubr.bf16.gmra.mrb[0].mxu0 %v672
  %v1517 = vpop.f32.mrb[0].mxu0
  %v1518 = vadd.f32 %v1229, %v1517
  %v1519 = vpop.f32.mrb[0].mxu0
  %v1520 = vpop.f32.mrb[0].mxu0
  %v1521 = vadd.f32 %v1232, %v1520
  %v1522 = vpop.f32.mrb[0].mxu0
  %1523 = vmatprep.mubr.bf16.mxu0 %v677
  %1524 = vmatmul.mubr.bf16.gmra.mrb[0].mxu0 %v676
  %v1525 = vpop.f32.mrb[0].mxu0
  %v1526 = vadd.f32 %v1237, %v1525
  %v1527 = vpop.f32.mrb[0].mxu0
  %v1528 = vpop.f32.mrb[0].mxu0
  %v1529 = vadd.f32 %v1240, %v1528
  %v1530 = vpop.f32.mrb[0].mxu0
  %1531 = vmatprep.mubr.bf16.mxu0 %v681
  %1532 = vmatmul.mubr.bf16.gmra.mrb[0].mxu0 %v680
  %v1533 = vpop.f32.mrb[0].mxu0
  %v1534 = vadd.f32 %v1245, %v1533
  %v1535 = vpop.f32.mrb[0].mxu0
  %v1536 = vpop.f32.mrb[0].mxu0
  %v1537 = vadd.f32 %v1248, %v1536
  %v1538 = vpop.f32.mrb[0].mxu0
  %1539 = vmatprep.mubr.bf16.mxu0 %v685
  %1540 = vmatmul.mubr.bf16.gmra.mrb[0].mxu0 %v684
  %v1541 = vpop.f32.mrb[0].mxu0
  %v1542 = vadd.f32 %v1253, %v1541
  %v1543 = vpop.f32.mrb[0].mxu0
  %v1544 = vpop.f32.mrb[0].mxu0
  %v1545 = vadd.f32 %v1256, %v1544
  %v1546 = vpop.f32.mrb[0].mxu0
  %1547 = vmatprep.mubr.bf16.mxu0 %v689
  %1548 = vmatmul.mubr.bf16.gmra.mrb[0].mxu0 %v688
  %v1549 = vpop.f32.mrb[0].mxu0
  %v1550 = vadd.f32 %v1261, %v1549
  %v1551 = vpop.f32.mrb[0].mxu0
  %v1552 = vpop.f32.mrb[0].mxu0
  %v1553 = vadd.f32 %v1264, %v1552
  %v1554 = vpop.f32.mrb[0].mxu0
  %1555 = vmatprep.mubr.bf16.mxu0 %v693
  %1556 = vmatmul.mubr.bf16.gmra.mrb[0].mxu0 %v692
  %v1557 = vpop.f32.mrb[0].mxu0
  %v1558 = vadd.f32 %v1269, %v1557
  %v1559 = vpop.f32.mrb[0].mxu0
  %v1560 = vpop.f32.mrb[0].mxu0
  %v1561 = vadd.f32 %v1272, %v1560
  %v1562 = vpop.f32.mrb[0].mxu0
  %1563 = vmatprep.mubr.bf16.mxu0 %v697
  %1564 = vmatmul.mubr.bf16.gmra.mrb[0].mxu0 %v696
  %v1565 = vpop.f32.mrb[0].mxu0
  %v1566 = vadd.f32 %v1277, %v1565
  %v1567 = vpop.f32.mrb[0].mxu0
  %v1568 = vpop.f32.mrb[0].mxu0
  %v1569 = vadd.f32 %v1280, %v1568
  %v1570 = vpop.f32.mrb[0].mxu0
  %1571 = vmatprep.mubr.bf16.mxu0 %v701
  %1572 = vmatmul.mubr.bf16.gmra.mrb[0].mxu0 %v700
  %v1573 = vpop.f32.mrb[0].mxu0
  %v1574 = vadd.f32 %v1285, %v1573
  %v1575 = vpop.f32.mrb[0].mxu0
  %v1576 = vpop.f32.mrb[0].mxu0
  %v1577 = vadd.f32 %v1288, %v1576
  %v1578 = vpop.f32.mrb[0].mxu0
  %1579 = vmatprep.mubr.bf16.mxu0 %v705
  %1580 = vmatmul.mubr.bf16.gmra.mrb[0].mxu0 %v704
  %v1581 = vpop.f32.mrb[0].mxu0
  %v1582 = vadd.f32 %v1293, %v1581
  %v1583 = vpop.f32.mrb[0].mxu0
  %v1584 = vpop.f32.mrb[0].mxu0
  %v1585 = vadd.f32 %v1296, %v1584
  %v1586 = vpop.f32.mrb[0].mxu0
  %1587 = vmatprep.mubr.bf16.mxu0 %v709
  %1588 = vmatmul.mubr.bf16.gmra.mrb[0].mxu0 %v708
  %v1589 = vpop.f32.mrb[0].mxu0
  %v1590 = vadd.f32 %v1301, %v1589
  %v1591 = vpop.f32.mrb[0].mxu0
  %v1592 = vpop.f32.mrb[0].mxu0
  %v1593 = vadd.f32 %v1304, %v1592
  %v1594 = vpop.f32.mrb[0].mxu0
  %1595 = vmatprep.mubr.bf16.mxu0 %v713
  %1596 = vmatmul.mubr.bf16.gmra.mrb[0].mxu0 %v712
  %v1597 = vpop.f32.mrb[0].mxu0
  %v1598 = vadd.f32 %v1309, %v1597
  %v1599 = vpop.f32.mrb[0].mxu0
  %v1600 = vpop.f32.mrb[0].mxu0
  %v1601 = vadd.f32 %v1312, %v1600
  %v1602 = vpop.f32.mrb[0].mxu0
  %1603 = vmatprep.mubr.bf16.mxu0 %v717
  %1604 = vmatmul.mubr.bf16.gmra.mrb[0].mxu0 %v716
  %v1605 = vpop.f32.mrb[0].mxu0
  %v1606 = vadd.f32 %v1317, %v1605
  %v1607 = vpop.f32.mrb[0].mxu0
  %v1608 = vpop.f32.mrb[0].mxu0
  %v1609 = vadd.f32 %v1320, %v1608
  %v1610 = vpop.f32.mrb[0].mxu0
  %1611 = vmatprep.mubr.bf16.mxu0 %v721
  %1612 = vmatmul.mubr.bf16.gmra.mrb[0].mxu0 %v720
  %v1613 = vpop.f32.mrb[0].mxu0
  %v1614 = vadd.f32 %v1325, %v1613
  %v1615 = vpop.f32.mrb[0].mxu0
  %v1616 = vpop.f32.mrb[0].mxu0
  %v1617 = vadd.f32 %v1328, %v1616
  %v1618 = vpop.f32.mrb[0].mxu0
  %1619 = vdwg.mxu0
  %v1620 = vld [vmem:[%s2] sm:$0x1]
  %v1622 = vlaneseq
  %v1623 = vshrl.u32 %v1622, 7
  %v1624 = vsub.s32 0, %v1623
  %v1625 = vrot.slane %v1620, %v1624
  %v1627 = vmul.f32 %v1366, %v1625
  %v1628 = vmul.f32 %v1369, %v1625
  %v1629 = vmul.f32 %v1374, %v1625
  %v1630 = vmul.f32 %v1377, %v1625
  %v1631 = vmul.f32 %v1382, %v1625
  %v1632 = vmul.f32 %v1385, %v1625
  %v1633 = vmul.f32 %v1390, %v1625
  %v1634 = vmul.f32 %v1393, %v1625
  %v1635 = vmul.f32 %v1398, %v1625
  %v1636 = vmul.f32 %v1401, %v1625
  %v1637 = vmul.f32 %v1406, %v1625
  %v1638 = vmul.f32 %v1409, %v1625
  %v1639 = vmul.f32 %v1414, %v1625
  %v1640 = vmul.f32 %v1417, %v1625
  %v1641 = vmul.f32 %v1422, %v1625
  %v1642 = vmul.f32 %v1425, %v1625
  %v1643 = vmul.f32 %v1430, %v1625
  %v1644 = vmul.f32 %v1433, %v1625
  %v1645 = vmul.f32 %v1438, %v1625
  %v1646 = vmul.f32 %v1441, %v1625
  %v1647 = vmul.f32 %v1446, %v1625
  %v1648 = vmul.f32 %v1449, %v1625
  %v1649 = vmul.f32 %v1454, %v1625
  %v1650 = vmul.f32 %v1457, %v1625
  %v1651 = vmul.f32 %v1462, %v1625
  %v1652 = vmul.f32 %v1465, %v1625
  %v1653 = vmul.f32 %v1470, %v1625
  %v1654 = vmul.f32 %v1473, %v1625
  %v1655 = vmul.f32 %v1478, %v1625
  %v1656 = vmul.f32 %v1481, %v1625
  %v1657 = vmul.f32 %v1486, %v1625
  %v1658 = vmul.f32 %v1489, %v1625
  %v1659 = vmul.f32 %v1494, %v1625
  %v1660 = vmul.f32 %v1497, %v1625
  %v1661 = vmul.f32 %v1502, %v1625
  %v1662 = vmul.f32 %v1505, %v1625
  %v1663 = vmul.f32 %v1510, %v1625
  %v1664 = vmul.f32 %v1513, %v1625
  %v1665 = vmul.f32 %v1518, %v1625
  %v1666 = vmul.f32 %v1521, %v1625
  %v1667 = vmul.f32 %v1526, %v1625
  %v1668 = vmul.f32 %v1529, %v1625
  %v1669 = vmul.f32 %v1534, %v1625
  %v1670 = vmul.f32 %v1537, %v1625
  %v1671 = vmul.f32 %v1542, %v1625
  %v1672 = vmul.f32 %v1545, %v1625
  %v1673 = vmul.f32 %v1550, %v1625
  %v1674 = vmul.f32 %v1553, %v1625
  %v1675 = vmul.f32 %v1558, %v1625
  %v1676 = vmul.f32 %v1561, %v1625
  %v1677 = vmul.f32 %v1566, %v1625
  %v1678 = vmul.f32 %v1569, %v1625
  %v1679 = vmul.f32 %v1574, %v1625
  %v1680 = vmul.f32 %v1577, %v1625
  %v1681 = vmul.f32 %v1582, %v1625
  %v1682 = vmul.f32 %v1585, %v1625
  %v1683 = vmul.f32 %v1590, %v1625
  %v1684 = vmul.f32 %v1593, %v1625
  %v1685 = vmul.f32 %v1598, %v1625
  %v1686 = vmul.f32 %v1601, %v1625
  %v1687 = vmul.f32 %v1606, %v1625
  %v1688 = vmul.f32 %v1609, %v1625
  %v1689 = vmul.f32 %v1614, %v1625
  %v1690 = vmul.f32 %v1617, %v1625
  %v1691 = vld [vmem:[%s3] sm:$0x1]
  %v1693 = vlaneseq
  %v1694 = vshrl.u32 %v1693, 7
  %v1695 = vsub.s32 0, %v1694
  %v1696 = vrot.slane %v1691, %v1695
  %v1698 = vadd.f32 %v1627, %v1696
  %v1699 = vadd.f32 %v1628, %v1696
  %v1700 = vadd.f32 %v1629, %v1696
  %v1701 = vadd.f32 %v1630, %v1696
  %v1702 = vadd.f32 %v1631, %v1696
  %v1703 = vadd.f32 %v1632, %v1696
  %v1704 = vadd.f32 %v1633, %v1696
  %v1705 = vadd.f32 %v1634, %v1696
  %v1706 = vadd.f32 %v1635, %v1696
  %v1707 = vadd.f32 %v1636, %v1696
  %v1708 = vadd.f32 %v1637, %v1696
  %v1709 = vadd.f32 %v1638, %v1696
  %v1710 = vadd.f32 %v1639, %v1696
  %v1711 = vadd.f32 %v1640, %v1696
  %v1712 = vadd.f32 %v1641, %v1696
  %v1713 = vadd.f32 %v1642, %v1696
  %v1714 = vadd.f32 %v1643, %v1696
  %v1715 = vadd.f32 %v1644, %v1696
  %v1716 = vadd.f32 %v1645, %v1696
  %v1717 = vadd.f32 %v1646, %v1696
  %v1718 = vadd.f32 %v1647, %v1696
  %v1719 = vadd.f32 %v1648, %v1696
  %v1720 = vadd.f32 %v1649, %v1696
  %v1721 = vadd.f32 %v1650, %v1696
  %v1722 = vadd.f32 %v1651, %v1696
  %v1723 = vadd.f32 %v1652, %v1696
  %v1724 = vadd.f32 %v1653, %v1696
  %v1725 = vadd.f32 %v1654, %v1696
  %v1726 = vadd.f32 %v1655, %v1696
  %v1727 = vadd.f32 %v1656, %v1696
  %v1728 = vadd.f32 %v1657, %v1696
  %v1729 = vadd.f32 %v1658, %v1696
  %v1730 = vadd.f32 %v1659, %v1696
  %v1731 = vadd.f32 %v1660, %v1696
  %v1732 = vadd.f32 %v1661, %v1696
  %v1733 = vadd.f32 %v1662, %v1696
  %v1734 = vadd.f32 %v1663, %v1696
  %v1735 = vadd.f32 %v1664, %v1696
  %v1736 = vadd.f32 %v1665, %v1696
  %v1737 = vadd.f32 %v1666, %v1696
  %v1738 = vadd.f32 %v1667, %v1696
  %v1739 = vadd.f32 %v1668, %v1696
  %v1740 = vadd.f32 %v1669, %v1696
  %v1741 = vadd.f32 %v1670, %v1696
  %v1742 = vadd.f32 %v1671, %v1696
  %v1743 = vadd.f32 %v1672, %v1696
  %v1744 = vadd.f32 %v1673, %v1696
  %v1745 = vadd.f32 %v1674, %v1696
  %v1746 = vadd.f32 %v1675, %v1696
  %v1747 = vadd.f32 %v1676, %v1696
  %v1748 = vadd.f32 %v1677, %v1696
  %v1749 = vadd.f32 %v1678, %v1696
  %v1750 = vadd.f32 %v1679, %v1696
  %v1751 = vadd.f32 %v1680, %v1696
  %v1752 = vadd.f32 %v1681, %v1696
  %v1753 = vadd.f32 %v1682, %v1696
  %v1754 = vadd.f32 %v1683, %v1696
  %v1755 = vadd.f32 %v1684, %v1696
  %v1756 = vadd.f32 %v1685, %v1696
  %v1757 = vadd.f32 %v1686, %v1696
  %v1758 = vadd.f32 %v1687, %v1696
  %v1759 = vadd.f32 %v1688, %v1696
  %v1760 = vadd.f32 %v1689, %v1696
  %v1761 = vadd.f32 %v1690, %v1696
  %v1762 = vtanh.pop %v1698
  %v1763 = vtanh.pop %v1699
  %v1764 = vtanh.pop %v1700
  %v1765 = vtanh.pop %v1701
  %v1766 = vtanh.pop %v1702
  %v1767 = vtanh.pop %v1703
  %v1768 = vtanh.pop %v1704
  %v1769 = vtanh.pop %v1705
  %v1770 = vtanh.pop %v1706
  %v1771 = vtanh.pop %v1707
  %v1772 = vtanh.pop %v1708
  %v1773 = vtanh.pop %v1709
  %v1774 = vtanh.pop %v1710
  %v1775 = vtanh.pop %v1711
  %v1776 = vtanh.pop %v1712
  %v1777 = vtanh.pop %v1713
  %v1778 = vtanh.pop %v1714
  %v1779 = vtanh.pop %v1715
  %v1780 = vtanh.pop %v1716
  %v1781 = vtanh.pop %v1717
  %v1782 = vtanh.pop %v1718
  %v1783 = vtanh.pop %v1719
  %v1784 = vtanh.pop %v1720
  %v1785 = vtanh.pop %v1721
  %v1786 = vtanh.pop %v1722
  %v1787 = vtanh.pop %v1723
  %v1788 = vtanh.pop %v1724
  %v1789 = vtanh.pop %v1725
  %v1790 = vtanh.pop %v1726
  %v1791 = vtanh.pop %v1727
  %v1792 = vtanh.pop %v1728
  %v1793 = vtanh.pop %v1729
  %v1794 = vtanh.pop %v1730
  %v1795 = vtanh.pop %v1731
  %v1796 = vtanh.pop %v1732
  %v1797 = vtanh.pop %v1733
  %v1798 = vtanh.pop %v1734
  %v1799 = vtanh.pop %v1735
  %v1800 = vtanh.pop %v1736
  %v1801 = vtanh.pop %v1737
  %v1802 = vtanh.pop %v1738
  %v1803 = vtanh.pop %v1739
  %v1804 = vtanh.pop %v1740
  %v1805 = vtanh.pop %v1741
  %v1806 = vtanh.pop %v1742
  %v1807 = vtanh.pop %v1743
  %v1808 = vtanh.pop %v1744
  %v1809 = vtanh.pop %v1745
  %v1810 = vtanh.pop %v1746
  %v1811 = vtanh.pop %v1747
  %v1812 = vtanh.pop %v1748
  %v1813 = vtanh.pop %v1749
  %v1814 = vtanh.pop %v1750
  %v1815 = vtanh.pop %v1751
  %v1816 = vtanh.pop %v1752
  %v1817 = vtanh.pop %v1753
  %v1818 = vtanh.pop %v1754
  %v1819 = vtanh.pop %v1755
  %v1820 = vtanh.pop %v1756
  %v1821 = vtanh.pop %v1757
  %v1822 = vtanh.pop %v1758
  %v1823 = vtanh.pop %v1759
  %v1824 = vtanh.pop %v1760
  %v1825 = vtanh.pop %v1761
  %1826 = vst [vmem:[%s4] sm:$0xff] %v1762
  %1827 = vst [vmem:[%s4 + $0x8] sm:$0xff] %v1763
  %1828 = vst [vmem:[%s4 + $0x10] sm:$0xff] %v1764
  %1829 = vst [vmem:[%s4 + $0x18] sm:$0xff] %v1765
  %1830 = vst [vmem:[%s4 + $0x20] sm:$0xff] %v1766
  %1831 = vst [vmem:[%s4 + $0x28] sm:$0xff] %v1767
  %1832 = vst [vmem:[%s4 + $0x30] sm:$0xff] %v1768
  %1833 = vst [vmem:[%s4 + $0x38] sm:$0xff] %v1769
  %1834 = vst [vmem:[%s4 + $0x40] sm:$0xff] %v1770
  %1835 = vst [vmem:[%s4 + $0x48] sm:$0xff] %v1771
  %1836 = vst [vmem:[%s4 + $0x50] sm:$0xff] %v1772
  %1837 = vst [vmem:[%s4 + $0x58] sm:$0xff] %v1773
  %1838 = vst [vmem:[%s4 + $0x60] sm:$0xff] %v1774
  %1839 = vst [vmem:[%s4 + $0x68] sm:$0xff] %v1775
  %1840 = vst [vmem:[%s4 + $0x70] sm:$0xff] %v1776
  %1841 = vst [vmem:[%s4 + $0x78] sm:$0xff] %v1777
  %1842 = vst [vmem:[%s4 + $0x80] sm:$0xff] %v1778
  %1843 = vst [vmem:[%s4 + $0x88] sm:$0xff] %v1779
  %1844 = vst [vmem:[%s4 + $0x90] sm:$0xff] %v1780
  %1845 = vst [vmem:[%s4 + $0x98] sm:$0xff] %v1781
  %1846 = vst [vmem:[%s4 + $0xa0] sm:$0xff] %v1782
  %1847 = vst [vmem:[%s4 + $0xa8] sm:$0xff] %v1783
  %1848 = vst [vmem:[%s4 + $0xb0] sm:$0xff] %v1784
  %1849 = vst [vmem:[%s4 + $0xb8] sm:$0xff] %v1785
  %1850 = vst [vmem:[%s4 + $0xc0] sm:$0xff] %v1786
  %1851 = vst [vmem:[%s4 + $0xc8] sm:$0xff] %v1787
  %1852 = vst [vmem:[%s4 + $0xd0] sm:$0xff] %v1788
  %1853 = vst [vmem:[%s4 + $0xd8] sm:$0xff] %v1789
  %1854 = vst [vmem:[%s4 + $0xe0] sm:$0xff] %v1790
  %1855 = vst [vmem:[%s4 + $0xe8] sm:$0xff] %v1791
  %1856 = vst [vmem:[%s4 + $0xf0] sm:$0xff] %v1792
  %1857 = vst [vmem:[%s4 + $0xf8] sm:$0xff] %v1793
  %1858 = vst [vmem:[%s4 + $0x100] sm:$0xff] %v1794
  %1859 = vst [vmem:[%s4 + $0x108] sm:$0xff] %v1795
  %1860 = vst [vmem:[%s4 + $0x110] sm:$0xff] %v1796
  %1861 = vst [vmem:[%s4 + $0x118] sm:$0xff] %v1797
  %1862 = vst [vmem:[%s4 + $0x120] sm:$0xff] %v1798
  %1863 = vst [vmem:[%s4 + $0x128] sm:$0xff] %v1799
  %1864 = vst [vmem:[%s4 + $0x130] sm:$0xff] %v1800
  %1865 = vst [vmem:[%s4 + $0x138] sm:$0xff] %v1801
  %1866 = vst [vmem:[%s4 + $0x140] sm:$0xff] %v1802
  %1867 = vst [vmem:[%s4 + $0x148] sm:$0xff] %v1803
  %1868 = vst [vmem:[%s4 + $0x150] sm:$0xff] %v1804
  %1869 = vst [vmem:[%s4 + $0x158] sm:$0xff] %v1805
  %1870 = vst [vmem:[%s4 + $0x160] sm:$0xff] %v1806
  %1871 = vst [vmem:[%s4 + $0x168] sm:$0xff] %v1807
  %1872 = vst [vmem:[%s4 + $0x170] sm:$0xff] %v1808
  %1873 = vst [vmem:[%s4 + $0x178] sm:$0xff] %v1809
  %1874 = vst [vmem:[%s4 + $0x180] sm:$0xff] %v1810
  %1875 = vst [vmem:[%s4 + $0x188] sm:$0xff] %v1811
  %1876 = vst [vmem:[%s4 + $0x190] sm:$0xff] %v1812
  %1877 = vst [vmem:[%s4 + $0x198] sm:$0xff] %v1813
  %1878 = vst [vmem:[%s4 + $0x1a0] sm:$0xff] %v1814
  %1879 = vst [vmem:[%s4 + $0x1a8] sm:$0xff] %v1815
  %1880 = vst [vmem:[%s4 + $0x1b0] sm:$0xff] %v1816
  %1881 = vst [vmem:[%s4 + $0x1b8] sm:$0xff] %v1817
  %1882 = vst [vmem:[%s4 + $0x1c0] sm:$0xff] %v1818
  %1883 = vst [vmem:[%s4 + $0x1c8] sm:$0xff] %v1819
  %1884 = vst [vmem:[%s4 + $0x1d0] sm:$0xff] %v1820
  %1885 = vst [vmem:[%s4 + $0x1d8] sm:$0xff] %v1821
  %1886 = vst [vmem:[%s4 + $0x1e0] sm:$0xff] %v1822
  %1887 = vst [vmem:[%s4 + $0x1e8] sm:$0xff] %v1823
  %1888 = vst [vmem:[%s4 + $0x1f0] sm:$0xff] %v1824
  %1889 = vst [vmem:[%s4 + $0x1f8] sm:$0xff] %v1825
  // Predicated region
  $region18: #{generator_forward.49} parent=0 // pred_check
    _
  $region19: #{generator_forward.49} parent=0 // pred_check_branch
    %1891 = sbr.rel (0) target = $region21
  $region20: #{generator_forward.49} parent=0 // pred_region
    _
  $region21: #{generator_forward.49} parent=0 // pred_fallthru
    _
  // Predicated region
  $region22: #{generator_forward.49} parent=0 // pred_check
    _
  $region23: #{generator_forward.49} parent=0 // pred_check_branch
    %1893 = sbr.rel (0) target = $region25
  $region24: #{generator_forward.49} parent=0 // pred_region
    _
  $region25: #{generator_forward.49} parent=0 // pred_fallthru
    _

</llo_original>
